<compile_context>
chip_gen: v7x
topology: tpu7x:2x2x1
jax: 0.10.0
libtpu: 0.0.40
codegen_flags: <defaults>
</compile_context>

<pallas_src>
import numpy as np
import jax
import jax.numpy as jnp
from jax import lax
from jax.experimental import pallas as pl
from jax.experimental.pallas import tpu as pltpu

# ----- sizes implied by the module (mb1_120x120, 62-d param, 68-landmark base) ----
IMG = 120                      # tddfa.size
CIN = 3
COUT = 32                      # stand-in backbone width
KH = KW = 3
STRIDE = 2
HOUT = WOUT = IMG // STRIDE    # 60 (padding 1)
NPIX = HOUT * WOUT             # 3600
KDIM = CIN * KH * KW           # 27
KPAD = 32                      # contraction dim padded (row 27 = ones -> conv bias)
NPARAM = 62                    # 12 + 40 + 10
NLMK = 68                      # sparse landmark base (u_base is (204, 1))
SHP_DIM, EXP_DIM = 40, 10
ACAT = SHP_DIM + EXP_DIM       # 50

# ----- constant-slab layout (f32, 68 lanes; every section starts on a multiple of 8
# sublanes so all in-kernel slices are tile-aligned) -------------------------------
SLAB_W     = NLMK              # 68
ROW_WCONV  = 0                 # (32, 32)  w_conv^T, bias folded at column KDIM
ROW_WFC    = 32                # (32, 62)  w_fc * param_std / NPIX
ROW_BFC    = 64                # (1, 62)   b_fc * param_std + param_mean
ROW_SELG   = 72                # (3, 62)   0/1 group selector  (rows of param[:12])
ROW_SELH   = 80                # (62, 4)   0/1 column selector (cols of param[:12])
ROW_UT     = 144               # (3, 68)   u_base^T
ROW_WTP    = 152               # 3 x (62, 68) rearranged BFM bases, stride 64
WTP_STRIDE = 64
SLAB_ROWS  = ROW_WTP + 3 * WTP_STRIDE   # 344

HIGH = jax.lax.Precision.HIGHEST


# ---------------------------------------------------------------------------------
# Single fused kernel: conv-as-matmul (+bias via ones-row) + ReLU + GAP + FC(62)
# (+denorm, folded) -> parse param -> 3DMM head, all in VMEM, no grid, no scratch.
# ---------------------------------------------------------------------------------
def compose_kernel(patch_ref, const_ref, o_ref):
    # --- conv stem: featT = w_convT @ patches; bias rides on the patches' ones-row.
    w_convt = const_ref[ROW_WCONV:ROW_WCONV + COUT, :KPAD].astype(jnp.bfloat16)
    featT = jnp.dot(w_convt, patch_ref[...],
                    preferred_element_type=jnp.float32)                # (32, 3600)
    featT = jnp.maximum(featT, 0.0)

    # --- global-average-pool + FC(62) + denorm.  param_std/param_mean and 1/NPIX
    # are folded into w_fc/b_fc on the host, so this IS the denormalized param.
    pooled = jnp.sum(featT, axis=1, keepdims=True)                     # (32, 1)
    w_fc = const_ref[ROW_WFC:ROW_WFC + COUT, :NPARAM]                  # (32, 62)
    b_fc = const_ref[ROW_BFC:ROW_BFC + 1, :NPARAM]                     # (1, 62)
    param = jnp.sum(pooled * w_fc, axis=0, keepdims=True) + b_fc       # (1, 62)

    # --- _parse_param without lane reshapes: rfull[i, j] = param[4*i + j]
    # (R = rfull[:, :3], offset = rfull[:, 3]) via constant 0/1 selection matmuls.
    selg = const_ref[ROW_SELG:ROW_SELG + 3, :NPARAM]                   # (3, 62)
    selh = const_ref[ROW_SELH:ROW_SELH + NPARAM, :4]                   # (62, 4)
    rfull = jnp.dot(selg * param, selh,
                    preferred_element_type=jnp.float32, precision=HIGH)  # (3, 4)

    # --- 3DMM head:  pts3d^T = rfull @ [vertex; 1]   (offset via homogeneous row)
    #   vertex[k, n] = u_base[3n+k] + Wcat[3n+k, :] @ acat
    # w_tp[k] is Wcat rearranged with 12 leading zero rows so `param` itself is the
    # contraction operand (acat = param[12:]).
    u_t = const_ref[ROW_UT:ROW_UT + 3, :NLMK]                          # (3, 68)
    rows = []
    for k in range(3):
        r0 = ROW_WTP + k * WTP_STRIDE
        w_tp_k = const_ref[r0:r0 + NPARAM, :NLMK]                      # (62, 68)
        rows.append(u_t[k:k + 1, :] +
                    jnp.dot(param, w_tp_k,
                            preferred_element_type=jnp.float32, precision=HIGH))
    rows.append(jnp.ones((1, NLMK), jnp.float32))
    vaug = jnp.concatenate(rows, axis=0)                               # (4, 68)
    o_ref[...] = jnp.dot(rfull, vaug,
                         preferred_element_type=jnp.float32, precision=HIGH)  # (3, 68)


def compose_pallas(patches_bf16, const_slab):
    return pl.pallas_call(
        compose_kernel,
        out_shape=jax.ShapeDtypeStruct((3, NLMK), jnp.float32),
        in_specs=[pl.BlockSpec(memory_space=pltpu.MemorySpace.VMEM),   # patches
                  pl.BlockSpec(memory_space=pltpu.MemorySpace.VMEM)],  # constant slab
        out_specs=pl.BlockSpec(memory_space=pltpu.MemorySpace.VMEM),
    )(patches_bf16, const_slab)


# ---------------------------------------------------------------------------------
# Parameters (deterministic, synthetic) and glue
# ---------------------------------------------------------------------------------
def init_params():
    ks = jax.random.split(jax.random.PRNGKey(0), 10)
    P = dict(
        w_conv=jax.random.normal(ks[0], (KDIM, COUT), jnp.float32) * 0.1,
        b_conv=jax.random.normal(ks[1], (COUT,), jnp.float32) * 0.01,
        w_fc=jax.random.normal(ks[2], (COUT, NPARAM), jnp.float32) * 0.1,
        b_fc=jax.random.normal(ks[3], (NPARAM,), jnp.float32) * 0.01,
        param_std=jax.random.uniform(ks[4], (NPARAM,), jnp.float32, 0.5, 1.5),
        param_mean=jax.random.normal(ks[5], (NPARAM,), jnp.float32) * 0.1,
        u_base=jax.random.normal(ks[6], (3 * NLMK, 1), jnp.float32) * 10.0,
        w_shp_base=jax.random.normal(ks[7], (3 * NLMK, SHP_DIM), jnp.float32),
        w_exp_base=jax.random.normal(ks[8], (3 * NLMK, EXP_DIM), jnp.float32),
    )
    return P, ks[9]


def _round_bf16(a):
    return np.asarray(jnp.asarray(a, jnp.float32).astype(jnp.bfloat16)
                      .astype(jnp.float32))


def prepare_constants(P):
    """One-time host-side packing of every constant into a single f32 slab."""
    slab = np.zeros((SLAB_ROWS, SLAB_W), np.float32)

    # conv weights (transposed) with bias folded against the patches' ones-row;
    # stored pre-rounded to bf16 so the in-kernel cast is exact.
    w_convt = np.zeros((COUT, KPAD), np.float32)
    w_convt[:, :KDIM] = np.asarray(P["w_conv"]).T
    w_convt[:, KDIM] = np.asarray(P["b_conv"])
    slab[ROW_WCONV:ROW_WCONV + COUT, :KPAD] = _round_bf16(w_convt)

    std = np.asarray(P["param_std"]); mean = np.asarray(P["param_mean"])
    slab[ROW_WFC:ROW_WFC + COUT, :NPARAM] = (np.asarray(P["w_fc"]) * std[None, :]
                                             / NPIX)                      # fold std, 1/NPIX
    slab[ROW_BFC, :NPARAM] = np.asarray(P["b_fc"]) * std + mean           # fold std, mean

    for i in range(3):                                                    # rfull[i,j]=param[4i+j]
        slab[ROW_SELG + i, 4 * i:4 * i + 4] = 1.0
    for c in range(12):
        slab[ROW_SELH + c, c % 4] = 1.0

    slab[ROW_UT:ROW_UT + 3, :NLMK] = np.asarray(P["u_base"]).reshape(NLMK, 3).T

    # BFM bases rearranged so landmarks sit on the lane axis and `param` itself is
    # the contraction operand: w_tp[k][12+s, n] = Wcat[3n+k, s].
    w_cat = np.concatenate([np.asarray(P["w_shp_base"]),
                            np.asarray(P["w_exp_base"])], axis=1)         # (204, 50)
    w_t = w_cat.reshape(NLMK, 3, ACAT).transpose(1, 2, 0)                 # (3, 50, 68)
    for k in range(3):
        r0 = ROW_WTP + k * WTP_STRIDE
        slab[r0 + 12:r0 + NPARAM, :NLMK] = w_t[k]

    return jnp.asarray(slab)


def extract_patches(norm_img):
    # (1,3,120,120) NCHW -> (1, KDIM, 60, 60) -> (KDIM, NPIX); feature-major so the
    # kernel can consume it untransposed (3600 on the lane axis).
    patches = lax.conv_general_dilated_patches(
        norm_img, filter_shape=(KH, KW), window_strides=(STRIDE, STRIDE),
        padding=((1, 1), (1, 1)))
    return patches.reshape(KDIM, NPIX)


@jax.jit
def compose_forward(norm_img, const_slab):
    p27 = extract_patches(norm_img)                                       # (27, 3600)
    patches = jnp.concatenate(
        [p27,
         jnp.ones((1, NPIX), p27.dtype),        # pairs with w_convT[:, 27] = b_conv
         jnp.zeros((KPAD - KDIM - 1, NPIX), p27.dtype)],
        axis=0).astype(jnp.bfloat16)                                      # (32, 3600)
    # Returns pts3d^T with shape (3, 68); consumers use this layout directly (a
    # standalone (68,3) transpose HLO would cost as much as the whole kernel).
    return compose_pallas(patches, const_slab)


def reference_forward(norm_img, P):
    # float64 NumPy mirror of the PyTorch forward; conv operands (patches, w_conv,
    # b_conv) rounded to bf16 to match the kernel's bf16 conv; everything else exact.
    f64 = lambda a: np.asarray(a, dtype=np.float64)
    patches = f64(_round_bf16(np.asarray(extract_patches(norm_img)))).T   # (3600, 27)
    w_conv = f64(_round_bf16(P["w_conv"]))
    b_conv = f64(_round_bf16(P["b_conv"]))
    feat = np.maximum(patches @ w_conv + b_conv, 0.0)
    gap = feat.mean(axis=0, keepdims=True)
    param = gap @ f64(P["w_fc"]) + f64(P["b_fc"])
    param = param * f64(P["param_std"]) + f64(P["param_mean"])
    p = param.reshape(-1)
    r_full = p[:12].reshape(3, 4)
    R, offset = r_full[:, :3], r_full[:, 3].reshape(3, 1)
    alpha_shp = p[12:12 + SHP_DIM].reshape(-1, 1)
    alpha_exp = p[12 + SHP_DIM:].reshape(-1, 1)
    vertex = (f64(P["u_base"]) + f64(P["w_shp_base"]) @ alpha_shp
              + f64(P["w_exp_base"]) @ alpha_exp).reshape(-1, 3).T
    return (R @ vertex + offset).T                                        # (68, 3)


if __name__ == "__main__":
    P, img_key = init_params()
    norm_img = jax.random.normal(img_key, (1, CIN, IMG, IMG), jnp.float32)
    const_slab = prepare_constants(P)

    pts3d_t = compose_forward(norm_img, const_slab)                       # (3, 68)
    pts3d_t = jax.block_until_ready(pts3d_t)

    assert pts3d_t.shape == (3, NLMK) and pts3d_t.dtype == jnp.float32
    pts3d = np.asarray(pts3d_t, dtype=np.float64).T                       # (68, 3) view
    ref = reference_forward(norm_img, P)
    assert pts3d.shape == (NLMK, 3)
    np.testing.assert_allclose(pts3d, ref, rtol=1e-3, atol=1e-3)
    print("KERNEL_OK")
</pallas_src>

<mosaic_0001>
module attributes {stable_mosaic.version = 11 : i64} {
  func.func @compose_kernel(%arg0: memref<32x3600xbf16, #tpu.memory_space<vmem>>, %arg1: memref<344x68xf32, #tpu.memory_space<vmem>>, %arg2: memref<3x68xf32, #tpu.memory_space<vmem>>) attributes {dimension_semantics = [], scalar_prefetch = 0 : i64, scratch_operands = 0 : i64, tpu.core_type = #tpu.core_type<tc>} {
    %c0 = arith.constant 0 : index
    %c0_0 = arith.constant 0 : index
    %0 = vector.load %arg1[%c0, %c0_0] : memref<344x68xf32, #tpu.memory_space<vmem>>, vector<32x32xf32>
    %1 = arith.truncf %0 : vector<32x32xf32> to vector<32x32xbf16>
    %c0_1 = arith.constant 0 : index
    %c0_2 = arith.constant 0 : index
    %2 = vector.load %arg0[%c0_1, %c0_2] : memref<32x3600xbf16, #tpu.memory_space<vmem>>, vector<32x3600xbf16>
    %cst = arith.constant dense<0.000000e+00> : vector<32x3600xf32>
    %3 = tpu.matmul %1, %2, %cst {dimension_numbers = #tpu.dot_dimension_numbers<[1], [0], [0], [1], [0, 0, 1, 1], [], []>} : vector<32x32xbf16>, vector<32x3600xbf16>, vector<32x3600xf32> -> vector<32x3600xf32>
    %cst_3 = arith.constant 0.000000e+00 : f32
    %4 = vector.broadcast %cst_3 : f32 to vector<32x3600xf32>
    %5 = arith.maximumf %3, %4 : vector<32x3600xf32>
    %cst_4 = arith.constant dense<0.000000e+00> : vector<32xf32>
    %6 = vector.multi_reduction <add>, %5, %cst_4 [1] : vector<32x3600xf32> to vector<32xf32>
    %7 = vector.shape_cast %6 : vector<32xf32> to vector<32x1xf32>
    %c32 = arith.constant 32 : index
    %c0_5 = arith.constant 0 : index
    %8 = vector.load %arg1[%c32, %c0_5] : memref<344x68xf32, #tpu.memory_space<vmem>>, vector<32x62xf32>
    %c64 = arith.constant 64 : index
    %c0_6 = arith.constant 0 : index
    %9 = vector.load %arg1[%c64, %c0_6] : memref<344x68xf32, #tpu.memory_space<vmem>>, vector<1x62xf32>
    %10 = vector.broadcast %7 : vector<32x1xf32> to vector<32x62xf32>
    %11 = arith.mulf %10, %8 : vector<32x62xf32>
    %cst_7 = arith.constant dense<0.000000e+00> : vector<62xf32>
    %12 = vector.multi_reduction <add>, %11, %cst_7 [0] : vector<32x62xf32> to vector<62xf32>
    %13 = vector.shape_cast %12 : vector<62xf32> to vector<1x62xf32>
    %14 = arith.addf %13, %9 : vector<1x62xf32>
    %c72 = arith.constant 72 : index
    %c0_8 = arith.constant 0 : index
    %15 = vector.load %arg1[%c72, %c0_8] : memref<344x68xf32, #tpu.memory_space<vmem>>, vector<3x62xf32>
    %c80 = arith.constant 80 : index
    %c0_9 = arith.constant 0 : index
    %16 = vector.load %arg1[%c80, %c0_9] : memref<344x68xf32, #tpu.memory_space<vmem>>, vector<62x4xf32>
    %17 = vector.broadcast %14 : vector<1x62xf32> to vector<3x62xf32>
    %18 = arith.mulf %15, %17 : vector<3x62xf32>
    %cst_10 = arith.constant dense<0.000000e+00> : vector<3x4xf32>
    %19 = tpu.matmul %18, %16, %cst_10 {dimension_numbers = #tpu.dot_dimension_numbers<[1], [0], [0], [1], [0, 0, 1, 1], [], []>, precision = #tpu.contract_precision<fp32>} : vector<3x62xf32>, vector<62x4xf32>, vector<3x4xf32> -> vector<3x4xf32>
    %c144 = arith.constant 144 : index
    %c0_11 = arith.constant 0 : index
    %20 = vector.load %arg1[%c144, %c0_11] : memref<344x68xf32, #tpu.memory_space<vmem>>, vector<3x68xf32>
    %c152 = arith.constant 152 : index
    %c0_12 = arith.constant 0 : index
    %21 = vector.load %arg1[%c152, %c0_12] : memref<344x68xf32, #tpu.memory_space<vmem>>, vector<62x68xf32>
    %22 = vector.extract_strided_slice %20 {offsets = [0, 0], sizes = [1, 68], strides = [1, 1]} : vector<3x68xf32> to vector<1x68xf32>
    %cst_13 = arith.constant dense<0.000000e+00> : vector<1x68xf32>
    %23 = tpu.matmul %14, %21, %cst_13 {dimension_numbers = #tpu.dot_dimension_numbers<[1], [0], [0], [1], [0, 0, 1, 1], [], []>, precision = #tpu.contract_precision<fp32>} : vector<1x62xf32>, vector<62x68xf32>, vector<1x68xf32> -> vector<1x68xf32>
    %24 = arith.addf %22, %23 : vector<1x68xf32>
    %c216 = arith.constant 216 : index
    %c0_14 = arith.constant 0 : index
    %25 = vector.load %arg1[%c216, %c0_14] : memref<344x68xf32, #tpu.memory_space<vmem>>, vector<62x68xf32>
    %26 = vector.extract_strided_slice %20 {offsets = [1, 0], sizes = [1, 68], strides = [1, 1]} : vector<3x68xf32> to vector<1x68xf32>
    %cst_15 = arith.constant dense<0.000000e+00> : vector<1x68xf32>
    %27 = tpu.matmul %14, %25, %cst_15 {dimension_numbers = #tpu.dot_dimension_numbers<[1], [0], [0], [1], [0, 0, 1, 1], [], []>, precision = #tpu.contract_precision<fp32>} : vector<1x62xf32>, vector<62x68xf32>, vector<1x68xf32> -> vector<1x68xf32>
    %28 = arith.addf %26, %27 : vector<1x68xf32>
    %c280 = arith.constant 280 : index
    %c0_16 = arith.constant 0 : index
    %29 = vector.load %arg1[%c280, %c0_16] : memref<344x68xf32, #tpu.memory_space<vmem>>, vector<62x68xf32>
    %30 = vector.extract_strided_slice %20 {offsets = [2, 0], sizes = [1, 68], strides = [1, 1]} : vector<3x68xf32> to vector<1x68xf32>
    %cst_17 = arith.constant dense<0.000000e+00> : vector<1x68xf32>
    %31 = tpu.matmul %14, %29, %cst_17 {dimension_numbers = #tpu.dot_dimension_numbers<[1], [0], [0], [1], [0, 0, 1, 1], [], []>, precision = #tpu.contract_precision<fp32>} : vector<1x62xf32>, vector<62x68xf32>, vector<1x68xf32> -> vector<1x68xf32>
    %32 = arith.addf %30, %31 : vector<1x68xf32>
    %cst_18 = arith.constant 1.000000e+00 : f32
    %33 = vector.broadcast %cst_18 : f32 to vector<1x68xf32>
    %34 = tpu.concatenate %24, %28, %32, %33 in 0 : vector<1x68xf32>, vector<1x68xf32>, vector<1x68xf32>, vector<1x68xf32> -> vector<4x68xf32>
    %cst_19 = arith.constant dense<0.000000e+00> : vector<3x68xf32>
    %35 = tpu.matmul %19, %34, %cst_19 {dimension_numbers = #tpu.dot_dimension_numbers<[1], [0], [0], [1], [0, 0, 1, 1], [], []>, precision = #tpu.contract_precision<fp32>} : vector<3x4xf32>, vector<4x68xf32>, vector<3x68xf32> -> vector<3x68xf32>
    %c0_20 = arith.constant 0 : index
    %c0_21 = arith.constant 0 : index
    %36 = vector.load %arg2[%c0_20, %c0_21] : memref<3x68xf32, #tpu.memory_space<vmem>>, vector<3x68xf32>
    tpu.vector_store %arg2[%c0_20, %c0_21], %35 {strides = array<i32>} : memref<3x68xf32, #tpu.memory_space<vmem>>, vector<3x68xf32>,
    return
  }
}

</mosaic_0001>

<llo_original>
// kernel: compose_forward.1
$region0: #{compose_forward.1}
  #allocation0 [shape = 'u32[]', space=smem, size = 0x4, offset = 0x4, fixed_abs, tag = 'smem constant byte address 0x4 - core index']
  #allocation1 [shape = 'u32[144,128]{1,0:T(1,128)}', space=vmem, size = 0x12000, scoped, tag = 'internal scratch']
  %s0 = inlined_call_operand.vmem [shape: bf16[32,3600], index: 0, kind: input, shape index: {}]
  %s1 = inlined_call_operand.vmem [shape: f32[344,68], index: 1, kind: input, shape index: {}]
  %s2 = inlined_call_operand.hbm [shape: f32[3,68], index: 2, kind: output, shape index: {}]
  %s3 = sld [smem:[#allocation0]]
  $region18: #{compose_forward.1} parent=0
    _
  %s5 = ssub.s32 1, %s3
  %s6 = scalar_select 0, %s5, %s3
  $region1: #{compose_forward.1} parent=0
    #allocation2 [shape = 'u8[2048]{0}', space=vmem, size = 0x800, scoped, tag = 'output window, operand 0, single buffered']
    #allocation3 [shape = 's32[1]{0}', space=sflag, size = 0x4, scoped, tag = 'scoped memory for compose_forward.1']
    %7 = vsyncpa [#allocation3], 0
    // Predicated region
    $region2: #{compose_forward.1} parent=1 // pred_check
      _
    $region3: #{compose_forward.1} parent=1 // pred_check_branch
      %9 = sbr.rel (0) target = $region5
    $region4: #{compose_forward.1} parent=1 // pred_region
      _
    $region5: #{compose_forward.1} parent=1 // pred_fallthru
      _
    // Predicated region
    $region6: #{compose_forward.1} parent=1 // pred_check
      _
    $region7: #{compose_forward.1} parent=1 // pred_check_branch
      %11 = sbr.rel (0) target = $region9
    $region8: #{compose_forward.1} parent=1 // pred_region
      _
    $region9: #{compose_forward.1} parent=1 // pred_fallthru
      _
    %v13 = vld [vmem:[%s1] sm:$0xff]
    %v14 = vld [vmem:[%s1 + $0x8] sm:$0xff]
    %v15 = vld [vmem:[%s1 + $0x10] sm:$0xff]
    %v16 = vld [vmem:[%s1 + $0x18] sm:$0xff]
    %v17 = vpack.c.bf16 %v14, %v13
    %v18 = vpack.c.bf16 %v16, %v15
    %v19 = vld [vmem:[%s0] sm:$0xff]
    %v20 = vld [vmem:[%s0 + $0x8] sm:$0xff]
    %v21 = vld [vmem:[%s0 + $0x10] sm:$0xff]
    %v22 = vld [vmem:[%s0 + $0x18] sm:$0xff]
    %v23 = vld [vmem:[%s0 + $0x20] sm:$0xff]
    %v24 = vld [vmem:[%s0 + $0x28] sm:$0xff]
    %v25 = vld [vmem:[%s0 + $0x30] sm:$0xff]
    %v26 = vld [vmem:[%s0 + $0x38] sm:$0xff]
    %v27 = vld [vmem:[%s0 + $0x40] sm:$0xff]
    %v28 = vld [vmem:[%s0 + $0x48] sm:$0xff]
    %v29 = vld [vmem:[%s0 + $0x50] sm:$0xff]
    %v30 = vld [vmem:[%s0 + $0x58] sm:$0xff]
    %v31 = vld [vmem:[%s0 + $0x60] sm:$0xff]
    %v32 = vld [vmem:[%s0 + $0x68] sm:$0xff]
    %v33 = vld [vmem:[%s0 + $0x70] sm:$0xf]
    %v34 = vld [vmem:[%s0 + $0x74] sm:$0xff]
    %v35 = vld [vmem:[%s0 + $0x7c] sm:$0xff]
    %v36 = vld [vmem:[%s0 + $0x84] sm:$0xff]
    %v37 = vld [vmem:[%s0 + $0x8c] sm:$0xff]
    %v38 = vld [vmem:[%s0 + $0x94] sm:$0xff]
    %v39 = vld [vmem:[%s0 + $0x9c] sm:$0xff]
    %v40 = vld [vmem:[%s0 + $0xa4] sm:$0xff]
    %v41 = vld [vmem:[%s0 + $0xac] sm:$0xff]
    %v42 = vld [vmem:[%s0 + $0xb4] sm:$0xff]
    %v43 = vld [vmem:[%s0 + $0xbc] sm:$0xff]
    %v44 = vld [vmem:[%s0 + $0xc4] sm:$0xff]
    %v45 = vld [vmem:[%s0 + $0xcc] sm:$0xff]
    %v46 = vld [vmem:[%s0 + $0xd4] sm:$0xff]
    %v47 = vld [vmem:[%s0 + $0xdc] sm:$0xff]
    %v48 = vld [vmem:[%s0 + $0xe4] sm:$0xf]
    %v49 = vld [vmem:[%s0 + $0xe8] sm:$0xff]
    %v50 = vld [vmem:[%s0 + $0xf0] sm:$0xff]
    %v51 = vld [vmem:[%s0 + $0xf8] sm:$0xff]
    %v52 = vld [vmem:[%s0 + $0x100] sm:$0xff]
    %v53 = vld [vmem:[%s0 + $0x108] sm:$0xff]
    %v54 = vld [vmem:[%s0 + $0x110] sm:$0xff]
    %v55 = vld [vmem:[%s0 + $0x118] sm:$0xff]
    %v56 = vld [vmem:[%s0 + $0x120] sm:$0xff]
    %v57 = vld [vmem:[%s0 + $0x128] sm:$0xff]
    %v58 = vld [vmem:[%s0 + $0x130] sm:$0xff]
    %v59 = vld [vmem:[%s0 + $0x138] sm:$0xff]
    %v60 = vld [vmem:[%s0 + $0x140] sm:$0xff]
    %v61 = vld [vmem:[%s0 + $0x148] sm:$0xff]
    %v62 = vld [vmem:[%s0 + $0x150] sm:$0xff]
    %v63 = vld [vmem:[%s0 + $0x158] sm:$0xf]
    %v64 = vld [vmem:[%s0 + $0x15c] sm:$0xff]
    %v65 = vld [vmem:[%s0 + $0x164] sm:$0xff]
    %v66 = vld [vmem:[%s0 + $0x16c] sm:$0xff]
    %v67 = vld [vmem:[%s0 + $0x174] sm:$0xff]
    %v68 = vld [vmem:[%s0 + $0x17c] sm:$0xff]
    %v69 = vld [vmem:[%s0 + $0x184] sm:$0xff]
    %v70 = vld [vmem:[%s0 + $0x18c] sm:$0xff]
    %v71 = vld [vmem:[%s0 + $0x194] sm:$0xff]
    %v72 = vld [vmem:[%s0 + $0x19c] sm:$0xff]
    %v73 = vld [vmem:[%s0 + $0x1a4] sm:$0xff]
    %v74 = vld [vmem:[%s0 + $0x1ac] sm:$0xff]
    %v75 = vld [vmem:[%s0 + $0x1b4] sm:$0xff]
    %v76 = vld [vmem:[%s0 + $0x1bc] sm:$0xff]
    %v77 = vld [vmem:[%s0 + $0x1c4] sm:$0xff]
    %v78 = vld [vmem:[%s0 + $0x1cc] sm:$0xf]
    %v139 = vunpack.c.l.b16 %v19
    %v140 = vunpack.c.h.b16 %v19
    %v141 = vunpack.c.l.b16 %v20
    %v142 = vunpack.c.h.b16 %v20
    %v143 = vunpack.c.l.b16 %v21
    %v144 = vunpack.c.h.b16 %v21
    %v145 = vunpack.c.l.b16 %v22
    %v146 = vunpack.c.h.b16 %v22
    %v147 = vunpack.c.l.b16 %v23
    %v148 = vunpack.c.h.b16 %v23
    %v149 = vunpack.c.l.b16 %v24
    %v150 = vunpack.c.h.b16 %v24
    %v151 = vunpack.c.l.b16 %v25
    %v152 = vunpack.c.h.b16 %v25
    %v153 = vunpack.c.l.b16 %v26
    %v154 = vunpack.c.h.b16 %v26
    %v155 = vunpack.c.l.b16 %v27
    %v156 = vunpack.c.h.b16 %v27
    %v157 = vunpack.c.l.b16 %v28
    %v158 = vunpack.c.h.b16 %v28
    %v159 = vunpack.c.l.b16 %v29
    %v160 = vunpack.c.h.b16 %v29
    %v161 = vunpack.c.l.b16 %v30
    %v162 = vunpack.c.h.b16 %v30
    %v163 = vunpack.c.l.b16 %v31
    %v164 = vunpack.c.h.b16 %v31
    %v165 = vunpack.c.l.b16 %v32
    %v166 = vunpack.c.h.b16 %v32
    %v167 = vunpack.c.l.b16 %v33
    %v168 = vunpack.c.l.b16 %v34
    %v169 = vunpack.c.h.b16 %v34
    %v170 = vunpack.c.l.b16 %v35
    %v171 = vunpack.c.h.b16 %v35
    %v172 = vunpack.c.l.b16 %v36
    %v173 = vunpack.c.h.b16 %v36
    %v174 = vunpack.c.l.b16 %v37
    %v175 = vunpack.c.h.b16 %v37
    %v176 = vunpack.c.l.b16 %v38
    %v177 = vunpack.c.h.b16 %v38
    %v178 = vunpack.c.l.b16 %v39
    %v179 = vunpack.c.h.b16 %v39
    %v180 = vunpack.c.l.b16 %v40
    %v181 = vunpack.c.h.b16 %v40
    %v182 = vunpack.c.l.b16 %v41
    %v183 = vunpack.c.h.b16 %v41
    %v184 = vunpack.c.l.b16 %v42
    %v185 = vunpack.c.h.b16 %v42
    %v186 = vunpack.c.l.b16 %v43
    %v187 = vunpack.c.h.b16 %v43
    %v188 = vunpack.c.l.b16 %v44
    %v189 = vunpack.c.h.b16 %v44
    %v190 = vunpack.c.l.b16 %v45
    %v191 = vunpack.c.h.b16 %v45
    %v192 = vunpack.c.l.b16 %v46
    %v193 = vunpack.c.h.b16 %v46
    %v194 = vunpack.c.l.b16 %v47
    %v195 = vunpack.c.h.b16 %v47
    %v196 = vunpack.c.l.b16 %v48
    %v197 = vunpack.c.l.b16 %v49
    %v198 = vunpack.c.h.b16 %v49
    %v199 = vunpack.c.l.b16 %v50
    %v200 = vunpack.c.h.b16 %v50
    %v201 = vunpack.c.l.b16 %v51
    %v202 = vunpack.c.h.b16 %v51
    %v203 = vunpack.c.l.b16 %v52
    %v204 = vunpack.c.h.b16 %v52
    %v205 = vunpack.c.l.b16 %v53
    %v206 = vunpack.c.h.b16 %v53
    %v207 = vunpack.c.l.b16 %v54
    %v208 = vunpack.c.h.b16 %v54
    %v209 = vunpack.c.l.b16 %v55
    %v210 = vunpack.c.h.b16 %v55
    %v211 = vunpack.c.l.b16 %v56
    %v212 = vunpack.c.h.b16 %v56
    %v213 = vunpack.c.l.b16 %v57
    %v214 = vunpack.c.h.b16 %v57
    %v215 = vunpack.c.l.b16 %v58
    %v216 = vunpack.c.h.b16 %v58
    %v217 = vunpack.c.l.b16 %v59
    %v218 = vunpack.c.h.b16 %v59
    %v219 = vunpack.c.l.b16 %v60
    %v220 = vunpack.c.h.b16 %v60
    %v221 = vunpack.c.l.b16 %v61
    %v222 = vunpack.c.h.b16 %v61
    %v223 = vunpack.c.l.b16 %v62
    %v224 = vunpack.c.h.b16 %v62
    %v225 = vunpack.c.l.b16 %v63
    %v226 = vunpack.c.l.b16 %v64
    %v227 = vunpack.c.h.b16 %v64
    %v228 = vunpack.c.l.b16 %v65
    %v229 = vunpack.c.h.b16 %v65
    %v230 = vunpack.c.l.b16 %v66
    %v231 = vunpack.c.h.b16 %v66
    %v232 = vunpack.c.l.b16 %v67
    %v233 = vunpack.c.h.b16 %v67
    %v234 = vunpack.c.l.b16 %v68
    %v235 = vunpack.c.h.b16 %v68
    %v236 = vunpack.c.l.b16 %v69
    %v237 = vunpack.c.h.b16 %v69
    %v238 = vunpack.c.l.b16 %v70
    %v239 = vunpack.c.h.b16 %v70
    %v240 = vunpack.c.l.b16 %v71
    %v241 = vunpack.c.h.b16 %v71
    %v242 = vunpack.c.l.b16 %v72
    %v243 = vunpack.c.h.b16 %v72
    %v244 = vunpack.c.l.b16 %v73
    %v245 = vunpack.c.h.b16 %v73
    %v246 = vunpack.c.l.b16 %v74
    %v247 = vunpack.c.h.b16 %v74
    %v248 = vunpack.c.l.b16 %v75
    %v249 = vunpack.c.h.b16 %v75
    %v250 = vunpack.c.l.b16 %v76
    %v251 = vunpack.c.h.b16 %v76
    %v252 = vunpack.c.l.b16 %v77
    %v253 = vunpack.c.h.b16 %v77
    %v254 = vunpack.c.l.b16 %v78
    %v255 = vpack.c.b16 %v168, %v139
    %v256 = vpack.c.b16 %v169, %v140
    %v257 = vpack.c.b16 %v170, %v141
    %v258 = vpack.c.b16 %v171, %v142
    %v259 = vpack.c.b16 %v172, %v143
    %v260 = vpack.c.b16 %v173, %v144
    %v261 = vpack.c.b16 %v174, %v145
    %v262 = vpack.c.b16 %v175, %v146
    %v263 = vpack.c.b16 %v176, %v147
    %v264 = vpack.c.b16 %v177, %v148
    %v265 = vpack.c.b16 %v178, %v149
    %v266 = vpack.c.b16 %v179, %v150
    %v267 = vpack.c.b16 %v180, %v151
    %v268 = vpack.c.b16 %v181, %v152
    %v269 = vpack.c.b16 %v182, %v153
    %v270 = vpack.c.b16 %v183, %v154
    %v271 = vpack.c.b16 %v184, %v155
    %v272 = vpack.c.b16 %v185, %v156
    %v273 = vpack.c.b16 %v186, %v157
    %v274 = vpack.c.b16 %v187, %v158
    %v275 = vpack.c.b16 %v188, %v159
    %v276 = vpack.c.b16 %v189, %v160
    %v277 = vpack.c.b16 %v190, %v161
    %v278 = vpack.c.b16 %v191, %v162
    %v279 = vpack.c.b16 %v192, %v163
    %v280 = vpack.c.b16 %v193, %v164
    %v281 = vpack.c.b16 %v194, %v165
    %v282 = vpack.c.b16 %v195, %v166
    %v283 = vpack.c.b16 %v196, %v167
    %v284 = vpack.c.b16 %v226, %v197
    %v285 = vpack.c.b16 %v227, %v198
    %v286 = vpack.c.b16 %v228, %v199
    %v287 = vpack.c.b16 %v229, %v200
    %v288 = vpack.c.b16 %v230, %v201
    %v289 = vpack.c.b16 %v231, %v202
    %v290 = vpack.c.b16 %v232, %v203
    %v291 = vpack.c.b16 %v233, %v204
    %v292 = vpack.c.b16 %v234, %v205
    %v293 = vpack.c.b16 %v235, %v206
    %v294 = vpack.c.b16 %v236, %v207
    %v295 = vpack.c.b16 %v237, %v208
    %v296 = vpack.c.b16 %v238, %v209
    %v297 = vpack.c.b16 %v239, %v210
    %v298 = vpack.c.b16 %v240, %v211
    %v299 = vpack.c.b16 %v241, %v212
    %v300 = vpack.c.b16 %v242, %v213
    %v301 = vpack.c.b16 %v243, %v214
    %v302 = vpack.c.b16 %v244, %v215
    %v303 = vpack.c.b16 %v245, %v216
    %v304 = vpack.c.b16 %v246, %v217
    %v305 = vpack.c.b16 %v247, %v218
    %v306 = vpack.c.b16 %v248, %v219
    %v307 = vpack.c.b16 %v249, %v220
    %v308 = vpack.c.b16 %v250, %v221
    %v309 = vpack.c.b16 %v251, %v222
    %v310 = vpack.c.b16 %v252, %v223
    %v311 = vpack.c.b16 %v253, %v224
    %v312 = vpack.c.b16 %v254, %v225
    %vm371 = vcmask 261120
    %v373 = vsel %vm371, %v17, 0
    %v376 = vsel %vm371, %v18, 0
    %378 = vmatprep.subr.bf16.mxu0 %v256
    %379 = vmatpush1.bf16.msra.mxu0 %v255
    %380 = vmatprep.subr.bf16.mxu0 %v285
    %381 = vmatpush1.bf16.msra.mxu0 %v284
    %382 = vmatprep.subr.bf16.mxu0 0
    %383 = vmatpush1.bf16.msra.mxu0 0
    %384 = vmatprep.subr.bf16.mxu0 0
    %385 = vmatpush1.bf16.msra.mxu0 0
    %386 = vmatprep.subr.bf16.mxu0 0
    %387 = vmatpush1.bf16.msra.mxu0 0
    %388 = vmatprep.subr.bf16.mxu0 0
    %389 = vmatpush1.bf16.msra.mxu0 0
    %390 = vmatprep.subr.bf16.mxu0 0
    %391 = vmatpush1.bf16.msra.mxu0 0
    %392 = vmatprep.subr.bf16.mxu0 0
    %393 = vmatpush1.bf16.msra.mxu0 0
    %394 = vmatprep.subr.bf16.mxu0 0
    %395 = vmatpush1.bf16.msra.mxu0 0
    %396 = vmatprep.subr.bf16.mxu0 0
    %397 = vmatpush1.bf16.msra.mxu0 0
    %398 = vmatprep.subr.bf16.mxu0 0
    %399 = vmatpush1.bf16.msra.mxu0 0
    %400 = vmatprep.subr.bf16.mxu0 0
    %401 = vmatpush1.bf16.msra.mxu0 0
    %402 = vmatprep.subr.bf16.mxu0 0
    %403 = vmatpush1.bf16.msra.mxu0 0
    %404 = vmatprep.subr.bf16.mxu0 0
    %405 = vmatpush1.bf16.msra.mxu0 0
    %406 = vmatprep.subr.bf16.mxu0 0
    %407 = vmatpush1.bf16.msra.mxu0 0
    %408 = vmatprep.subr.bf16.mxu0 0
    %409 = vmatpush1.bf16.msra.mxu0 0
    %410 = vmatprep.mubr.bf16.mxu0 0
    %411 = vmatmul.mubr.bf16.gmra.mrb[0].mxu0 %v373
    %v412 = vpop.f32.mrb[0].mxu0
    %v413 = vadd.f32 0.0, %v412
    %v414 = vpop.f32.mrb[0].mxu0
    %v415 = vadd.f32 0.0, %v414
    %v416 = vpop.f32.mrb[0].mxu0
    %v417 = vadd.f32 0.0, %v416
    %v418 = vpop.f32.mrb[0].mxu0
    %v419 = vadd.f32 0.0, %v418
    %420 = vmatprep.mubr.bf16.mxu0 0
    %421 = vmatmul.mubr.bf16.gmra.mrb[0].mxu0 %v376
    %v422 = vpop.f32.mrb[0].mxu0
    %v423 = vadd.f32 0.0, %v422
    %v424 = vpop.f32.mrb[0].mxu0
    %v425 = vadd.f32 0.0, %v424
    %v426 = vpop.f32.mrb[0].mxu0
    %v427 = vadd.f32 0.0, %v426
    %v428 = vpop.f32.mrb[0].mxu0
    %v429 = vadd.f32 0.0, %v428
    %430 = vdwg.mxu0
    %431 = vmatprep.subr.bf16.mxu0 %v258
    %432 = vmatpush1.bf16.msra.mxu0 %v257
    %433 = vmatprep.subr.bf16.mxu0 %v287
    %434 = vmatpush1.bf16.msra.mxu0 %v286
    %435 = vmatprep.subr.bf16.mxu0 0
    %436 = vmatpush1.bf16.msra.mxu0 0
    %437 = vmatprep.subr.bf16.mxu0 0
    %438 = vmatpush1.bf16.msra.mxu0 0
    %439 = vmatprep.subr.bf16.mxu0 0
    %440 = vmatpush1.bf16.msra.mxu0 0
    %441 = vmatprep.subr.bf16.mxu0 0
    %442 = vmatpush1.bf16.msra.mxu0 0
    %443 = vmatprep.subr.bf16.mxu0 0
    %444 = vmatpush1.bf16.msra.mxu0 0
    %445 = vmatprep.subr.bf16.mxu0 0
    %446 = vmatpush1.bf16.msra.mxu0 0
    %447 = vmatprep.subr.bf16.mxu0 0
    %448 = vmatpush1.bf16.msra.mxu0 0
    %449 = vmatprep.subr.bf16.mxu0 0
    %450 = vmatpush1.bf16.msra.mxu0 0
    %451 = vmatprep.subr.bf16.mxu0 0
    %452 = vmatpush1.bf16.msra.mxu0 0
    %453 = vmatprep.subr.bf16.mxu0 0
    %454 = vmatpush1.bf16.msra.mxu0 0
    %455 = vmatprep.subr.bf16.mxu0 0
    %456 = vmatpush1.bf16.msra.mxu0 0
    %457 = vmatprep.subr.bf16.mxu0 0
    %458 = vmatpush1.bf16.msra.mxu0 0
    %459 = vmatprep.subr.bf16.mxu0 0
    %460 = vmatpush1.bf16.msra.mxu0 0
    %461 = vmatprep.subr.bf16.mxu0 0
    %462 = vmatpush1.bf16.msra.mxu0 0
    %463 = vmatprep.mubr.bf16.mxu0 0
    %464 = vmatmul.mubr.bf16.gmra.mrb[0].mxu0 %v373
    %v465 = vpop.f32.mrb[0].mxu0
    %v466 = vadd.f32 0.0, %v465
    %v467 = vpop.f32.mrb[0].mxu0
    %v468 = vadd.f32 0.0, %v467
    %v469 = vpop.f32.mrb[0].mxu0
    %v470 = vadd.f32 0.0, %v469
    %v471 = vpop.f32.mrb[0].mxu0
    %v472 = vadd.f32 0.0, %v471
    %473 = vmatprep.mubr.bf16.mxu0 0
    %474 = vmatmul.mubr.bf16.gmra.mrb[0].mxu0 %v376
    %v475 = vpop.f32.mrb[0].mxu0
    %v476 = vadd.f32 0.0, %v475
    %v477 = vpop.f32.mrb[0].mxu0
    %v478 = vadd.f32 0.0, %v477
    %v479 = vpop.f32.mrb[0].mxu0
    %v480 = vadd.f32 0.0, %v479
    %v481 = vpop.f32.mrb[0].mxu0
    %v482 = vadd.f32 0.0, %v481
    %483 = vdwg.mxu0
    %484 = vmatprep.subr.bf16.mxu0 %v260
    %485 = vmatpush1.bf16.msra.mxu0 %v259
    %486 = vmatprep.subr.bf16.mxu0 %v289
    %487 = vmatpush1.bf16.msra.mxu0 %v288
    %488 = vmatprep.subr.bf16.mxu0 0
    %489 = vmatpush1.bf16.msra.mxu0 0
    %490 = vmatprep.subr.bf16.mxu0 0
    %491 = vmatpush1.bf16.msra.mxu0 0
    %492 = vmatprep.subr.bf16.mxu0 0
    %493 = vmatpush1.bf16.msra.mxu0 0
    %494 = vmatprep.subr.bf16.mxu0 0
    %495 = vmatpush1.bf16.msra.mxu0 0
    %496 = vmatprep.subr.bf16.mxu0 0
    %497 = vmatpush1.bf16.msra.mxu0 0
    %498 = vmatprep.subr.bf16.mxu0 0
    %499 = vmatpush1.bf16.msra.mxu0 0
    %500 = vmatprep.subr.bf16.mxu0 0
    %501 = vmatpush1.bf16.msra.mxu0 0
    %502 = vmatprep.subr.bf16.mxu0 0
    %503 = vmatpush1.bf16.msra.mxu0 0
    %504 = vmatprep.subr.bf16.mxu0 0
    %505 = vmatpush1.bf16.msra.mxu0 0
    %506 = vmatprep.subr.bf16.mxu0 0
    %507 = vmatpush1.bf16.msra.mxu0 0
    %508 = vmatprep.subr.bf16.mxu0 0
    %509 = vmatpush1.bf16.msra.mxu0 0
    %510 = vmatprep.subr.bf16.mxu0 0
    %511 = vmatpush1.bf16.msra.mxu0 0
    %512 = vmatprep.subr.bf16.mxu0 0
    %513 = vmatpush1.bf16.msra.mxu0 0
    %514 = vmatprep.subr.bf16.mxu0 0
    %515 = vmatpush1.bf16.msra.mxu0 0
    %516 = vmatprep.mubr.bf16.mxu0 0
    %517 = vmatmul.mubr.bf16.gmra.mrb[0].mxu0 %v373
    %v518 = vpop.f32.mrb[0].mxu0
    %v519 = vadd.f32 0.0, %v518
    %v520 = vpop.f32.mrb[0].mxu0
    %v521 = vadd.f32 0.0, %v520
    %v522 = vpop.f32.mrb[0].mxu0
    %v523 = vadd.f32 0.0, %v522
    %v524 = vpop.f32.mrb[0].mxu0
    %v525 = vadd.f32 0.0, %v524
    %526 = vmatprep.mubr.bf16.mxu0 0
    %527 = vmatmul.mubr.bf16.gmra.mrb[0].mxu0 %v376
    %v528 = vpop.f32.mrb[0].mxu0
    %v529 = vadd.f32 0.0, %v528
    %v530 = vpop.f32.mrb[0].mxu0
    %v531 = vadd.f32 0.0, %v530
    %v532 = vpop.f32.mrb[0].mxu0
    %v533 = vadd.f32 0.0, %v532
    %v534 = vpop.f32.mrb[0].mxu0
    %v535 = vadd.f32 0.0, %v534
    %536 = vdwg.mxu0
    %537 = vmatprep.subr.bf16.mxu0 %v262
    %538 = vmatpush1.bf16.msra.mxu0 %v261
    %539 = vmatprep.subr.bf16.mxu0 %v291
    %540 = vmatpush1.bf16.msra.mxu0 %v290
    %541 = vmatprep.subr.bf16.mxu0 0
    %542 = vmatpush1.bf16.msra.mxu0 0
    %543 = vmatprep.subr.bf16.mxu0 0
    %544 = vmatpush1.bf16.msra.mxu0 0
    %545 = vmatprep.subr.bf16.mxu0 0
    %546 = vmatpush1.bf16.msra.mxu0 0
    %547 = vmatprep.subr.bf16.mxu0 0
    %548 = vmatpush1.bf16.msra.mxu0 0
    %549 = vmatprep.subr.bf16.mxu0 0
    %550 = vmatpush1.bf16.msra.mxu0 0
    %551 = vmatprep.subr.bf16.mxu0 0
    %552 = vmatpush1.bf16.msra.mxu0 0
    %553 = vmatprep.subr.bf16.mxu0 0
    %554 = vmatpush1.bf16.msra.mxu0 0
    %555 = vmatprep.subr.bf16.mxu0 0
    %556 = vmatpush1.bf16.msra.mxu0 0
    %557 = vmatprep.subr.bf16.mxu0 0
    %558 = vmatpush1.bf16.msra.mxu0 0
    %559 = vmatprep.subr.bf16.mxu0 0
    %560 = vmatpush1.bf16.msra.mxu0 0
    %561 = vmatprep.subr.bf16.mxu0 0
    %562 = vmatpush1.bf16.msra.mxu0 0
    %563 = vmatprep.subr.bf16.mxu0 0
    %564 = vmatpush1.bf16.msra.mxu0 0
    %565 = vmatprep.subr.bf16.mxu0 0
    %566 = vmatpush1.bf16.msra.mxu0 0
    %567 = vmatprep.subr.bf16.mxu0 0
    %568 = vmatpush1.bf16.msra.mxu0 0
    %569 = vmatprep.mubr.bf16.mxu0 0
    %570 = vmatmul.mubr.bf16.gmra.mrb[0].mxu0 %v373
    %v571 = vpop.f32.mrb[0].mxu0
    %v572 = vadd.f32 0.0, %v571
    %v573 = vpop.f32.mrb[0].mxu0
    %v574 = vadd.f32 0.0, %v573
    %v575 = vpop.f32.mrb[0].mxu0
    %v576 = vadd.f32 0.0, %v575
    %v577 = vpop.f32.mrb[0].mxu0
    %v578 = vadd.f32 0.0, %v577
    %579 = vmatprep.mubr.bf16.mxu0 0
    %580 = vmatmul.mubr.bf16.gmra.mrb[0].mxu0 %v376
    %v581 = vpop.f32.mrb[0].mxu0
    %v582 = vadd.f32 0.0, %v581
    %v583 = vpop.f32.mrb[0].mxu0
    %v584 = vadd.f32 0.0, %v583
    %v585 = vpop.f32.mrb[0].mxu0
    %v586 = vadd.f32 0.0, %v585
    %v587 = vpop.f32.mrb[0].mxu0
    %v588 = vadd.f32 0.0, %v587
    %589 = vdwg.mxu0
    %590 = vmatprep.subr.bf16.mxu0 %v264
    %591 = vmatpush1.bf16.msra.mxu0 %v263
    %592 = vmatprep.subr.bf16.mxu0 %v293
    %593 = vmatpush1.bf16.msra.mxu0 %v292
    %594 = vmatprep.subr.bf16.mxu0 0
    %595 = vmatpush1.bf16.msra.mxu0 0
    %596 = vmatprep.subr.bf16.mxu0 0
    %597 = vmatpush1.bf16.msra.mxu0 0
    %598 = vmatprep.subr.bf16.mxu0 0
    %599 = vmatpush1.bf16.msra.mxu0 0
    %600 = vmatprep.subr.bf16.mxu0 0
    %601 = vmatpush1.bf16.msra.mxu0 0
    %602 = vmatprep.subr.bf16.mxu0 0
    %603 = vmatpush1.bf16.msra.mxu0 0
    %604 = vmatprep.subr.bf16.mxu0 0
    %605 = vmatpush1.bf16.msra.mxu0 0
    %606 = vmatprep.subr.bf16.mxu0 0
    %607 = vmatpush1.bf16.msra.mxu0 0
    %608 = vmatprep.subr.bf16.mxu0 0
    %609 = vmatpush1.bf16.msra.mxu0 0
    %610 = vmatprep.subr.bf16.mxu0 0
    %611 = vmatpush1.bf16.msra.mxu0 0
    %612 = vmatprep.subr.bf16.mxu0 0
    %613 = vmatpush1.bf16.msra.mxu0 0
    %614 = vmatprep.subr.bf16.mxu0 0
    %615 = vmatpush1.bf16.msra.mxu0 0
    %616 = vmatprep.subr.bf16.mxu0 0
    %617 = vmatpush1.bf16.msra.mxu0 0
    %618 = vmatprep.subr.bf16.mxu0 0
    %619 = vmatpush1.bf16.msra.mxu0 0
    %620 = vmatprep.subr.bf16.mxu0 0
    %621 = vmatpush1.bf16.msra.mxu0 0
    %622 = vmatprep.mubr.bf16.mxu0 0
    %623 = vmatmul.mubr.bf16.gmra.mrb[0].mxu0 %v373
    %v624 = vpop.f32.mrb[0].mxu0
    %v625 = vadd.f32 0.0, %v624
    %v626 = vpop.f32.mrb[0].mxu0
    %v627 = vadd.f32 0.0, %v626
    %v628 = vpop.f32.mrb[0].mxu0
    %v629 = vadd.f32 0.0, %v628
    %v630 = vpop.f32.mrb[0].mxu0
    %v631 = vadd.f32 0.0, %v630
    %632 = vmatprep.mubr.bf16.mxu0 0
    %633 = vmatmul.mubr.bf16.gmra.mrb[0].mxu0 %v376
    %v634 = vpop.f32.mrb[0].mxu0
    %v635 = vadd.f32 0.0, %v634
    %v636 = vpop.f32.mrb[0].mxu0
    %v637 = vadd.f32 0.0, %v636
    %v638 = vpop.f32.mrb[0].mxu0
    %v639 = vadd.f32 0.0, %v638
    %v640 = vpop.f32.mrb[0].mxu0
    %v641 = vadd.f32 0.0, %v640
    %642 = vdwg.mxu0
    %643 = vmatprep.subr.bf16.mxu0 %v266
    %644 = vmatpush1.bf16.msra.mxu0 %v265
    %645 = vmatprep.subr.bf16.mxu0 %v295
    %646 = vmatpush1.bf16.msra.mxu0 %v294
    %647 = vmatprep.subr.bf16.mxu0 0
    %648 = vmatpush1.bf16.msra.mxu0 0
    %649 = vmatprep.subr.bf16.mxu0 0
    %650 = vmatpush1.bf16.msra.mxu0 0
    %651 = vmatprep.subr.bf16.mxu0 0
    %652 = vmatpush1.bf16.msra.mxu0 0
    %653 = vmatprep.subr.bf16.mxu0 0
    %654 = vmatpush1.bf16.msra.mxu0 0
    %655 = vmatprep.subr.bf16.mxu0 0
    %656 = vmatpush1.bf16.msra.mxu0 0
    %657 = vmatprep.subr.bf16.mxu0 0
    %658 = vmatpush1.bf16.msra.mxu0 0
    %659 = vmatprep.subr.bf16.mxu0 0
    %660 = vmatpush1.bf16.msra.mxu0 0
    %661 = vmatprep.subr.bf16.mxu0 0
    %662 = vmatpush1.bf16.msra.mxu0 0
    %663 = vmatprep.subr.bf16.mxu0 0
    %664 = vmatpush1.bf16.msra.mxu0 0
    %665 = vmatprep.subr.bf16.mxu0 0
    %666 = vmatpush1.bf16.msra.mxu0 0
    %667 = vmatprep.subr.bf16.mxu0 0
    %668 = vmatpush1.bf16.msra.mxu0 0
    %669 = vmatprep.subr.bf16.mxu0 0
    %670 = vmatpush1.bf16.msra.mxu0 0
    %671 = vmatprep.subr.bf16.mxu0 0
    %672 = vmatpush1.bf16.msra.mxu0 0
    %673 = vmatprep.subr.bf16.mxu0 0
    %674 = vmatpush1.bf16.msra.mxu0 0
    %675 = vmatprep.mubr.bf16.mxu0 0
    %676 = vmatmul.mubr.bf16.gmra.mrb[0].mxu0 %v373
    %v677 = vpop.f32.mrb[0].mxu0
    %v678 = vadd.f32 0.0, %v677
    %v679 = vpop.f32.mrb[0].mxu0
    %v680 = vadd.f32 0.0, %v679
    %v681 = vpop.f32.mrb[0].mxu0
    %v682 = vadd.f32 0.0, %v681
    %v683 = vpop.f32.mrb[0].mxu0
    %v684 = vadd.f32 0.0, %v683
    %685 = vmatprep.mubr.bf16.mxu0 0
    %686 = vmatmul.mubr.bf16.gmra.mrb[0].mxu0 %v376
    %v687 = vpop.f32.mrb[0].mxu0
    %v688 = vadd.f32 0.0, %v687
    %v689 = vpop.f32.mrb[0].mxu0
    %v690 = vadd.f32 0.0, %v689
    %v691 = vpop.f32.mrb[0].mxu0
    %v692 = vadd.f32 0.0, %v691
    %v693 = vpop.f32.mrb[0].mxu0
    %v694 = vadd.f32 0.0, %v693
    %695 = vdwg.mxu0
    %696 = vmatprep.subr.bf16.mxu0 %v268
    %697 = vmatpush1.bf16.msra.mxu0 %v267
    %698 = vmatprep.subr.bf16.mxu0 %v297
    %699 = vmatpush1.bf16.msra.mxu0 %v296
    %700 = vmatprep.subr.bf16.mxu0 0
    %701 = vmatpush1.bf16.msra.mxu0 0
    %702 = vmatprep.subr.bf16.mxu0 0
    %703 = vmatpush1.bf16.msra.mxu0 0
    %704 = vmatprep.subr.bf16.mxu0 0
    %705 = vmatpush1.bf16.msra.mxu0 0
    %706 = vmatprep.subr.bf16.mxu0 0
    %707 = vmatpush1.bf16.msra.mxu0 0
    %708 = vmatprep.subr.bf16.mxu0 0
    %709 = vmatpush1.bf16.msra.mxu0 0
    %710 = vmatprep.subr.bf16.mxu0 0
    %711 = vmatpush1.bf16.msra.mxu0 0
    %712 = vmatprep.subr.bf16.mxu0 0
    %713 = vmatpush1.bf16.msra.mxu0 0
    %714 = vmatprep.subr.bf16.mxu0 0
    %715 = vmatpush1.bf16.msra.mxu0 0
    %716 = vmatprep.subr.bf16.mxu0 0
    %717 = vmatpush1.bf16.msra.mxu0 0
    %718 = vmatprep.subr.bf16.mxu0 0
    %719 = vmatpush1.bf16.msra.mxu0 0
    %720 = vmatprep.subr.bf16.mxu0 0
    %721 = vmatpush1.bf16.msra.mxu0 0
    %722 = vmatprep.subr.bf16.mxu0 0
    %723 = vmatpush1.bf16.msra.mxu0 0
    %724 = vmatprep.subr.bf16.mxu0 0
    %725 = vmatpush1.bf16.msra.mxu0 0
    %726 = vmatprep.subr.bf16.mxu0 0
    %727 = vmatpush1.bf16.msra.mxu0 0
    %728 = vmatprep.mubr.bf16.mxu0 0
    %729 = vmatmul.mubr.bf16.gmra.mrb[0].mxu0 %v373
    %v730 = vpop.f32.mrb[0].mxu0
    %v731 = vadd.f32 0.0, %v730
    %v732 = vpop.f32.mrb[0].mxu0
    %v733 = vadd.f32 0.0, %v732
    %v734 = vpop.f32.mrb[0].mxu0
    %v735 = vadd.f32 0.0, %v734
    %v736 = vpop.f32.mrb[0].mxu0
    %v737 = vadd.f32 0.0, %v736
    %738 = vmatprep.mubr.bf16.mxu0 0
    %739 = vmatmul.mubr.bf16.gmra.mrb[0].mxu0 %v376
    %v740 = vpop.f32.mrb[0].mxu0
    %v741 = vadd.f32 0.0, %v740
    %v742 = vpop.f32.mrb[0].mxu0
    %v743 = vadd.f32 0.0, %v742
    %v744 = vpop.f32.mrb[0].mxu0
    %v745 = vadd.f32 0.0, %v744
    %v746 = vpop.f32.mrb[0].mxu0
    %v747 = vadd.f32 0.0, %v746
    %748 = vdwg.mxu0
    %749 = vmatprep.subr.bf16.mxu0 %v270
    %750 = vmatpush1.bf16.msra.mxu0 %v269
    %751 = vmatprep.subr.bf16.mxu0 %v299
    %752 = vmatpush1.bf16.msra.mxu0 %v298
    %753 = vmatprep.subr.bf16.mxu0 0
    %754 = vmatpush1.bf16.msra.mxu0 0
    %755 = vmatprep.subr.bf16.mxu0 0
    %756 = vmatpush1.bf16.msra.mxu0 0
    %757 = vmatprep.subr.bf16.mxu0 0
    %758 = vmatpush1.bf16.msra.mxu0 0
    %759 = vmatprep.subr.bf16.mxu0 0
    %760 = vmatpush1.bf16.msra.mxu0 0
    %761 = vmatprep.subr.bf16.mxu0 0
    %762 = vmatpush1.bf16.msra.mxu0 0
    %763 = vmatprep.subr.bf16.mxu0 0
    %764 = vmatpush1.bf16.msra.mxu0 0
    %765 = vmatprep.subr.bf16.mxu0 0
    %766 = vmatpush1.bf16.msra.mxu0 0
    %767 = vmatprep.subr.bf16.mxu0 0
    %768 = vmatpush1.bf16.msra.mxu0 0
    %769 = vmatprep.subr.bf16.mxu0 0
    %770 = vmatpush1.bf16.msra.mxu0 0
    %771 = vmatprep.subr.bf16.mxu0 0
    %772 = vmatpush1.bf16.msra.mxu0 0
    %773 = vmatprep.subr.bf16.mxu0 0
    %774 = vmatpush1.bf16.msra.mxu0 0
    %775 = vmatprep.subr.bf16.mxu0 0
    %776 = vmatpush1.bf16.msra.mxu0 0
    %777 = vmatprep.subr.bf16.mxu0 0
    %778 = vmatpush1.bf16.msra.mxu0 0
    %779 = vmatprep.subr.bf16.mxu0 0
    %780 = vmatpush1.bf16.msra.mxu0 0
    %781 = vmatprep.mubr.bf16.mxu0 0
    %782 = vmatmul.mubr.bf16.gmra.mrb[0].mxu0 %v373
    %v783 = vpop.f32.mrb[0].mxu0
    %v784 = vadd.f32 0.0, %v783
    %v785 = vpop.f32.mrb[0].mxu0
    %v786 = vadd.f32 0.0, %v785
    %v787 = vpop.f32.mrb[0].mxu0
    %v788 = vadd.f32 0.0, %v787
    %v789 = vpop.f32.mrb[0].mxu0
    %v790 = vadd.f32 0.0, %v789
    %791 = vmatprep.mubr.bf16.mxu0 0
    %792 = vmatmul.mubr.bf16.gmra.mrb[0].mxu0 %v376
    %v793 = vpop.f32.mrb[0].mxu0
    %v794 = vadd.f32 0.0, %v793
    %v795 = vpop.f32.mrb[0].mxu0
    %v796 = vadd.f32 0.0, %v795
    %v797 = vpop.f32.mrb[0].mxu0
    %v798 = vadd.f32 0.0, %v797
    %v799 = vpop.f32.mrb[0].mxu0
    %v800 = vadd.f32 0.0, %v799
    %801 = vdwg.mxu0
    %802 = vmatprep.subr.bf16.mxu0 %v272
    %803 = vmatpush1.bf16.msra.mxu0 %v271
    %804 = vmatprep.subr.bf16.mxu0 %v301
    %805 = vmatpush1.bf16.msra.mxu0 %v300
    %806 = vmatprep.subr.bf16.mxu0 0
    %807 = vmatpush1.bf16.msra.mxu0 0
    %808 = vmatprep.subr.bf16.mxu0 0
    %809 = vmatpush1.bf16.msra.mxu0 0
    %810 = vmatprep.subr.bf16.mxu0 0
    %811 = vmatpush1.bf16.msra.mxu0 0
    %812 = vmatprep.subr.bf16.mxu0 0
    %813 = vmatpush1.bf16.msra.mxu0 0
    %814 = vmatprep.subr.bf16.mxu0 0
    %815 = vmatpush1.bf16.msra.mxu0 0
    %816 = vmatprep.subr.bf16.mxu0 0
    %817 = vmatpush1.bf16.msra.mxu0 0
    %818 = vmatprep.subr.bf16.mxu0 0
    %819 = vmatpush1.bf16.msra.mxu0 0
    %820 = vmatprep.subr.bf16.mxu0 0
    %821 = vmatpush1.bf16.msra.mxu0 0
    %822 = vmatprep.subr.bf16.mxu0 0
    %823 = vmatpush1.bf16.msra.mxu0 0
    %824 = vmatprep.subr.bf16.mxu0 0
    %825 = vmatpush1.bf16.msra.mxu0 0
    %826 = vmatprep.subr.bf16.mxu0 0
    %827 = vmatpush1.bf16.msra.mxu0 0
    %828 = vmatprep.subr.bf16.mxu0 0
    %829 = vmatpush1.bf16.msra.mxu0 0
    %830 = vmatprep.subr.bf16.mxu0 0
    %831 = vmatpush1.bf16.msra.mxu0 0
    %832 = vmatprep.subr.bf16.mxu0 0
    %833 = vmatpush1.bf16.msra.mxu0 0
    %834 = vmatprep.mubr.bf16.mxu0 0
    %835 = vmatmul.mubr.bf16.gmra.mrb[0].mxu0 %v373
    %v836 = vpop.f32.mrb[0].mxu0
    %v837 = vadd.f32 0.0, %v836
    %v838 = vpop.f32.mrb[0].mxu0
    %v839 = vadd.f32 0.0, %v838
    %v840 = vpop.f32.mrb[0].mxu0
    %v841 = vadd.f32 0.0, %v840
    %v842 = vpop.f32.mrb[0].mxu0
    %v843 = vadd.f32 0.0, %v842
    %844 = vmatprep.mubr.bf16.mxu0 0
    %845 = vmatmul.mubr.bf16.gmra.mrb[0].mxu0 %v376
    %v846 = vpop.f32.mrb[0].mxu0
    %v847 = vadd.f32 0.0, %v846
    %v848 = vpop.f32.mrb[0].mxu0
    %v849 = vadd.f32 0.0, %v848
    %v850 = vpop.f32.mrb[0].mxu0
    %v851 = vadd.f32 0.0, %v850
    %v852 = vpop.f32.mrb[0].mxu0
    %v853 = vadd.f32 0.0, %v852
    %854 = vdwg.mxu0
    %855 = vmatprep.subr.bf16.mxu0 %v274
    %856 = vmatpush1.bf16.msra.mxu0 %v273
    %857 = vmatprep.subr.bf16.mxu0 %v303
    %858 = vmatpush1.bf16.msra.mxu0 %v302
    %859 = vmatprep.subr.bf16.mxu0 0
    %860 = vmatpush1.bf16.msra.mxu0 0
    %861 = vmatprep.subr.bf16.mxu0 0
    %862 = vmatpush1.bf16.msra.mxu0 0
    %863 = vmatprep.subr.bf16.mxu0 0
    %864 = vmatpush1.bf16.msra.mxu0 0
    %865 = vmatprep.subr.bf16.mxu0 0
    %866 = vmatpush1.bf16.msra.mxu0 0
    %867 = vmatprep.subr.bf16.mxu0 0
    %868 = vmatpush1.bf16.msra.mxu0 0
    %869 = vmatprep.subr.bf16.mxu0 0
    %870 = vmatpush1.bf16.msra.mxu0 0
    %871 = vmatprep.subr.bf16.mxu0 0
    %872 = vmatpush1.bf16.msra.mxu0 0
    %873 = vmatprep.subr.bf16.mxu0 0
    %874 = vmatpush1.bf16.msra.mxu0 0
    %875 = vmatprep.subr.bf16.mxu0 0
    %876 = vmatpush1.bf16.msra.mxu0 0
    %877 = vmatprep.subr.bf16.mxu0 0
    %878 = vmatpush1.bf16.msra.mxu0 0
    %879 = vmatprep.subr.bf16.mxu0 0
    %880 = vmatpush1.bf16.msra.mxu0 0
    %881 = vmatprep.subr.bf16.mxu0 0
    %882 = vmatpush1.bf16.msra.mxu0 0
    %883 = vmatprep.subr.bf16.mxu0 0
    %884 = vmatpush1.bf16.msra.mxu0 0
    %885 = vmatprep.subr.bf16.mxu0 0
    %886 = vmatpush1.bf16.msra.mxu0 0
    %887 = vmatprep.mubr.bf16.mxu0 0
    %888 = vmatmul.mubr.bf16.gmra.mrb[0].mxu0 %v373
    %v889 = vpop.f32.mrb[0].mxu0
    %v890 = vadd.f32 0.0, %v889
    %v891 = vpop.f32.mrb[0].mxu0
    %v892 = vadd.f32 0.0, %v891
    %v893 = vpop.f32.mrb[0].mxu0
    %v894 = vadd.f32 0.0, %v893
    %v895 = vpop.f32.mrb[0].mxu0
    %v896 = vadd.f32 0.0, %v895
    %897 = vmatprep.mubr.bf16.mxu0 0
    %898 = vmatmul.mubr.bf16.gmra.mrb[0].mxu0 %v376
    %v899 = vpop.f32.mrb[0].mxu0
    %v900 = vadd.f32 0.0, %v899
    %v901 = vpop.f32.mrb[0].mxu0
    %v902 = vadd.f32 0.0, %v901
    %v903 = vpop.f32.mrb[0].mxu0
    %v904 = vadd.f32 0.0, %v903
    %v905 = vpop.f32.mrb[0].mxu0
    %v906 = vadd.f32 0.0, %v905
    %907 = vdwg.mxu0
    %908 = vmatprep.subr.bf16.mxu0 %v276
    %909 = vmatpush1.bf16.msra.mxu0 %v275
    %910 = vmatprep.subr.bf16.mxu0 %v305
    %911 = vmatpush1.bf16.msra.mxu0 %v304
    %912 = vmatprep.subr.bf16.mxu0 0
    %913 = vmatpush1.bf16.msra.mxu0 0
    %914 = vmatprep.subr.bf16.mxu0 0
    %915 = vmatpush1.bf16.msra.mxu0 0
    %916 = vmatprep.subr.bf16.mxu0 0
    %917 = vmatpush1.bf16.msra.mxu0 0
    %918 = vmatprep.subr.bf16.mxu0 0
    %919 = vmatpush1.bf16.msra.mxu0 0
    %920 = vmatprep.subr.bf16.mxu0 0
    %921 = vmatpush1.bf16.msra.mxu0 0
    %922 = vmatprep.subr.bf16.mxu0 0
    %923 = vmatpush1.bf16.msra.mxu0 0
    %924 = vmatprep.subr.bf16.mxu0 0
    %925 = vmatpush1.bf16.msra.mxu0 0
    %926 = vmatprep.subr.bf16.mxu0 0
    %927 = vmatpush1.bf16.msra.mxu0 0
    %928 = vmatprep.subr.bf16.mxu0 0
    %929 = vmatpush1.bf16.msra.mxu0 0
    %930 = vmatprep.subr.bf16.mxu0 0
    %931 = vmatpush1.bf16.msra.mxu0 0
    %932 = vmatprep.subr.bf16.mxu0 0
    %933 = vmatpush1.bf16.msra.mxu0 0
    %934 = vmatprep.subr.bf16.mxu0 0
    %935 = vmatpush1.bf16.msra.mxu0 0
    %936 = vmatprep.subr.bf16.mxu0 0
    %937 = vmatpush1.bf16.msra.mxu0 0
    %938 = vmatprep.subr.bf16.mxu0 0
    %939 = vmatpush1.bf16.msra.mxu0 0
    %940 = vmatprep.mubr.bf16.mxu0 0
    %941 = vmatmul.mubr.bf16.gmra.mrb[0].mxu0 %v373
    %v942 = vpop.f32.mrb[0].mxu0
    %v943 = vadd.f32 0.0, %v942
    %v944 = vpop.f32.mrb[0].mxu0
    %v945 = vadd.f32 0.0, %v944
    %v946 = vpop.f32.mrb[0].mxu0
    %v947 = vadd.f32 0.0, %v946
    %v948 = vpop.f32.mrb[0].mxu0
    %v949 = vadd.f32 0.0, %v948
    %950 = vmatprep.mubr.bf16.mxu0 0
    %951 = vmatmul.mubr.bf16.gmra.mrb[0].mxu0 %v376
    %v952 = vpop.f32.mrb[0].mxu0
    %v953 = vadd.f32 0.0, %v952
    %v954 = vpop.f32.mrb[0].mxu0
    %v955 = vadd.f32 0.0, %v954
    %v956 = vpop.f32.mrb[0].mxu0
    %v957 = vadd.f32 0.0, %v956
    %v958 = vpop.f32.mrb[0].mxu0
    %v959 = vadd.f32 0.0, %v958
    %960 = vdwg.mxu0
    %961 = vmatprep.subr.bf16.mxu0 %v278
    %962 = vmatpush1.bf16.msra.mxu0 %v277
    %963 = vmatprep.subr.bf16.mxu0 %v307
    %964 = vmatpush1.bf16.msra.mxu0 %v306
    %965 = vmatprep.subr.bf16.mxu0 0
    %966 = vmatpush1.bf16.msra.mxu0 0
    %967 = vmatprep.subr.bf16.mxu0 0
    %968 = vmatpush1.bf16.msra.mxu0 0
    %969 = vmatprep.subr.bf16.mxu0 0
    %970 = vmatpush1.bf16.msra.mxu0 0
    %971 = vmatprep.subr.bf16.mxu0 0
    %972 = vmatpush1.bf16.msra.mxu0 0
    %973 = vmatprep.subr.bf16.mxu0 0
    %974 = vmatpush1.bf16.msra.mxu0 0
    %975 = vmatprep.subr.bf16.mxu0 0
    %976 = vmatpush1.bf16.msra.mxu0 0
    %977 = vmatprep.subr.bf16.mxu0 0
    %978 = vmatpush1.bf16.msra.mxu0 0
    %979 = vmatprep.subr.bf16.mxu0 0
    %980 = vmatpush1.bf16.msra.mxu0 0
    %981 = vmatprep.subr.bf16.mxu0 0
    %982 = vmatpush1.bf16.msra.mxu0 0
    %983 = vmatprep.subr.bf16.mxu0 0
    %984 = vmatpush1.bf16.msra.mxu0 0
    %985 = vmatprep.subr.bf16.mxu0 0
    %986 = vmatpush1.bf16.msra.mxu0 0
    %987 = vmatprep.subr.bf16.mxu0 0
    %988 = vmatpush1.bf16.msra.mxu0 0
    %989 = vmatprep.subr.bf16.mxu0 0
    %990 = vmatpush1.bf16.msra.mxu0 0
    %991 = vmatprep.subr.bf16.mxu0 0
    %992 = vmatpush1.bf16.msra.mxu0 0
    %993 = vmatprep.mubr.bf16.mxu0 0
    %994 = vmatmul.mubr.bf16.gmra.mrb[0].mxu0 %v373
    %v995 = vpop.f32.mrb[0].mxu0
    %v996 = vadd.f32 0.0, %v995
    %v997 = vpop.f32.mrb[0].mxu0
    %v998 = vadd.f32 0.0, %v997
    %v999 = vpop.f32.mrb[0].mxu0
    %v1000 = vadd.f32 0.0, %v999
    %v1001 = vpop.f32.mrb[0].mxu0
    %v1002 = vadd.f32 0.0, %v1001
    %1003 = vmatprep.mubr.bf16.mxu0 0
    %1004 = vmatmul.mubr.bf16.gmra.mrb[0].mxu0 %v376
    %v1005 = vpop.f32.mrb[0].mxu0
    %v1006 = vadd.f32 0.0, %v1005
    %v1007 = vpop.f32.mrb[0].mxu0
    %v1008 = vadd.f32 0.0, %v1007
    %v1009 = vpop.f32.mrb[0].mxu0
    %v1010 = vadd.f32 0.0, %v1009
    %v1011 = vpop.f32.mrb[0].mxu0
    %v1012 = vadd.f32 0.0, %v1011
    %1013 = vdwg.mxu0
    %1014 = vmatprep.subr.bf16.mxu0 %v280
    %1015 = vmatpush1.bf16.msra.mxu0 %v279
    %1016 = vmatprep.subr.bf16.mxu0 %v309
    %1017 = vmatpush1.bf16.msra.mxu0 %v308
    %1018 = vmatprep.subr.bf16.mxu0 0
    %1019 = vmatpush1.bf16.msra.mxu0 0
    %1020 = vmatprep.subr.bf16.mxu0 0
    %1021 = vmatpush1.bf16.msra.mxu0 0
    %1022 = vmatprep.subr.bf16.mxu0 0
    %1023 = vmatpush1.bf16.msra.mxu0 0
    %1024 = vmatprep.subr.bf16.mxu0 0
    %1025 = vmatpush1.bf16.msra.mxu0 0
    %1026 = vmatprep.subr.bf16.mxu0 0
    %1027 = vmatpush1.bf16.msra.mxu0 0
    %1028 = vmatprep.subr.bf16.mxu0 0
    %1029 = vmatpush1.bf16.msra.mxu0 0
    %1030 = vmatprep.subr.bf16.mxu0 0
    %1031 = vmatpush1.bf16.msra.mxu0 0
    %1032 = vmatprep.subr.bf16.mxu0 0
    %1033 = vmatpush1.bf16.msra.mxu0 0
    %1034 = vmatprep.subr.bf16.mxu0 0
    %1035 = vmatpush1.bf16.msra.mxu0 0
    %1036 = vmatprep.subr.bf16.mxu0 0
    %1037 = vmatpush1.bf16.msra.mxu0 0
    %1038 = vmatprep.subr.bf16.mxu0 0
    %1039 = vmatpush1.bf16.msra.mxu0 0
    %1040 = vmatprep.subr.bf16.mxu0 0
    %1041 = vmatpush1.bf16.msra.mxu0 0
    %1042 = vmatprep.subr.bf16.mxu0 0
    %1043 = vmatpush1.bf16.msra.mxu0 0
    %1044 = vmatprep.subr.bf16.mxu0 0
    %1045 = vmatpush1.bf16.msra.mxu0 0
    %1046 = vmatprep.mubr.bf16.mxu0 0
    %1047 = vmatmul.mubr.bf16.gmra.mrb[0].mxu0 %v373
    %v1048 = vpop.f32.mrb[0].mxu0
    %v1049 = vadd.f32 0.0, %v1048
    %v1050 = vpop.f32.mrb[0].mxu0
    %v1051 = vadd.f32 0.0, %v1050
    %v1052 = vpop.f32.mrb[0].mxu0
    %v1053 = vadd.f32 0.0, %v1052
    %v1054 = vpop.f32.mrb[0].mxu0
    %v1055 = vadd.f32 0.0, %v1054
    %1056 = vmatprep.mubr.bf16.mxu0 0
    %1057 = vmatmul.mubr.bf16.gmra.mrb[0].mxu0 %v376
    %v1058 = vpop.f32.mrb[0].mxu0
    %v1059 = vadd.f32 0.0, %v1058
    %v1060 = vpop.f32.mrb[0].mxu0
    %v1061 = vadd.f32 0.0, %v1060
    %v1062 = vpop.f32.mrb[0].mxu0
    %v1063 = vadd.f32 0.0, %v1062
    %v1064 = vpop.f32.mrb[0].mxu0
    %v1065 = vadd.f32 0.0, %v1064
    %1066 = vdwg.mxu0
    %1067 = vmatprep.subr.bf16.mxu0 %v282
    %1068 = vmatpush1.bf16.msra.mxu0 %v281
    %1069 = vmatprep.subr.bf16.mxu0 %v311
    %1070 = vmatpush1.bf16.msra.mxu0 %v310
    %1071 = vmatprep.subr.bf16.mxu0 0
    %1072 = vmatpush1.bf16.msra.mxu0 0
    %1073 = vmatprep.subr.bf16.mxu0 0
    %1074 = vmatpush1.bf16.msra.mxu0 0
    %1075 = vmatprep.subr.bf16.mxu0 0
    %1076 = vmatpush1.bf16.msra.mxu0 0
    %1077 = vmatprep.subr.bf16.mxu0 0
    %1078 = vmatpush1.bf16.msra.mxu0 0
    %1079 = vmatprep.subr.bf16.mxu0 0
    %1080 = vmatpush1.bf16.msra.mxu0 0
    %1081 = vmatprep.subr.bf16.mxu0 0
    %1082 = vmatpush1.bf16.msra.mxu0 0
    %1083 = vmatprep.subr.bf16.mxu0 0
    %1084 = vmatpush1.bf16.msra.mxu0 0
    %1085 = vmatprep.subr.bf16.mxu0 0
    %1086 = vmatpush1.bf16.msra.mxu0 0
    %1087 = vmatprep.subr.bf16.mxu0 0
    %1088 = vmatpush1.bf16.msra.mxu0 0
    %1089 = vmatprep.subr.bf16.mxu0 0
    %1090 = vmatpush1.bf16.msra.mxu0 0
    %1091 = vmatprep.subr.bf16.mxu0 0
    %1092 = vmatpush1.bf16.msra.mxu0 0
    %1093 = vmatprep.subr.bf16.mxu0 0
    %1094 = vmatpush1.bf16.msra.mxu0 0
    %1095 = vmatprep.subr.bf16.mxu0 0
    %1096 = vmatpush1.bf16.msra.mxu0 0
    %1097 = vmatprep.subr.bf16.mxu0 0
    %1098 = vmatpush1.bf16.msra.mxu0 0
    %1099 = vmatprep.mubr.bf16.mxu0 0
    %1100 = vmatmul.mubr.bf16.gmra.mrb[0].mxu0 %v373
    %v1101 = vpop.f32.mrb[0].mxu0
    %v1102 = vadd.f32 0.0, %v1101
    %v1103 = vpop.f32.mrb[0].mxu0
    %v1104 = vadd.f32 0.0, %v1103
    %v1105 = vpop.f32.mrb[0].mxu0
    %v1106 = vadd.f32 0.0, %v1105
    %v1107 = vpop.f32.mrb[0].mxu0
    %v1108 = vadd.f32 0.0, %v1107
    %1109 = vmatprep.mubr.bf16.mxu0 0
    %1110 = vmatmul.mubr.bf16.gmra.mrb[0].mxu0 %v376
    %v1111 = vpop.f32.mrb[0].mxu0
    %v1112 = vadd.f32 0.0, %v1111
    %v1113 = vpop.f32.mrb[0].mxu0
    %v1114 = vadd.f32 0.0, %v1113
    %v1115 = vpop.f32.mrb[0].mxu0
    %v1116 = vadd.f32 0.0, %v1115
    %v1117 = vpop.f32.mrb[0].mxu0
    %v1118 = vadd.f32 0.0, %v1117
    %1119 = vdwg.mxu0
    %1120 = vmatprep.subr.bf16.mxu0 0
    %1121 = vmatpush1.bf16.msra.mxu0 %v283
    %1122 = vmatprep.subr.bf16.mxu0 0
    %1123 = vmatpush1.bf16.msra.mxu0 %v312
    %1124 = vmatprep.subr.bf16.mxu0 0
    %1125 = vmatpush1.bf16.msra.mxu0 0
    %1126 = vmatprep.subr.bf16.mxu0 0
    %1127 = vmatpush1.bf16.msra.mxu0 0
    %1128 = vmatprep.subr.bf16.mxu0 0
    %1129 = vmatpush1.bf16.msra.mxu0 0
    %1130 = vmatprep.subr.bf16.mxu0 0
    %1131 = vmatpush1.bf16.msra.mxu0 0
    %1132 = vmatprep.subr.bf16.mxu0 0
    %1133 = vmatpush1.bf16.msra.mxu0 0
    %1134 = vmatprep.subr.bf16.mxu0 0
    %1135 = vmatpush1.bf16.msra.mxu0 0
    %1136 = vmatprep.subr.bf16.mxu0 0
    %1137 = vmatpush1.bf16.msra.mxu0 0
    %1138 = vmatprep.subr.bf16.mxu0 0
    %1139 = vmatpush1.bf16.msra.mxu0 0
    %1140 = vmatprep.subr.bf16.mxu0 0
    %1141 = vmatpush1.bf16.msra.mxu0 0
    %1142 = vmatprep.subr.bf16.mxu0 0
    %1143 = vmatpush1.bf16.msra.mxu0 0
    %1144 = vmatprep.subr.bf16.mxu0 0
    %1145 = vmatpush1.bf16.msra.mxu0 0
    %1146 = vmatprep.subr.bf16.mxu0 0
    %1147 = vmatpush1.bf16.msra.mxu0 0
    %1148 = vmatprep.subr.bf16.mxu0 0
    %1149 = vmatpush1.bf16.msra.mxu0 0
    %1150 = vmatprep.subr.bf16.mxu0 0
    %1151 = vmatpush1.bf16.msra.mxu0 0
    %1152 = vmatprep.mubr.bf16.mxu0 0
    %1153 = vmatmul.mubr.bf16.gmra.mrb[0].mxu0 %v373
    %v1154 = vpop.f32.mrb[0].mxu0
    %v1155 = vadd.f32 0.0, %v1154
    %v1156 = vpop.f32.mrb[0].mxu0
    %v1157 = vpop.f32.mrb[0].mxu0
    %v1158 = vadd.f32 0.0, %v1157
    %v1159 = vpop.f32.mrb[0].mxu0
    %1160 = vmatprep.mubr.bf16.mxu0 0
    %1161 = vmatmul.mubr.bf16.gmra.mrb[0].mxu0 %v376
    %v1162 = vpop.f32.mrb[0].mxu0
    %v1163 = vadd.f32 0.0, %v1162
    %v1164 = vpop.f32.mrb[0].mxu0
    %v1165 = vpop.f32.mrb[0].mxu0
    %v1166 = vadd.f32 0.0, %v1165
    %v1167 = vpop.f32.mrb[0].mxu0
    %1168 = vdwg.mxu0
    %v1169 = vmax.f32 %v413, 0.0
    %v1170 = vmax.f32 %v415, 0.0
    %v1171 = vmax.f32 %v466, 0.0
    %v1172 = vmax.f32 %v468, 0.0
    %v1173 = vmax.f32 %v519, 0.0
    %v1174 = vmax.f32 %v521, 0.0
    %v1175 = vmax.f32 %v572, 0.0
    %v1176 = vmax.f32 %v574, 0.0
    %v1177 = vmax.f32 %v625, 0.0
    %v1178 = vmax.f32 %v627, 0.0
    %v1179 = vmax.f32 %v678, 0.0
    %v1180 = vmax.f32 %v680, 0.0
    %v1181 = vmax.f32 %v731, 0.0
    %v1182 = vmax.f32 %v733, 0.0
    %v1183 = vmax.f32 %v784, 0.0
    %v1184 = vmax.f32 %v786, 0.0
    %v1185 = vmax.f32 %v837, 0.0
    %v1186 = vmax.f32 %v839, 0.0
    %v1187 = vmax.f32 %v890, 0.0
    %v1188 = vmax.f32 %v892, 0.0
    %v1189 = vmax.f32 %v943, 0.0
    %v1190 = vmax.f32 %v945, 0.0
    %v1191 = vmax.f32 %v996, 0.0
    %v1192 = vmax.f32 %v998, 0.0
    %v1193 = vmax.f32 %v1049, 0.0
    %v1194 = vmax.f32 %v1051, 0.0
    %v1195 = vmax.f32 %v1102, 0.0
    %v1196 = vmax.f32 %v1104, 0.0
    %v1197 = vmax.f32 %v1155, 0.0
    %v1198 = vmax.f32 %v417, 0.0
    %v1199 = vmax.f32 %v419, 0.0
    %v1200 = vmax.f32 %v470, 0.0
    %v1201 = vmax.f32 %v472, 0.0
    %v1202 = vmax.f32 %v523, 0.0
    %v1203 = vmax.f32 %v525, 0.0
    %v1204 = vmax.f32 %v576, 0.0
    %v1205 = vmax.f32 %v578, 0.0
    %v1206 = vmax.f32 %v629, 0.0
    %v1207 = vmax.f32 %v631, 0.0
    %v1208 = vmax.f32 %v682, 0.0
    %v1209 = vmax.f32 %v684, 0.0
    %v1210 = vmax.f32 %v735, 0.0
    %v1211 = vmax.f32 %v737, 0.0
    %v1212 = vmax.f32 %v788, 0.0
    %v1213 = vmax.f32 %v790, 0.0
    %v1214 = vmax.f32 %v841, 0.0
    %v1215 = vmax.f32 %v843, 0.0
    %v1216 = vmax.f32 %v894, 0.0
    %v1217 = vmax.f32 %v896, 0.0
    %v1218 = vmax.f32 %v947, 0.0
    %v1219 = vmax.f32 %v949, 0.0
    %v1220 = vmax.f32 %v1000, 0.0
    %v1221 = vmax.f32 %v1002, 0.0
    %v1222 = vmax.f32 %v1053, 0.0
    %v1223 = vmax.f32 %v1055, 0.0
    %v1224 = vmax.f32 %v1106, 0.0
    %v1225 = vmax.f32 %v1108, 0.0
    %v1226 = vmax.f32 %v1158, 0.0
    %v1227 = vmax.f32 %v423, 0.0
    %v1228 = vmax.f32 %v425, 0.0
    %v1229 = vmax.f32 %v476, 0.0
    %v1230 = vmax.f32 %v478, 0.0
    %v1231 = vmax.f32 %v529, 0.0
    %v1232 = vmax.f32 %v531, 0.0
    %v1233 = vmax.f32 %v582, 0.0
    %v1234 = vmax.f32 %v584, 0.0
    %v1235 = vmax.f32 %v635, 0.0
    %v1236 = vmax.f32 %v637, 0.0
    %v1237 = vmax.f32 %v688, 0.0
    %v1238 = vmax.f32 %v690, 0.0
    %v1239 = vmax.f32 %v741, 0.0
    %v1240 = vmax.f32 %v743, 0.0
    %v1241 = vmax.f32 %v794, 0.0
    %v1242 = vmax.f32 %v796, 0.0
    %v1243 = vmax.f32 %v847, 0.0
    %v1244 = vmax.f32 %v849, 0.0
    %v1245 = vmax.f32 %v900, 0.0
    %v1246 = vmax.f32 %v902, 0.0
    %v1247 = vmax.f32 %v953, 0.0
    %v1248 = vmax.f32 %v955, 0.0
    %v1249 = vmax.f32 %v1006, 0.0
    %v1250 = vmax.f32 %v1008, 0.0
    %v1251 = vmax.f32 %v1059, 0.0
    %v1252 = vmax.f32 %v1061, 0.0
    %v1253 = vmax.f32 %v1112, 0.0
    %v1254 = vmax.f32 %v1114, 0.0
    %v1255 = vmax.f32 %v1163, 0.0
    %v1256 = vmax.f32 %v427, 0.0
    %v1257 = vmax.f32 %v429, 0.0
    %v1258 = vmax.f32 %v480, 0.0
    %v1259 = vmax.f32 %v482, 0.0
    %v1260 = vmax.f32 %v533, 0.0
    %v1261 = vmax.f32 %v535, 0.0
    %v1262 = vmax.f32 %v586, 0.0
    %v1263 = vmax.f32 %v588, 0.0
    %v1264 = vmax.f32 %v639, 0.0
    %v1265 = vmax.f32 %v641, 0.0
    %v1266 = vmax.f32 %v692, 0.0
    %v1267 = vmax.f32 %v694, 0.0
    %v1268 = vmax.f32 %v745, 0.0
    %v1269 = vmax.f32 %v747, 0.0
    %v1270 = vmax.f32 %v798, 0.0
    %v1271 = vmax.f32 %v800, 0.0
    %v1272 = vmax.f32 %v851, 0.0
    %v1273 = vmax.f32 %v853, 0.0
    %v1274 = vmax.f32 %v904, 0.0
    %v1275 = vmax.f32 %v906, 0.0
    %v1276 = vmax.f32 %v957, 0.0
    %v1277 = vmax.f32 %v959, 0.0
    %v1278 = vmax.f32 %v1010, 0.0
    %v1279 = vmax.f32 %v1012, 0.0
    %v1280 = vmax.f32 %v1063, 0.0
    %v1281 = vmax.f32 %v1065, 0.0
    %v1282 = vmax.f32 %v1116, 0.0
    %v1283 = vmax.f32 %v1118, 0.0
    %v1284 = vmax.f32 %v1166, 0.0
    %v1285 = vadd.f32 %v1169, %v1170
    %v1286 = vadd.f32 %v1285, %v1171
    %v1287 = vadd.f32 %v1286, %v1172
    %v1288 = vadd.f32 %v1287, %v1173
    %v1289 = vadd.f32 %v1288, %v1174
    %v1290 = vadd.f32 %v1289, %v1175
    %v1291 = vadd.f32 %v1290, %v1176
    %v1292 = vadd.f32 %v1291, %v1177
    %v1293 = vadd.f32 %v1292, %v1178
    %v1294 = vadd.f32 %v1293, %v1179
    %v1295 = vadd.f32 %v1294, %v1180
    %v1296 = vadd.f32 %v1295, %v1181
    %v1297 = vadd.f32 %v1296, %v1182
    %v1298 = vadd.f32 %v1297, %v1183
    %v1299 = vadd.f32 %v1298, %v1184
    %v1300 = vadd.f32 %v1299, %v1185
    %v1301 = vadd.f32 %v1300, %v1186
    %v1302 = vadd.f32 %v1301, %v1187
    %v1303 = vadd.f32 %v1302, %v1188
    %v1304 = vadd.f32 %v1303, %v1189
    %v1305 = vadd.f32 %v1304, %v1190
    %v1306 = vadd.f32 %v1305, %v1191
    %v1307 = vadd.f32 %v1306, %v1192
    %v1308 = vadd.f32 %v1307, %v1193
    %v1309 = vadd.f32 %v1308, %v1194
    %v1310 = vadd.f32 %v1309, %v1195
    %v1311 = vadd.f32 %v1310, %v1196
    %vm1312 = vcmask 130048
    %v1313 = vsel %vm1312, %v1197, 0.0
    %v1314 = vadd.f32 %v1311, %v1313
    %1315 = vadd.xlane.f32.xlu0 %v1314
    %v1316 = vpop.xlane.xlu0 %1315
    %v1317 = vadd.f32 %v1198, %v1199
    %v1318 = vadd.f32 %v1317, %v1200
    %v1319 = vadd.f32 %v1318, %v1201
    %v1320 = vadd.f32 %v1319, %v1202
    %v1321 = vadd.f32 %v1320, %v1203
    %v1322 = vadd.f32 %v1321, %v1204
    %v1323 = vadd.f32 %v1322, %v1205
    %v1324 = vadd.f32 %v1323, %v1206
    %v1325 = vadd.f32 %v1324, %v1207
    %v1326 = vadd.f32 %v1325, %v1208
    %v1327 = vadd.f32 %v1326, %v1209
    %v1328 = vadd.f32 %v1327, %v1210
    %v1329 = vadd.f32 %v1328, %v1211
    %v1330 = vadd.f32 %v1329, %v1212
    %v1331 = vadd.f32 %v1330, %v1213
    %v1332 = vadd.f32 %v1331, %v1214
    %v1333 = vadd.f32 %v1332, %v1215
    %v1334 = vadd.f32 %v1333, %v1216
    %v1335 = vadd.f32 %v1334, %v1217
    %v1336 = vadd.f32 %v1335, %v1218
    %v1337 = vadd.f32 %v1336, %v1219
    %v1338 = vadd.f32 %v1337, %v1220
    %v1339 = vadd.f32 %v1338, %v1221
    %v1340 = vadd.f32 %v1339, %v1222
    %v1341 = vadd.f32 %v1340, %v1223
    %v1342 = vadd.f32 %v1341, %v1224
    %v1343 = vadd.f32 %v1342, %v1225
    %v1344 = vsel %vm1312, %v1226, 0.0
    %v1345 = vadd.f32 %v1343, %v1344
    %1346 = vadd.xlane.f32.xlu0 %v1345
    %v1347 = vpop.xlane.xlu0 %1346
    %v1348 = vadd.f32 %v1227, %v1228
    %v1349 = vadd.f32 %v1348, %v1229
    %v1350 = vadd.f32 %v1349, %v1230
    %v1351 = vadd.f32 %v1350, %v1231
    %v1352 = vadd.f32 %v1351, %v1232
    %v1353 = vadd.f32 %v1352, %v1233
    %v1354 = vadd.f32 %v1353, %v1234
    %v1355 = vadd.f32 %v1354, %v1235
    %v1356 = vadd.f32 %v1355, %v1236
    %v1357 = vadd.f32 %v1356, %v1237
    %v1358 = vadd.f32 %v1357, %v1238
    %v1359 = vadd.f32 %v1358, %v1239
    %v1360 = vadd.f32 %v1359, %v1240
    %v1361 = vadd.f32 %v1360, %v1241
    %v1362 = vadd.f32 %v1361, %v1242
    %v1363 = vadd.f32 %v1362, %v1243
    %v1364 = vadd.f32 %v1363, %v1244
    %v1365 = vadd.f32 %v1364, %v1245
    %v1366 = vadd.f32 %v1365, %v1246
    %v1367 = vadd.f32 %v1366, %v1247
    %v1368 = vadd.f32 %v1367, %v1248
    %v1369 = vadd.f32 %v1368, %v1249
    %v1370 = vadd.f32 %v1369, %v1250
    %v1371 = vadd.f32 %v1370, %v1251
    %v1372 = vadd.f32 %v1371, %v1252
    %v1373 = vadd.f32 %v1372, %v1253
    %v1374 = vadd.f32 %v1373, %v1254
    %v1375 = vsel %vm1312, %v1255, 0.0
    %v1376 = vadd.f32 %v1374, %v1375
    %1377 = vadd.xlane.f32.xlu0 %v1376
    %v1378 = vpop.xlane.xlu0 %1377
    %v1379 = vadd.f32 %v1256, %v1257
    %v1380 = vadd.f32 %v1379, %v1258
    %v1381 = vadd.f32 %v1380, %v1259
    %v1382 = vadd.f32 %v1381, %v1260
    %v1383 = vadd.f32 %v1382, %v1261
    %v1384 = vadd.f32 %v1383, %v1262
    %v1385 = vadd.f32 %v1384, %v1263
    %v1386 = vadd.f32 %v1385, %v1264
    %v1387 = vadd.f32 %v1386, %v1265
    %v1388 = vadd.f32 %v1387, %v1266
    %v1389 = vadd.f32 %v1388, %v1267
    %v1390 = vadd.f32 %v1389, %v1268
    %v1391 = vadd.f32 %v1390, %v1269
    %v1392 = vadd.f32 %v1391, %v1270
    %v1393 = vadd.f32 %v1392, %v1271
    %v1394 = vadd.f32 %v1393, %v1272
    %v1395 = vadd.f32 %v1394, %v1273
    %v1396 = vadd.f32 %v1395, %v1274
    %v1397 = vadd.f32 %v1396, %v1275
    %v1398 = vadd.f32 %v1397, %v1276
    %v1399 = vadd.f32 %v1398, %v1277
    %v1400 = vadd.f32 %v1399, %v1278
    %v1401 = vadd.f32 %v1400, %v1279
    %v1402 = vadd.f32 %v1401, %v1280
    %v1403 = vadd.f32 %v1402, %v1281
    %v1404 = vadd.f32 %v1403, %v1282
    %v1405 = vadd.f32 %v1404, %v1283
    %v1406 = vsel %vm1312, %v1284, 0.0
    %v1407 = vadd.f32 %v1405, %v1406
    %1408 = vadd.xlane.f32.xlu0 %v1407
    %v1409 = vpop.xlane.xlu0 %1408
    %v1410 = vld [vmem:[%s1 + $0x20] sm:$0xff]
    %v1411 = vld [vmem:[%s1 + $0x28] sm:$0xff]
    %v1412 = vld [vmem:[%s1 + $0x30] sm:$0xff]
    %v1413 = vld [vmem:[%s1 + $0x38] sm:$0xff]
    %v1414 = vld [vmem:[%s1 + $0x40] sm:$0x1]
    %v1415 = vmul.f32 %v1316, %v1410
    %v1416 = vmul.f32 %v1347, %v1411
    %v1417 = vmul.f32 %v1378, %v1412
    %v1418 = vmul.f32 %v1409, %v1413
    %vm1419 = vcmask 506880
    %v1420 = vsel %vm1419, %v1415, 0.0
    %v1421 = vsel %vm1419, %v1416, 0.0
    %v1422 = vadd.f32 %v1420, %v1421
    %v1423 = vsel %vm1419, %v1417, 0.0
    %v1424 = vadd.f32 %v1422, %v1423
    %v1425 = vsel %vm1419, %v1418, 0.0
    %v1426 = vadd.f32 %v1424, %v1425
    %v1427 = vrot.slane %v1426, 4
    %v1428 = vadd.f32 %v1426, %v1427
    %v1429 = vrot.slane %v1428, 2
    %v1430 = vadd.f32 %v1428, %v1429
    %v1431 = vrot.slane %v1430, 1
    %v1432 = vadd.f32 %v1430, %v1431
    %v1433 = vadd.f32 %v1432, %v1414
    %v1434 = vld [vmem:[%s1 + $0x48] sm:$0x7]
    %v1435 = vld [vmem:[%s1 + $0x50] sm:$0xff]
    %v1436 = vld [vmem:[%s1 + $0x58] sm:$0xff]
    %v1437 = vld [vmem:[%s1 + $0x60] sm:$0xff]
    %v1438 = vld [vmem:[%s1 + $0x68] sm:$0xff]
    %v1439 = vld [vmem:[%s1 + $0x70] sm:$0xff]
    %v1440 = vld [vmem:[%s1 + $0x78] sm:$0xff]
    %v1441 = vld [vmem:[%s1 + $0x80] sm:$0xff]
    %v1442 = vld [vmem:[%s1 + $0x88] sm:$0x3f]
    %v1443 = vlaneseq
    %v1444 = vshrl.u32 %v1443, 7
    %v1445 = vsub.s32 0, %v1444
    %v1446 = vrot.slane %v1433, %v1445
    %v1447 = vmul.f32 %v1434, %v1446
    %v1449 = vsel %vm1419, %v1447, 0
    %vm1451 = vcmask 1045504
    %v1453 = vsel %vm1451, %v1442, 0
    %1455 = vmatprep.subr.mxu0 0.0
    %v1456 = vand.u32 %v1435, 4294901760
    %1457 = vmatpush1.msra.mxu0 %v1456
    %1458 = vmatprep.subr.mxu0 0.0
    %v1459 = vand.u32 %v1436, 4294901760
    %1460 = vmatpush1.msra.mxu0 %v1459
    %1461 = vmatprep.subr.mxu0 0.0
    %v1462 = vand.u32 %v1437, 4294901760
    %1463 = vmatpush1.msra.mxu0 %v1462
    %1464 = vmatprep.subr.mxu0 0.0
    %v1465 = vand.u32 %v1438, 4294901760
    %1466 = vmatpush1.msra.mxu0 %v1465
    %1467 = vmatprep.subr.mxu0 0.0
    %v1468 = vand.u32 %v1439, 4294901760
    %1469 = vmatpush1.msra.mxu0 %v1468
    %1470 = vmatprep.subr.mxu0 0.0
    %v1471 = vand.u32 %v1440, 4294901760
    %1472 = vmatpush1.msra.mxu0 %v1471
    %1473 = vmatprep.subr.mxu0 0.0
    %v1474 = vand.u32 %v1441, 4294901760
    %1475 = vmatpush1.msra.mxu0 %v1474
    %1476 = vmatprep.subr.mxu0 0.0
    %v1477 = vand.u32 %v1453, 4294901760
    %1478 = vmatpush1.msra.mxu0 %v1477
    %1479 = vmatprep.subr.mxu0 0.0
    %1480 = vmatpush1.msra.mxu0 0.0
    %1481 = vmatprep.subr.mxu0 0.0
    %1482 = vmatpush1.msra.mxu0 0.0
    %1483 = vmatprep.subr.mxu0 0.0
    %1484 = vmatpush1.msra.mxu0 0.0
    %1485 = vmatprep.subr.mxu0 0.0
    %1486 = vmatpush1.msra.mxu0 0.0
    %1487 = vmatprep.subr.mxu0 0.0
    %1488 = vmatpush1.msra.mxu0 0.0
    %1489 = vmatprep.subr.mxu0 0.0
    %1490 = vmatpush1.msra.mxu0 0.0
    %1491 = vmatprep.subr.mxu0 0.0
    %1492 = vmatpush1.msra.mxu0 0.0
    %1493 = vmatprep.subr.mxu0 0.0
    %1494 = vmatpush1.msra.mxu0 0.0
    %1495 = vmatprep.subr.mxu0 0.0
    %1496 = vmatpush1.msra.mxu0 0.0
    %1497 = vmatprep.subr.mxu0 0.0
    %1498 = vmatpush1.msra.mxu0 0.0
    %1499 = vmatprep.subr.mxu0 0.0
    %1500 = vmatpush1.msra.mxu0 0.0
    %1501 = vmatprep.subr.mxu0 0.0
    %1502 = vmatpush1.msra.mxu0 0.0
    %1503 = vmatprep.subr.mxu0 0.0
    %1504 = vmatpush1.msra.mxu0 0.0
    %1505 = vmatprep.subr.mxu0 0.0
    %1506 = vmatpush1.msra.mxu0 0.0
    %1507 = vmatprep.subr.mxu0 0.0
    %1508 = vmatpush1.msra.mxu0 0.0
    %1509 = vmatprep.subr.mxu0 0.0
    %1510 = vmatpush1.msra.mxu0 0.0
    %1511 = vmatprep.subr.mxu0 0.0
    %1512 = vmatpush1.msra.mxu0 0.0
    %1513 = vmatprep.subr.mxu0 0.0
    %1514 = vmatpush1.msra.mxu0 0.0
    %1515 = vmatprep.subr.mxu0 0.0
    %1516 = vmatpush1.msra.mxu0 0.0
    %1517 = vmatprep.subr.mxu0 0.0
    %1518 = vmatpush1.msra.mxu0 0.0
    %1519 = vmatprep.subr.mxu0 0.0
    %1520 = vmatpush1.msra.mxu0 0.0
    %1521 = vmatprep.subr.mxu0 0.0
    %1522 = vmatpush1.msra.mxu0 0.0
    %1523 = vmatprep.subr.mxu0 0.0
    %1524 = vmatpush1.msra.mxu0 0.0
    %1525 = vmatprep.subr.mxu0 0.0
    %1526 = vmatpush1.msra.mxu0 0.0
    %1527 = vmatprep.mubr.f32.mxu0 0.0
    %v1528 = vand.u32 %v1449, 4294901760
    %v1529 = vsub.f32 %v1449, %v1528
    %v1530 = vand.u32 %v1529, 4294901760
    %v1531 = vsub.f32 %v1529, %v1530
    %v1532 = vand.u32 %v1531, 4294901760
    %1533 = vmatmul.mubr.f32.gmra.mrb[0].mxu0 %v1532
    %v1534 = vpop.f32.mrb[0].mxu0
    %v1535 = vadd.f32 0.0, %v1534
    %v1536 = vpop.f32.mrb[0].mxu0
    %1537 = vdwg.mxu0
    %1538 = vmatprep.subr.mxu0 0.0
    %v1539 = vand.u32 %v1435, 4294901760
    %v1540 = vsub.f32 %v1435, %v1539
    %v1541 = vand.u32 %v1540, 4294901760
    %v1542 = vsub.f32 %v1540, %v1541
    %v1543 = vand.u32 %v1542, 4294901760
    %1544 = vmatpush1.msra.mxu0 %v1543
    %1545 = vmatprep.subr.mxu0 0.0
    %v1546 = vand.u32 %v1436, 4294901760
    %v1547 = vsub.f32 %v1436, %v1546
    %v1548 = vand.u32 %v1547, 4294901760
    %v1549 = vsub.f32 %v1547, %v1548
    %v1550 = vand.u32 %v1549, 4294901760
    %1551 = vmatpush1.msra.mxu0 %v1550
    %1552 = vmatprep.subr.mxu0 0.0
    %v1553 = vand.u32 %v1437, 4294901760
    %v1554 = vsub.f32 %v1437, %v1553
    %v1555 = vand.u32 %v1554, 4294901760
    %v1556 = vsub.f32 %v1554, %v1555
    %v1557 = vand.u32 %v1556, 4294901760
    %1558 = vmatpush1.msra.mxu0 %v1557
    %1559 = vmatprep.subr.mxu0 0.0
    %v1560 = vand.u32 %v1438, 4294901760
    %v1561 = vsub.f32 %v1438, %v1560
    %v1562 = vand.u32 %v1561, 4294901760
    %v1563 = vsub.f32 %v1561, %v1562
    %v1564 = vand.u32 %v1563, 4294901760
    %1565 = vmatpush1.msra.mxu0 %v1564
    %1566 = vmatprep.subr.mxu0 0.0
    %v1567 = vand.u32 %v1439, 4294901760
    %v1568 = vsub.f32 %v1439, %v1567
    %v1569 = vand.u32 %v1568, 4294901760
    %v1570 = vsub.f32 %v1568, %v1569
    %v1571 = vand.u32 %v1570, 4294901760
    %1572 = vmatpush1.msra.mxu0 %v1571
    %1573 = vmatprep.subr.mxu0 0.0
    %v1574 = vand.u32 %v1440, 4294901760
    %v1575 = vsub.f32 %v1440, %v1574
    %v1576 = vand.u32 %v1575, 4294901760
    %v1577 = vsub.f32 %v1575, %v1576
    %v1578 = vand.u32 %v1577, 4294901760
    %1579 = vmatpush1.msra.mxu0 %v1578
    %1580 = vmatprep.subr.mxu0 0.0
    %v1581 = vand.u32 %v1441, 4294901760
    %v1582 = vsub.f32 %v1441, %v1581
    %v1583 = vand.u32 %v1582, 4294901760
    %v1584 = vsub.f32 %v1582, %v1583
    %v1585 = vand.u32 %v1584, 4294901760
    %1586 = vmatpush1.msra.mxu0 %v1585
    %1587 = vmatprep.subr.mxu0 0.0
    %v1588 = vand.u32 %v1453, 4294901760
    %v1589 = vsub.f32 %v1453, %v1588
    %v1590 = vand.u32 %v1589, 4294901760
    %v1591 = vsub.f32 %v1589, %v1590
    %v1592 = vand.u32 %v1591, 4294901760
    %1593 = vmatpush1.msra.mxu0 %v1592
    %1594 = vmatprep.subr.mxu0 0.0
    %1595 = vmatpush1.msra.mxu0 0.0
    %1596 = vmatprep.subr.mxu0 0.0
    %1597 = vmatpush1.msra.mxu0 0.0
    %1598 = vmatprep.subr.mxu0 0.0
    %1599 = vmatpush1.msra.mxu0 0.0
    %1600 = vmatprep.subr.mxu0 0.0
    %1601 = vmatpush1.msra.mxu0 0.0
    %1602 = vmatprep.subr.mxu0 0.0
    %1603 = vmatpush1.msra.mxu0 0.0
    %1604 = vmatprep.subr.mxu0 0.0
    %1605 = vmatpush1.msra.mxu0 0.0
    %1606 = vmatprep.subr.mxu0 0.0
    %1607 = vmatpush1.msra.mxu0 0.0
    %1608 = vmatprep.subr.mxu0 0.0
    %1609 = vmatpush1.msra.mxu0 0.0
    %1610 = vmatprep.subr.mxu0 0.0
    %1611 = vmatpush1.msra.mxu0 0.0
    %1612 = vmatprep.subr.mxu0 0.0
    %1613 = vmatpush1.msra.mxu0 0.0
    %1614 = vmatprep.subr.mxu0 0.0
    %1615 = vmatpush1.msra.mxu0 0.0
    %1616 = vmatprep.subr.mxu0 0.0
    %1617 = vmatpush1.msra.mxu0 0.0
    %1618 = vmatprep.subr.mxu0 0.0
    %1619 = vmatpush1.msra.mxu0 0.0
    %1620 = vmatprep.subr.mxu0 0.0
    %1621 = vmatpush1.msra.mxu0 0.0
    %1622 = vmatprep.subr.mxu0 0.0
    %1623 = vmatpush1.msra.mxu0 0.0
    %1624 = vmatprep.subr.mxu0 0.0
    %1625 = vmatpush1.msra.mxu0 0.0
    %1626 = vmatprep.subr.mxu0 0.0
    %1627 = vmatpush1.msra.mxu0 0.0
    %1628 = vmatprep.subr.mxu0 0.0
    %1629 = vmatpush1.msra.mxu0 0.0
    %1630 = vmatprep.subr.mxu0 0.0
    %1631 = vmatpush1.msra.mxu0 0.0
    %1632 = vmatprep.subr.mxu0 0.0
    %1633 = vmatpush1.msra.mxu0 0.0
    %1634 = vmatprep.subr.mxu0 0.0
    %1635 = vmatpush1.msra.mxu0 0.0
    %1636 = vmatprep.subr.mxu0 0.0
    %1637 = vmatpush1.msra.mxu0 0.0
    %1638 = vmatprep.subr.mxu0 0.0
    %1639 = vmatpush1.msra.mxu0 0.0
    %1640 = vmatprep.subr.mxu0 0.0
    %1641 = vmatpush1.msra.mxu0 0.0
    %1642 = vmatprep.mubr.f32.mxu0 0.0
    %v1643 = vand.u32 %v1449, 4294901760
    %1644 = vmatmul.mubr.f32.gmra.mrb[0].mxu0 %v1643
    %v1645 = vpop.f32.mrb[0].mxu0
    %v1646 = vadd.f32 %v1535, %v1645
    %v1647 = vpop.f32.mrb[0].mxu0
    %1648 = vdwg.mxu0
    %1649 = vmatprep.subr.mxu0 0.0
    %v1650 = vand.u32 %v1435, 4294901760
    %v1651 = vsub.f32 %v1435, %v1650
    %1652 = vmatpush1.msra.mxu0 %v1651
    %1653 = vmatprep.subr.mxu0 0.0
    %v1654 = vand.u32 %v1436, 4294901760
    %v1655 = vsub.f32 %v1436, %v1654
    %1656 = vmatpush1.msra.mxu0 %v1655
    %1657 = vmatprep.subr.mxu0 0.0
    %v1658 = vand.u32 %v1437, 4294901760
    %v1659 = vsub.f32 %v1437, %v1658
    %1660 = vmatpush1.msra.mxu0 %v1659
    %1661 = vmatprep.subr.mxu0 0.0
    %v1662 = vand.u32 %v1438, 4294901760
    %v1663 = vsub.f32 %v1438, %v1662
    %1664 = vmatpush1.msra.mxu0 %v1663
    %1665 = vmatprep.subr.mxu0 0.0
    %v1666 = vand.u32 %v1439, 4294901760
    %v1667 = vsub.f32 %v1439, %v1666
    %1668 = vmatpush1.msra.mxu0 %v1667
    %1669 = vmatprep.subr.mxu0 0.0
    %v1670 = vand.u32 %v1440, 4294901760
    %v1671 = vsub.f32 %v1440, %v1670
    %1672 = vmatpush1.msra.mxu0 %v1671
    %1673 = vmatprep.subr.mxu0 0.0
    %v1674 = vand.u32 %v1441, 4294901760
    %v1675 = vsub.f32 %v1441, %v1674
    %1676 = vmatpush1.msra.mxu0 %v1675
    %1677 = vmatprep.subr.mxu0 0.0
    %v1678 = vand.u32 %v1453, 4294901760
    %v1679 = vsub.f32 %v1453, %v1678
    %1680 = vmatpush1.msra.mxu0 %v1679
    %1681 = vmatprep.subr.mxu0 0.0
    %1682 = vmatpush1.msra.mxu0 0.0
    %1683 = vmatprep.subr.mxu0 0.0
    %1684 = vmatpush1.msra.mxu0 0.0
    %1685 = vmatprep.subr.mxu0 0.0
    %1686 = vmatpush1.msra.mxu0 0.0
    %1687 = vmatprep.subr.mxu0 0.0
    %1688 = vmatpush1.msra.mxu0 0.0
    %1689 = vmatprep.subr.mxu0 0.0
    %1690 = vmatpush1.msra.mxu0 0.0
    %1691 = vmatprep.subr.mxu0 0.0
    %1692 = vmatpush1.msra.mxu0 0.0
    %1693 = vmatprep.subr.mxu0 0.0
    %1694 = vmatpush1.msra.mxu0 0.0
    %1695 = vmatprep.subr.mxu0 0.0
    %1696 = vmatpush1.msra.mxu0 0.0
    %1697 = vmatprep.subr.mxu0 0.0
    %1698 = vmatpush1.msra.mxu0 0.0
    %1699 = vmatprep.subr.mxu0 0.0
    %1700 = vmatpush1.msra.mxu0 0.0
    %1701 = vmatprep.subr.mxu0 0.0
    %1702 = vmatpush1.msra.mxu0 0.0
    %1703 = vmatprep.subr.mxu0 0.0
    %1704 = vmatpush1.msra.mxu0 0.0
    %1705 = vmatprep.subr.mxu0 0.0
    %1706 = vmatpush1.msra.mxu0 0.0
    %1707 = vmatprep.subr.mxu0 0.0
    %1708 = vmatpush1.msra.mxu0 0.0
    %1709 = vmatprep.subr.mxu0 0.0
    %1710 = vmatpush1.msra.mxu0 0.0
    %1711 = vmatprep.subr.mxu0 0.0
    %1712 = vmatpush1.msra.mxu0 0.0
    %1713 = vmatprep.subr.mxu0 0.0
    %1714 = vmatpush1.msra.mxu0 0.0
    %1715 = vmatprep.subr.mxu0 0.0
    %1716 = vmatpush1.msra.mxu0 0.0
    %1717 = vmatprep.subr.mxu0 0.0
    %1718 = vmatpush1.msra.mxu0 0.0
    %1719 = vmatprep.subr.mxu0 0.0
    %1720 = vmatpush1.msra.mxu0 0.0
    %1721 = vmatprep.subr.mxu0 0.0
    %1722 = vmatpush1.msra.mxu0 0.0
    %1723 = vmatprep.subr.mxu0 0.0
    %1724 = vmatpush1.msra.mxu0 0.0
    %1725 = vmatprep.subr.mxu0 0.0
    %1726 = vmatpush1.msra.mxu0 0.0
    %1727 = vmatprep.subr.mxu0 0.0
    %1728 = vmatpush1.msra.mxu0 0.0
    %1729 = vmatprep.mubr.f32.mxu0 0.0
    %v1730 = vand.u32 %v1449, 4294901760
    %v1731 = vsub.f32 %v1449, %v1730
    %1732 = vmatmul.mubr.f32.gmra.mrb[0].mxu0 %v1731
    %v1733 = vpop.f32.mrb[0].mxu0
    %v1734 = vadd.f32 %v1646, %v1733
    %v1735 = vpop.f32.mrb[0].mxu0
    %1736 = vdwg.mxu0
    %1737 = vmatprep.subr.mxu0 0.0
    %v1738 = vand.u32 %v1435, 4294901760
    %1739 = vmatpush1.msra.mxu0 %v1738
    %1740 = vmatprep.subr.mxu0 0.0
    %v1741 = vand.u32 %v1436, 4294901760
    %1742 = vmatpush1.msra.mxu0 %v1741
    %1743 = vmatprep.subr.mxu0 0.0
    %v1744 = vand.u32 %v1437, 4294901760
    %1745 = vmatpush1.msra.mxu0 %v1744
    %1746 = vmatprep.subr.mxu0 0.0
    %v1747 = vand.u32 %v1438, 4294901760
    %1748 = vmatpush1.msra.mxu0 %v1747
    %1749 = vmatprep.subr.mxu0 0.0
    %v1750 = vand.u32 %v1439, 4294901760
    %1751 = vmatpush1.msra.mxu0 %v1750
    %1752 = vmatprep.subr.mxu0 0.0
    %v1753 = vand.u32 %v1440, 4294901760
    %1754 = vmatpush1.msra.mxu0 %v1753
    %1755 = vmatprep.subr.mxu0 0.0
    %v1756 = vand.u32 %v1441, 4294901760
    %1757 = vmatpush1.msra.mxu0 %v1756
    %1758 = vmatprep.subr.mxu0 0.0
    %v1759 = vand.u32 %v1453, 4294901760
    %1760 = vmatpush1.msra.mxu0 %v1759
    %1761 = vmatprep.subr.mxu0 0.0
    %1762 = vmatpush1.msra.mxu0 0.0
    %1763 = vmatprep.subr.mxu0 0.0
    %1764 = vmatpush1.msra.mxu0 0.0
    %1765 = vmatprep.subr.mxu0 0.0
    %1766 = vmatpush1.msra.mxu0 0.0
    %1767 = vmatprep.subr.mxu0 0.0
    %1768 = vmatpush1.msra.mxu0 0.0
    %1769 = vmatprep.subr.mxu0 0.0
    %1770 = vmatpush1.msra.mxu0 0.0
    %1771 = vmatprep.subr.mxu0 0.0
    %1772 = vmatpush1.msra.mxu0 0.0
    %1773 = vmatprep.subr.mxu0 0.0
    %1774 = vmatpush1.msra.mxu0 0.0
    %1775 = vmatprep.subr.mxu0 0.0
    %1776 = vmatpush1.msra.mxu0 0.0
    %1777 = vmatprep.subr.mxu0 0.0
    %1778 = vmatpush1.msra.mxu0 0.0
    %1779 = vmatprep.subr.mxu0 0.0
    %1780 = vmatpush1.msra.mxu0 0.0
    %1781 = vmatprep.subr.mxu0 0.0
    %1782 = vmatpush1.msra.mxu0 0.0
    %1783 = vmatprep.subr.mxu0 0.0
    %1784 = vmatpush1.msra.mxu0 0.0
    %1785 = vmatprep.subr.mxu0 0.0
    %1786 = vmatpush1.msra.mxu0 0.0
    %1787 = vmatprep.subr.mxu0 0.0
    %1788 = vmatpush1.msra.mxu0 0.0
    %1789 = vmatprep.subr.mxu0 0.0
    %1790 = vmatpush1.msra.mxu0 0.0
    %1791 = vmatprep.subr.mxu0 0.0
    %1792 = vmatpush1.msra.mxu0 0.0
    %1793 = vmatprep.subr.mxu0 0.0
    %1794 = vmatpush1.msra.mxu0 0.0
    %1795 = vmatprep.subr.mxu0 0.0
    %1796 = vmatpush1.msra.mxu0 0.0
    %1797 = vmatprep.subr.mxu0 0.0
    %1798 = vmatpush1.msra.mxu0 0.0
    %1799 = vmatprep.subr.mxu0 0.0
    %1800 = vmatpush1.msra.mxu0 0.0
    %1801 = vmatprep.subr.mxu0 0.0
    %1802 = vmatpush1.msra.mxu0 0.0
    %1803 = vmatprep.subr.mxu0 0.0
    %1804 = vmatpush1.msra.mxu0 0.0
    %1805 = vmatprep.subr.mxu0 0.0
    %1806 = vmatpush1.msra.mxu0 0.0
    %1807 = vmatprep.subr.mxu0 0.0
    %1808 = vmatpush1.msra.mxu0 0.0
    %1809 = vmatprep.mubr.f32.mxu0 0.0
    %v1810 = vand.u32 %v1449, 4294901760
    %v1811 = vsub.f32 %v1449, %v1810
    %v1812 = vand.u32 %v1811, 4294901760
    %1813 = vmatmul.mubr.f32.gmra.mrb[0].mxu0 %v1812
    %v1814 = vpop.f32.mrb[0].mxu0
    %v1815 = vadd.f32 %v1734, %v1814
    %v1816 = vpop.f32.mrb[0].mxu0
    %1817 = vdwg.mxu0
    %1818 = vmatprep.subr.mxu0 0.0
    %v1819 = vand.u32 %v1435, 4294901760
    %v1820 = vsub.f32 %v1435, %v1819
    %v1821 = vand.u32 %v1820, 4294901760
    %1822 = vmatpush1.msra.mxu0 %v1821
    %1823 = vmatprep.subr.mxu0 0.0
    %v1824 = vand.u32 %v1436, 4294901760
    %v1825 = vsub.f32 %v1436, %v1824
    %v1826 = vand.u32 %v1825, 4294901760
    %1827 = vmatpush1.msra.mxu0 %v1826
    %1828 = vmatprep.subr.mxu0 0.0
    %v1829 = vand.u32 %v1437, 4294901760
    %v1830 = vsub.f32 %v1437, %v1829
    %v1831 = vand.u32 %v1830, 4294901760
    %1832 = vmatpush1.msra.mxu0 %v1831
    %1833 = vmatprep.subr.mxu0 0.0
    %v1834 = vand.u32 %v1438, 4294901760
    %v1835 = vsub.f32 %v1438, %v1834
    %v1836 = vand.u32 %v1835, 4294901760
    %1837 = vmatpush1.msra.mxu0 %v1836
    %1838 = vmatprep.subr.mxu0 0.0
    %v1839 = vand.u32 %v1439, 4294901760
    %v1840 = vsub.f32 %v1439, %v1839
    %v1841 = vand.u32 %v1840, 4294901760
    %1842 = vmatpush1.msra.mxu0 %v1841
    %1843 = vmatprep.subr.mxu0 0.0
    %v1844 = vand.u32 %v1440, 4294901760
    %v1845 = vsub.f32 %v1440, %v1844
    %v1846 = vand.u32 %v1845, 4294901760
    %1847 = vmatpush1.msra.mxu0 %v1846
    %1848 = vmatprep.subr.mxu0 0.0
    %v1849 = vand.u32 %v1441, 4294901760
    %v1850 = vsub.f32 %v1441, %v1849
    %v1851 = vand.u32 %v1850, 4294901760
    %1852 = vmatpush1.msra.mxu0 %v1851
    %1853 = vmatprep.subr.mxu0 0.0
    %v1854 = vand.u32 %v1453, 4294901760
    %v1855 = vsub.f32 %v1453, %v1854
    %v1856 = vand.u32 %v1855, 4294901760
    %1857 = vmatpush1.msra.mxu0 %v1856
    %1858 = vmatprep.subr.mxu0 0.0
    %1859 = vmatpush1.msra.mxu0 0.0
    %1860 = vmatprep.subr.mxu0 0.0
    %1861 = vmatpush1.msra.mxu0 0.0
    %1862 = vmatprep.subr.mxu0 0.0
    %1863 = vmatpush1.msra.mxu0 0.0
    %1864 = vmatprep.subr.mxu0 0.0
    %1865 = vmatpush1.msra.mxu0 0.0
    %1866 = vmatprep.subr.mxu0 0.0
    %1867 = vmatpush1.msra.mxu0 0.0
    %1868 = vmatprep.subr.mxu0 0.0
    %1869 = vmatpush1.msra.mxu0 0.0
    %1870 = vmatprep.subr.mxu0 0.0
    %1871 = vmatpush1.msra.mxu0 0.0
    %1872 = vmatprep.subr.mxu0 0.0
    %1873 = vmatpush1.msra.mxu0 0.0
    %1874 = vmatprep.subr.mxu0 0.0
    %1875 = vmatpush1.msra.mxu0 0.0
    %1876 = vmatprep.subr.mxu0 0.0
    %1877 = vmatpush1.msra.mxu0 0.0
    %1878 = vmatprep.subr.mxu0 0.0
    %1879 = vmatpush1.msra.mxu0 0.0
    %1880 = vmatprep.subr.mxu0 0.0
    %1881 = vmatpush1.msra.mxu0 0.0
    %1882 = vmatprep.subr.mxu0 0.0
    %1883 = vmatpush1.msra.mxu0 0.0
    %1884 = vmatprep.subr.mxu0 0.0
    %1885 = vmatpush1.msra.mxu0 0.0
    %1886 = vmatprep.subr.mxu0 0.0
    %1887 = vmatpush1.msra.mxu0 0.0
    %1888 = vmatprep.subr.mxu0 0.0
    %1889 = vmatpush1.msra.mxu0 0.0
    %1890 = vmatprep.subr.mxu0 0.0
    %1891 = vmatpush1.msra.mxu0 0.0
    %1892 = vmatprep.subr.mxu0 0.0
    %1893 = vmatpush1.msra.mxu0 0.0
    %1894 = vmatprep.subr.mxu0 0.0
    %1895 = vmatpush1.msra.mxu0 0.0
    %1896 = vmatprep.subr.mxu0 0.0
    %1897 = vmatpush1.msra.mxu0 0.0
    %1898 = vmatprep.subr.mxu0 0.0
    %1899 = vmatpush1.msra.mxu0 0.0
    %1900 = vmatprep.subr.mxu0 0.0
    %1901 = vmatpush1.msra.mxu0 0.0
    %1902 = vmatprep.subr.mxu0 0.0
    %1903 = vmatpush1.msra.mxu0 0.0
    %1904 = vmatprep.subr.mxu0 0.0
    %1905 = vmatpush1.msra.mxu0 0.0
    %1906 = vmatprep.mubr.f32.mxu0 0.0
    %v1907 = vand.u32 %v1449, 4294901760
    %1908 = vmatmul.mubr.f32.gmra.mrb[0].mxu0 %v1907
    %v1909 = vpop.f32.mrb[0].mxu0
    %v1910 = vadd.f32 %v1815, %v1909
    %v1911 = vpop.f32.mrb[0].mxu0
    %1912 = vdwg.mxu0
    %1913 = vmatprep.subr.mxu0 0.0
    %v1914 = vand.u32 %v1435, 4294901760
    %1915 = vmatpush1.msra.mxu0 %v1914
    %1916 = vmatprep.subr.mxu0 0.0
    %v1917 = vand.u32 %v1436, 4294901760
    %1918 = vmatpush1.msra.mxu0 %v1917
    %1919 = vmatprep.subr.mxu0 0.0
    %v1920 = vand.u32 %v1437, 4294901760
    %1921 = vmatpush1.msra.mxu0 %v1920
    %1922 = vmatprep.subr.mxu0 0.0
    %v1923 = vand.u32 %v1438, 4294901760
    %1924 = vmatpush1.msra.mxu0 %v1923
    %1925 = vmatprep.subr.mxu0 0.0
    %v1926 = vand.u32 %v1439, 4294901760
    %1927 = vmatpush1.msra.mxu0 %v1926
    %1928 = vmatprep.subr.mxu0 0.0
    %v1929 = vand.u32 %v1440, 4294901760
    %1930 = vmatpush1.msra.mxu0 %v1929
    %1931 = vmatprep.subr.mxu0 0.0
    %v1932 = vand.u32 %v1441, 4294901760
    %1933 = vmatpush1.msra.mxu0 %v1932
    %1934 = vmatprep.subr.mxu0 0.0
    %v1935 = vand.u32 %v1453, 4294901760
    %1936 = vmatpush1.msra.mxu0 %v1935
    %1937 = vmatprep.subr.mxu0 0.0
    %1938 = vmatpush1.msra.mxu0 0.0
    %1939 = vmatprep.subr.mxu0 0.0
    %1940 = vmatpush1.msra.mxu0 0.0
    %1941 = vmatprep.subr.mxu0 0.0
    %1942 = vmatpush1.msra.mxu0 0.0
    %1943 = vmatprep.subr.mxu0 0.0
    %1944 = vmatpush1.msra.mxu0 0.0
    %1945 = vmatprep.subr.mxu0 0.0
    %1946 = vmatpush1.msra.mxu0 0.0
    %1947 = vmatprep.subr.mxu0 0.0
    %1948 = vmatpush1.msra.mxu0 0.0
    %1949 = vmatprep.subr.mxu0 0.0
    %1950 = vmatpush1.msra.mxu0 0.0
    %1951 = vmatprep.subr.mxu0 0.0
    %1952 = vmatpush1.msra.mxu0 0.0
    %1953 = vmatprep.subr.mxu0 0.0
    %1954 = vmatpush1.msra.mxu0 0.0
    %1955 = vmatprep.subr.mxu0 0.0
    %1956 = vmatpush1.msra.mxu0 0.0
    %1957 = vmatprep.subr.mxu0 0.0
    %1958 = vmatpush1.msra.mxu0 0.0
    %1959 = vmatprep.subr.mxu0 0.0
    %1960 = vmatpush1.msra.mxu0 0.0
    %1961 = vmatprep.subr.mxu0 0.0
    %1962 = vmatpush1.msra.mxu0 0.0
    %1963 = vmatprep.subr.mxu0 0.0
    %1964 = vmatpush1.msra.mxu0 0.0
    %1965 = vmatprep.subr.mxu0 0.0
    %1966 = vmatpush1.msra.mxu0 0.0
    %1967 = vmatprep.subr.mxu0 0.0
    %1968 = vmatpush1.msra.mxu0 0.0
    %1969 = vmatprep.subr.mxu0 0.0
    %1970 = vmatpush1.msra.mxu0 0.0
    %1971 = vmatprep.subr.mxu0 0.0
    %1972 = vmatpush1.msra.mxu0 0.0
    %1973 = vmatprep.subr.mxu0 0.0
    %1974 = vmatpush1.msra.mxu0 0.0
    %1975 = vmatprep.subr.mxu0 0.0
    %1976 = vmatpush1.msra.mxu0 0.0
    %1977 = vmatprep.subr.mxu0 0.0
    %1978 = vmatpush1.msra.mxu0 0.0
    %1979 = vmatprep.subr.mxu0 0.0
    %1980 = vmatpush1.msra.mxu0 0.0
    %1981 = vmatprep.subr.mxu0 0.0
    %1982 = vmatpush1.msra.mxu0 0.0
    %1983 = vmatprep.subr.mxu0 0.0
    %1984 = vmatpush1.msra.mxu0 0.0
    %1985 = vmatprep.mubr.f32.mxu0 0.0
    %v1986 = vand.u32 %v1449, 4294901760
    %1987 = vmatmul.mubr.f32.gmra.mrb[0].mxu0 %v1986
    %v1988 = vpop.f32.mrb[0].mxu0
    %v1989 = vadd.f32 %v1910, %v1988
    %v1990 = vpop.f32.mrb[0].mxu0
    %1991 = vdwg.mxu0
    %v1992 = vld [vmem:[%s1 + $0x90] sm:$0x7]
    %v1993 = vld [vmem:[%s1 + $0x98] sm:$0xff]
    %v1994 = vld [vmem:[%s1 + $0xa0] sm:$0xff]
    %v1995 = vld [vmem:[%s1 + $0xa8] sm:$0xff]
    %v1996 = vld [vmem:[%s1 + $0xb0] sm:$0xff]
    %v1997 = vld [vmem:[%s1 + $0xb8] sm:$0xff]
    %v1998 = vld [vmem:[%s1 + $0xc0] sm:$0xff]
    %v1999 = vld [vmem:[%s1 + $0xc8] sm:$0xff]
    %v2000 = vld [vmem:[%s1 + $0xd0] sm:$0x3f]
    %v2002 = vsel %vm1419, %v1433, 0
    %v2005 = vsel %vm1451, %v2000, 0
    %2007 = vmatprep.subr.mxu0 0.0
    %v2008 = vand.u32 %v1993, 4294901760
    %2009 = vmatpush1.msra.mxu0 %v2008
    %2010 = vmatprep.subr.mxu0 0.0
    %v2011 = vand.u32 %v1994, 4294901760
    %2012 = vmatpush1.msra.mxu0 %v2011
    %2013 = vmatprep.subr.mxu0 0.0
    %v2014 = vand.u32 %v1995, 4294901760
    %2015 = vmatpush1.msra.mxu0 %v2014
    %2016 = vmatprep.subr.mxu0 0.0
    %v2017 = vand.u32 %v1996, 4294901760
    %2018 = vmatpush1.msra.mxu0 %v2017
    %2019 = vmatprep.subr.mxu0 0.0
    %v2020 = vand.u32 %v1997, 4294901760
    %2021 = vmatpush1.msra.mxu0 %v2020
    %2022 = vmatprep.subr.mxu0 0.0
    %v2023 = vand.u32 %v1998, 4294901760
    %2024 = vmatpush1.msra.mxu0 %v2023
    %2025 = vmatprep.subr.mxu0 0.0
    %v2026 = vand.u32 %v1999, 4294901760
    %2027 = vmatpush1.msra.mxu0 %v2026
    %2028 = vmatprep.subr.mxu0 0.0
    %v2029 = vand.u32 %v2005, 4294901760
    %2030 = vmatpush1.msra.mxu0 %v2029
    %2031 = vmatprep.subr.mxu0 0.0
    %2032 = vmatpush1.msra.mxu0 0.0
    %2033 = vmatprep.subr.mxu0 0.0
    %2034 = vmatpush1.msra.mxu0 0.0
    %2035 = vmatprep.subr.mxu0 0.0
    %2036 = vmatpush1.msra.mxu0 0.0
    %2037 = vmatprep.subr.mxu0 0.0
    %2038 = vmatpush1.msra.mxu0 0.0
    %2039 = vmatprep.subr.mxu0 0.0
    %2040 = vmatpush1.msra.mxu0 0.0
    %2041 = vmatprep.subr.mxu0 0.0
    %2042 = vmatpush1.msra.mxu0 0.0
    %2043 = vmatprep.subr.mxu0 0.0
    %2044 = vmatpush1.msra.mxu0 0.0
    %2045 = vmatprep.subr.mxu0 0.0
    %2046 = vmatpush1.msra.mxu0 0.0
    %2047 = vmatprep.subr.mxu0 0.0
    %2048 = vmatpush1.msra.mxu0 0.0
    %2049 = vmatprep.subr.mxu0 0.0
    %2050 = vmatpush1.msra.mxu0 0.0
    %2051 = vmatprep.subr.mxu0 0.0
    %2052 = vmatpush1.msra.mxu0 0.0
    %2053 = vmatprep.subr.mxu0 0.0
    %2054 = vmatpush1.msra.mxu0 0.0
    %2055 = vmatprep.subr.mxu0 0.0
    %2056 = vmatpush1.msra.mxu0 0.0
    %2057 = vmatprep.subr.mxu0 0.0
    %2058 = vmatpush1.msra.mxu0 0.0
    %2059 = vmatprep.subr.mxu0 0.0
    %2060 = vmatpush1.msra.mxu0 0.0
    %2061 = vmatprep.subr.mxu0 0.0
    %2062 = vmatpush1.msra.mxu0 0.0
    %2063 = vmatprep.subr.mxu0 0.0
    %2064 = vmatpush1.msra.mxu0 0.0
    %2065 = vmatprep.subr.mxu0 0.0
    %2066 = vmatpush1.msra.mxu0 0.0
    %2067 = vmatprep.subr.mxu0 0.0
    %2068 = vmatpush1.msra.mxu0 0.0
    %2069 = vmatprep.subr.mxu0 0.0
    %2070 = vmatpush1.msra.mxu0 0.0
    %2071 = vmatprep.subr.mxu0 0.0
    %2072 = vmatpush1.msra.mxu0 0.0
    %2073 = vmatprep.subr.mxu0 0.0
    %2074 = vmatpush1.msra.mxu0 0.0
    %2075 = vmatprep.subr.mxu0 0.0
    %2076 = vmatpush1.msra.mxu0 0.0
    %2077 = vmatprep.subr.mxu0 0.0
    %2078 = vmatpush1.msra.mxu0 0.0
    %2079 = vmatprep.mubr.f32.mxu0 0.0
    %v2080 = vand.u32 %v2002, 4294901760
    %v2081 = vsub.f32 %v2002, %v2080
    %v2082 = vand.u32 %v2081, 4294901760
    %v2083 = vsub.f32 %v2081, %v2082
    %v2084 = vand.u32 %v2083, 4294901760
    %2085 = vmatmul.mubr.f32.gmra.mrb[0].mxu0 %v2084
    %v2086 = vpop.f32.mrb[0].mxu0
    %v2087 = vadd.f32 0.0, %v2086
    %v2088 = vpop.f32.mrb[0].mxu0
    %2089 = vdwg.mxu0
    %2090 = vmatprep.subr.mxu0 0.0
    %v2091 = vand.u32 %v1993, 4294901760
    %v2092 = vsub.f32 %v1993, %v2091
    %v2093 = vand.u32 %v2092, 4294901760
    %v2094 = vsub.f32 %v2092, %v2093
    %v2095 = vand.u32 %v2094, 4294901760
    %2096 = vmatpush1.msra.mxu0 %v2095
    %2097 = vmatprep.subr.mxu0 0.0
    %v2098 = vand.u32 %v1994, 4294901760
    %v2099 = vsub.f32 %v1994, %v2098
    %v2100 = vand.u32 %v2099, 4294901760
    %v2101 = vsub.f32 %v2099, %v2100
    %v2102 = vand.u32 %v2101, 4294901760
    %2103 = vmatpush1.msra.mxu0 %v2102
    %2104 = vmatprep.subr.mxu0 0.0
    %v2105 = vand.u32 %v1995, 4294901760
    %v2106 = vsub.f32 %v1995, %v2105
    %v2107 = vand.u32 %v2106, 4294901760
    %v2108 = vsub.f32 %v2106, %v2107
    %v2109 = vand.u32 %v2108, 4294901760
    %2110 = vmatpush1.msra.mxu0 %v2109
    %2111 = vmatprep.subr.mxu0 0.0
    %v2112 = vand.u32 %v1996, 4294901760
    %v2113 = vsub.f32 %v1996, %v2112
    %v2114 = vand.u32 %v2113, 4294901760
    %v2115 = vsub.f32 %v2113, %v2114
    %v2116 = vand.u32 %v2115, 4294901760
    %2117 = vmatpush1.msra.mxu0 %v2116
    %2118 = vmatprep.subr.mxu0 0.0
    %v2119 = vand.u32 %v1997, 4294901760
    %v2120 = vsub.f32 %v1997, %v2119
    %v2121 = vand.u32 %v2120, 4294901760
    %v2122 = vsub.f32 %v2120, %v2121
    %v2123 = vand.u32 %v2122, 4294901760
    %2124 = vmatpush1.msra.mxu0 %v2123
    %2125 = vmatprep.subr.mxu0 0.0
    %v2126 = vand.u32 %v1998, 4294901760
    %v2127 = vsub.f32 %v1998, %v2126
    %v2128 = vand.u32 %v2127, 4294901760
    %v2129 = vsub.f32 %v2127, %v2128
    %v2130 = vand.u32 %v2129, 4294901760
    %2131 = vmatpush1.msra.mxu0 %v2130
    %2132 = vmatprep.subr.mxu0 0.0
    %v2133 = vand.u32 %v1999, 4294901760
    %v2134 = vsub.f32 %v1999, %v2133
    %v2135 = vand.u32 %v2134, 4294901760
    %v2136 = vsub.f32 %v2134, %v2135
    %v2137 = vand.u32 %v2136, 4294901760
    %2138 = vmatpush1.msra.mxu0 %v2137
    %2139 = vmatprep.subr.mxu0 0.0
    %v2140 = vand.u32 %v2005, 4294901760
    %v2141 = vsub.f32 %v2005, %v2140
    %v2142 = vand.u32 %v2141, 4294901760
    %v2143 = vsub.f32 %v2141, %v2142
    %v2144 = vand.u32 %v2143, 4294901760
    %2145 = vmatpush1.msra.mxu0 %v2144
    %2146 = vmatprep.subr.mxu0 0.0
    %2147 = vmatpush1.msra.mxu0 0.0
    %2148 = vmatprep.subr.mxu0 0.0
    %2149 = vmatpush1.msra.mxu0 0.0
    %2150 = vmatprep.subr.mxu0 0.0
    %2151 = vmatpush1.msra.mxu0 0.0
    %2152 = vmatprep.subr.mxu0 0.0
    %2153 = vmatpush1.msra.mxu0 0.0
    %2154 = vmatprep.subr.mxu0 0.0
    %2155 = vmatpush1.msra.mxu0 0.0
    %2156 = vmatprep.subr.mxu0 0.0
    %2157 = vmatpush1.msra.mxu0 0.0
    %2158 = vmatprep.subr.mxu0 0.0
    %2159 = vmatpush1.msra.mxu0 0.0
    %2160 = vmatprep.subr.mxu0 0.0
    %2161 = vmatpush1.msra.mxu0 0.0
    %2162 = vmatprep.subr.mxu0 0.0
    %2163 = vmatpush1.msra.mxu0 0.0
    %2164 = vmatprep.subr.mxu0 0.0
    %2165 = vmatpush1.msra.mxu0 0.0
    %2166 = vmatprep.subr.mxu0 0.0
    %2167 = vmatpush1.msra.mxu0 0.0
    %2168 = vmatprep.subr.mxu0 0.0
    %2169 = vmatpush1.msra.mxu0 0.0
    %2170 = vmatprep.subr.mxu0 0.0
    %2171 = vmatpush1.msra.mxu0 0.0
    %2172 = vmatprep.subr.mxu0 0.0
    %2173 = vmatpush1.msra.mxu0 0.0
    %2174 = vmatprep.subr.mxu0 0.0
    %2175 = vmatpush1.msra.mxu0 0.0
    %2176 = vmatprep.subr.mxu0 0.0
    %2177 = vmatpush1.msra.mxu0 0.0
    %2178 = vmatprep.subr.mxu0 0.0
    %2179 = vmatpush1.msra.mxu0 0.0
    %2180 = vmatprep.subr.mxu0 0.0
    %2181 = vmatpush1.msra.mxu0 0.0
    %2182 = vmatprep.subr.mxu0 0.0
    %2183 = vmatpush1.msra.mxu0 0.0
    %2184 = vmatprep.subr.mxu0 0.0
    %2185 = vmatpush1.msra.mxu0 0.0
    %2186 = vmatprep.subr.mxu0 0.0
    %2187 = vmatpush1.msra.mxu0 0.0
    %2188 = vmatprep.subr.mxu0 0.0
    %2189 = vmatpush1.msra.mxu0 0.0
    %2190 = vmatprep.subr.mxu0 0.0
    %2191 = vmatpush1.msra.mxu0 0.0
    %2192 = vmatprep.subr.mxu0 0.0
    %2193 = vmatpush1.msra.mxu0 0.0
    %2194 = vmatprep.mubr.f32.mxu0 0.0
    %v2195 = vand.u32 %v2002, 4294901760
    %2196 = vmatmul.mubr.f32.gmra.mrb[0].mxu0 %v2195
    %v2197 = vpop.f32.mrb[0].mxu0
    %v2198 = vadd.f32 %v2087, %v2197
    %v2199 = vpop.f32.mrb[0].mxu0
    %2200 = vdwg.mxu0
    %2201 = vmatprep.subr.mxu0 0.0
    %v2202 = vand.u32 %v1993, 4294901760
    %v2203 = vsub.f32 %v1993, %v2202
    %2204 = vmatpush1.msra.mxu0 %v2203
    %2205 = vmatprep.subr.mxu0 0.0
    %v2206 = vand.u32 %v1994, 4294901760
    %v2207 = vsub.f32 %v1994, %v2206
    %2208 = vmatpush1.msra.mxu0 %v2207
    %2209 = vmatprep.subr.mxu0 0.0
    %v2210 = vand.u32 %v1995, 4294901760
    %v2211 = vsub.f32 %v1995, %v2210
    %2212 = vmatpush1.msra.mxu0 %v2211
    %2213 = vmatprep.subr.mxu0 0.0
    %v2214 = vand.u32 %v1996, 4294901760
    %v2215 = vsub.f32 %v1996, %v2214
    %2216 = vmatpush1.msra.mxu0 %v2215
    %2217 = vmatprep.subr.mxu0 0.0
    %v2218 = vand.u32 %v1997, 4294901760
    %v2219 = vsub.f32 %v1997, %v2218
    %2220 = vmatpush1.msra.mxu0 %v2219
    %2221 = vmatprep.subr.mxu0 0.0
    %v2222 = vand.u32 %v1998, 4294901760
    %v2223 = vsub.f32 %v1998, %v2222
    %2224 = vmatpush1.msra.mxu0 %v2223
    %2225 = vmatprep.subr.mxu0 0.0
    %v2226 = vand.u32 %v1999, 4294901760
    %v2227 = vsub.f32 %v1999, %v2226
    %2228 = vmatpush1.msra.mxu0 %v2227
    %2229 = vmatprep.subr.mxu0 0.0
    %v2230 = vand.u32 %v2005, 4294901760
    %v2231 = vsub.f32 %v2005, %v2230
    %2232 = vmatpush1.msra.mxu0 %v2231
    %2233 = vmatprep.subr.mxu0 0.0
    %2234 = vmatpush1.msra.mxu0 0.0
    %2235 = vmatprep.subr.mxu0 0.0
    %2236 = vmatpush1.msra.mxu0 0.0
    %2237 = vmatprep.subr.mxu0 0.0
    %2238 = vmatpush1.msra.mxu0 0.0
    %2239 = vmatprep.subr.mxu0 0.0
    %2240 = vmatpush1.msra.mxu0 0.0
    %2241 = vmatprep.subr.mxu0 0.0
    %2242 = vmatpush1.msra.mxu0 0.0
    %2243 = vmatprep.subr.mxu0 0.0
    %2244 = vmatpush1.msra.mxu0 0.0
    %2245 = vmatprep.subr.mxu0 0.0
    %2246 = vmatpush1.msra.mxu0 0.0
    %2247 = vmatprep.subr.mxu0 0.0
    %2248 = vmatpush1.msra.mxu0 0.0
    %2249 = vmatprep.subr.mxu0 0.0
    %2250 = vmatpush1.msra.mxu0 0.0
    %2251 = vmatprep.subr.mxu0 0.0
    %2252 = vmatpush1.msra.mxu0 0.0
    %2253 = vmatprep.subr.mxu0 0.0
    %2254 = vmatpush1.msra.mxu0 0.0
    %2255 = vmatprep.subr.mxu0 0.0
    %2256 = vmatpush1.msra.mxu0 0.0
    %2257 = vmatprep.subr.mxu0 0.0
    %2258 = vmatpush1.msra.mxu0 0.0
    %2259 = vmatprep.subr.mxu0 0.0
    %2260 = vmatpush1.msra.mxu0 0.0
    %2261 = vmatprep.subr.mxu0 0.0
    %2262 = vmatpush1.msra.mxu0 0.0
    %2263 = vmatprep.subr.mxu0 0.0
    %2264 = vmatpush1.msra.mxu0 0.0
    %2265 = vmatprep.subr.mxu0 0.0
    %2266 = vmatpush1.msra.mxu0 0.0
    %2267 = vmatprep.subr.mxu0 0.0
    %2268 = vmatpush1.msra.mxu0 0.0
    %2269 = vmatprep.subr.mxu0 0.0
    %2270 = vmatpush1.msra.mxu0 0.0
    %2271 = vmatprep.subr.mxu0 0.0
    %2272 = vmatpush1.msra.mxu0 0.0
    %2273 = vmatprep.subr.mxu0 0.0
    %2274 = vmatpush1.msra.mxu0 0.0
    %2275 = vmatprep.subr.mxu0 0.0
    %2276 = vmatpush1.msra.mxu0 0.0
    %2277 = vmatprep.subr.mxu0 0.0
    %2278 = vmatpush1.msra.mxu0 0.0
    %2279 = vmatprep.subr.mxu0 0.0
    %2280 = vmatpush1.msra.mxu0 0.0
    %2281 = vmatprep.mubr.f32.mxu0 0.0
    %v2282 = vand.u32 %v2002, 4294901760
    %v2283 = vsub.f32 %v2002, %v2282
    %2284 = vmatmul.mubr.f32.gmra.mrb[0].mxu0 %v2283
    %v2285 = vpop.f32.mrb[0].mxu0
    %v2286 = vadd.f32 %v2198, %v2285
    %v2287 = vpop.f32.mrb[0].mxu0
    %2288 = vdwg.mxu0
    %2289 = vmatprep.subr.mxu0 0.0
    %v2290 = vand.u32 %v1993, 4294901760
    %2291 = vmatpush1.msra.mxu0 %v2290
    %2292 = vmatprep.subr.mxu0 0.0
    %v2293 = vand.u32 %v1994, 4294901760
    %2294 = vmatpush1.msra.mxu0 %v2293
    %2295 = vmatprep.subr.mxu0 0.0
    %v2296 = vand.u32 %v1995, 4294901760
    %2297 = vmatpush1.msra.mxu0 %v2296
    %2298 = vmatprep.subr.mxu0 0.0
    %v2299 = vand.u32 %v1996, 4294901760
    %2300 = vmatpush1.msra.mxu0 %v2299
    %2301 = vmatprep.subr.mxu0 0.0
    %v2302 = vand.u32 %v1997, 4294901760
    %2303 = vmatpush1.msra.mxu0 %v2302
    %2304 = vmatprep.subr.mxu0 0.0
    %v2305 = vand.u32 %v1998, 4294901760
    %2306 = vmatpush1.msra.mxu0 %v2305
    %2307 = vmatprep.subr.mxu0 0.0
    %v2308 = vand.u32 %v1999, 4294901760
    %2309 = vmatpush1.msra.mxu0 %v2308
    %2310 = vmatprep.subr.mxu0 0.0
    %v2311 = vand.u32 %v2005, 4294901760
    %2312 = vmatpush1.msra.mxu0 %v2311
    %2313 = vmatprep.subr.mxu0 0.0
    %2314 = vmatpush1.msra.mxu0 0.0
    %2315 = vmatprep.subr.mxu0 0.0
    %2316 = vmatpush1.msra.mxu0 0.0
    %2317 = vmatprep.subr.mxu0 0.0
    %2318 = vmatpush1.msra.mxu0 0.0
    %2319 = vmatprep.subr.mxu0 0.0
    %2320 = vmatpush1.msra.mxu0 0.0
    %2321 = vmatprep.subr.mxu0 0.0
    %2322 = vmatpush1.msra.mxu0 0.0
    %2323 = vmatprep.subr.mxu0 0.0
    %2324 = vmatpush1.msra.mxu0 0.0
    %2325 = vmatprep.subr.mxu0 0.0
    %2326 = vmatpush1.msra.mxu0 0.0
    %2327 = vmatprep.subr.mxu0 0.0
    %2328 = vmatpush1.msra.mxu0 0.0
    %2329 = vmatprep.subr.mxu0 0.0
    %2330 = vmatpush1.msra.mxu0 0.0
    %2331 = vmatprep.subr.mxu0 0.0
    %2332 = vmatpush1.msra.mxu0 0.0
    %2333 = vmatprep.subr.mxu0 0.0
    %2334 = vmatpush1.msra.mxu0 0.0
    %2335 = vmatprep.subr.mxu0 0.0
    %2336 = vmatpush1.msra.mxu0 0.0
    %2337 = vmatprep.subr.mxu0 0.0
    %2338 = vmatpush1.msra.mxu0 0.0
    %2339 = vmatprep.subr.mxu0 0.0
    %2340 = vmatpush1.msra.mxu0 0.0
    %2341 = vmatprep.subr.mxu0 0.0
    %2342 = vmatpush1.msra.mxu0 0.0
    %2343 = vmatprep.subr.mxu0 0.0
    %2344 = vmatpush1.msra.mxu0 0.0
    %2345 = vmatprep.subr.mxu0 0.0
    %2346 = vmatpush1.msra.mxu0 0.0
    %2347 = vmatprep.subr.mxu0 0.0
    %2348 = vmatpush1.msra.mxu0 0.0
    %2349 = vmatprep.subr.mxu0 0.0
    %2350 = vmatpush1.msra.mxu0 0.0
    %2351 = vmatprep.subr.mxu0 0.0
    %2352 = vmatpush1.msra.mxu0 0.0
    %2353 = vmatprep.subr.mxu0 0.0
    %2354 = vmatpush1.msra.mxu0 0.0
    %2355 = vmatprep.subr.mxu0 0.0
    %2356 = vmatpush1.msra.mxu0 0.0
    %2357 = vmatprep.subr.mxu0 0.0
    %2358 = vmatpush1.msra.mxu0 0.0
    %2359 = vmatprep.subr.mxu0 0.0
    %2360 = vmatpush1.msra.mxu0 0.0
    %2361 = vmatprep.mubr.f32.mxu0 0.0
    %v2362 = vand.u32 %v2002, 4294901760
    %v2363 = vsub.f32 %v2002, %v2362
    %v2364 = vand.u32 %v2363, 4294901760
    %2365 = vmatmul.mubr.f32.gmra.mrb[0].mxu0 %v2364
    %v2366 = vpop.f32.mrb[0].mxu0
    %v2367 = vadd.f32 %v2286, %v2366
    %v2368 = vpop.f32.mrb[0].mxu0
    %2369 = vdwg.mxu0
    %2370 = vmatprep.subr.mxu0 0.0
    %v2371 = vand.u32 %v1993, 4294901760
    %v2372 = vsub.f32 %v1993, %v2371
    %v2373 = vand.u32 %v2372, 4294901760
    %2374 = vmatpush1.msra.mxu0 %v2373
    %2375 = vmatprep.subr.mxu0 0.0
    %v2376 = vand.u32 %v1994, 4294901760
    %v2377 = vsub.f32 %v1994, %v2376
    %v2378 = vand.u32 %v2377, 4294901760
    %2379 = vmatpush1.msra.mxu0 %v2378
    %2380 = vmatprep.subr.mxu0 0.0
    %v2381 = vand.u32 %v1995, 4294901760
    %v2382 = vsub.f32 %v1995, %v2381
    %v2383 = vand.u32 %v2382, 4294901760
    %2384 = vmatpush1.msra.mxu0 %v2383
    %2385 = vmatprep.subr.mxu0 0.0
    %v2386 = vand.u32 %v1996, 4294901760
    %v2387 = vsub.f32 %v1996, %v2386
    %v2388 = vand.u32 %v2387, 4294901760
    %2389 = vmatpush1.msra.mxu0 %v2388
    %2390 = vmatprep.subr.mxu0 0.0
    %v2391 = vand.u32 %v1997, 4294901760
    %v2392 = vsub.f32 %v1997, %v2391
    %v2393 = vand.u32 %v2392, 4294901760
    %2394 = vmatpush1.msra.mxu0 %v2393
    %2395 = vmatprep.subr.mxu0 0.0
    %v2396 = vand.u32 %v1998, 4294901760
    %v2397 = vsub.f32 %v1998, %v2396
    %v2398 = vand.u32 %v2397, 4294901760
    %2399 = vmatpush1.msra.mxu0 %v2398
    %2400 = vmatprep.subr.mxu0 0.0
    %v2401 = vand.u32 %v1999, 4294901760
    %v2402 = vsub.f32 %v1999, %v2401
    %v2403 = vand.u32 %v2402, 4294901760
    %2404 = vmatpush1.msra.mxu0 %v2403
    %2405 = vmatprep.subr.mxu0 0.0
    %v2406 = vand.u32 %v2005, 4294901760
    %v2407 = vsub.f32 %v2005, %v2406
    %v2408 = vand.u32 %v2407, 4294901760
    %2409 = vmatpush1.msra.mxu0 %v2408
    %2410 = vmatprep.subr.mxu0 0.0
    %2411 = vmatpush1.msra.mxu0 0.0
    %2412 = vmatprep.subr.mxu0 0.0
    %2413 = vmatpush1.msra.mxu0 0.0
    %2414 = vmatprep.subr.mxu0 0.0
    %2415 = vmatpush1.msra.mxu0 0.0
    %2416 = vmatprep.subr.mxu0 0.0
    %2417 = vmatpush1.msra.mxu0 0.0
    %2418 = vmatprep.subr.mxu0 0.0
    %2419 = vmatpush1.msra.mxu0 0.0
    %2420 = vmatprep.subr.mxu0 0.0
    %2421 = vmatpush1.msra.mxu0 0.0
    %2422 = vmatprep.subr.mxu0 0.0
    %2423 = vmatpush1.msra.mxu0 0.0
    %2424 = vmatprep.subr.mxu0 0.0
    %2425 = vmatpush1.msra.mxu0 0.0
    %2426 = vmatprep.subr.mxu0 0.0
    %2427 = vmatpush1.msra.mxu0 0.0
    %2428 = vmatprep.subr.mxu0 0.0
    %2429 = vmatpush1.msra.mxu0 0.0
    %2430 = vmatprep.subr.mxu0 0.0
    %2431 = vmatpush1.msra.mxu0 0.0
    %2432 = vmatprep.subr.mxu0 0.0
    %2433 = vmatpush1.msra.mxu0 0.0
    %2434 = vmatprep.subr.mxu0 0.0
    %2435 = vmatpush1.msra.mxu0 0.0
    %2436 = vmatprep.subr.mxu0 0.0
    %2437 = vmatpush1.msra.mxu0 0.0
    %2438 = vmatprep.subr.mxu0 0.0
    %2439 = vmatpush1.msra.mxu0 0.0
    %2440 = vmatprep.subr.mxu0 0.0
    %2441 = vmatpush1.msra.mxu0 0.0
    %2442 = vmatprep.subr.mxu0 0.0
    %2443 = vmatpush1.msra.mxu0 0.0
    %2444 = vmatprep.subr.mxu0 0.0
    %2445 = vmatpush1.msra.mxu0 0.0
    %2446 = vmatprep.subr.mxu0 0.0
    %2447 = vmatpush1.msra.mxu0 0.0
    %2448 = vmatprep.subr.mxu0 0.0
    %2449 = vmatpush1.msra.mxu0 0.0
    %2450 = vmatprep.subr.mxu0 0.0
    %2451 = vmatpush1.msra.mxu0 0.0
    %2452 = vmatprep.subr.mxu0 0.0
    %2453 = vmatpush1.msra.mxu0 0.0
    %2454 = vmatprep.subr.mxu0 0.0
    %2455 = vmatpush1.msra.mxu0 0.0
    %2456 = vmatprep.subr.mxu0 0.0
    %2457 = vmatpush1.msra.mxu0 0.0
    %2458 = vmatprep.mubr.f32.mxu0 0.0
    %v2459 = vand.u32 %v2002, 4294901760
    %2460 = vmatmul.mubr.f32.gmra.mrb[0].mxu0 %v2459
    %v2461 = vpop.f32.mrb[0].mxu0
    %v2462 = vadd.f32 %v2367, %v2461
    %v2463 = vpop.f32.mrb[0].mxu0
    %2464 = vdwg.mxu0
    %2465 = vmatprep.subr.mxu0 0.0
    %v2466 = vand.u32 %v1993, 4294901760
    %2467 = vmatpush1.msra.mxu0 %v2466
    %2468 = vmatprep.subr.mxu0 0.0
    %v2469 = vand.u32 %v1994, 4294901760
    %2470 = vmatpush1.msra.mxu0 %v2469
    %2471 = vmatprep.subr.mxu0 0.0
    %v2472 = vand.u32 %v1995, 4294901760
    %2473 = vmatpush1.msra.mxu0 %v2472
    %2474 = vmatprep.subr.mxu0 0.0
    %v2475 = vand.u32 %v1996, 4294901760
    %2476 = vmatpush1.msra.mxu0 %v2475
    %2477 = vmatprep.subr.mxu0 0.0
    %v2478 = vand.u32 %v1997, 4294901760
    %2479 = vmatpush1.msra.mxu0 %v2478
    %2480 = vmatprep.subr.mxu0 0.0
    %v2481 = vand.u32 %v1998, 4294901760
    %2482 = vmatpush1.msra.mxu0 %v2481
    %2483 = vmatprep.subr.mxu0 0.0
    %v2484 = vand.u32 %v1999, 4294901760
    %2485 = vmatpush1.msra.mxu0 %v2484
    %2486 = vmatprep.subr.mxu0 0.0
    %v2487 = vand.u32 %v2005, 4294901760
    %2488 = vmatpush1.msra.mxu0 %v2487
    %2489 = vmatprep.subr.mxu0 0.0
    %2490 = vmatpush1.msra.mxu0 0.0
    %2491 = vmatprep.subr.mxu0 0.0
    %2492 = vmatpush1.msra.mxu0 0.0
    %2493 = vmatprep.subr.mxu0 0.0
    %2494 = vmatpush1.msra.mxu0 0.0
    %2495 = vmatprep.subr.mxu0 0.0
    %2496 = vmatpush1.msra.mxu0 0.0
    %2497 = vmatprep.subr.mxu0 0.0
    %2498 = vmatpush1.msra.mxu0 0.0
    %2499 = vmatprep.subr.mxu0 0.0
    %2500 = vmatpush1.msra.mxu0 0.0
    %2501 = vmatprep.subr.mxu0 0.0
    %2502 = vmatpush1.msra.mxu0 0.0
    %2503 = vmatprep.subr.mxu0 0.0
    %2504 = vmatpush1.msra.mxu0 0.0
    %2505 = vmatprep.subr.mxu0 0.0
    %2506 = vmatpush1.msra.mxu0 0.0
    %2507 = vmatprep.subr.mxu0 0.0
    %2508 = vmatpush1.msra.mxu0 0.0
    %2509 = vmatprep.subr.mxu0 0.0
    %2510 = vmatpush1.msra.mxu0 0.0
    %2511 = vmatprep.subr.mxu0 0.0
    %2512 = vmatpush1.msra.mxu0 0.0
    %2513 = vmatprep.subr.mxu0 0.0
    %2514 = vmatpush1.msra.mxu0 0.0
    %2515 = vmatprep.subr.mxu0 0.0
    %2516 = vmatpush1.msra.mxu0 0.0
    %2517 = vmatprep.subr.mxu0 0.0
    %2518 = vmatpush1.msra.mxu0 0.0
    %2519 = vmatprep.subr.mxu0 0.0
    %2520 = vmatpush1.msra.mxu0 0.0
    %2521 = vmatprep.subr.mxu0 0.0
    %2522 = vmatpush1.msra.mxu0 0.0
    %2523 = vmatprep.subr.mxu0 0.0
    %2524 = vmatpush1.msra.mxu0 0.0
    %2525 = vmatprep.subr.mxu0 0.0
    %2526 = vmatpush1.msra.mxu0 0.0
    %2527 = vmatprep.subr.mxu0 0.0
    %2528 = vmatpush1.msra.mxu0 0.0
    %2529 = vmatprep.subr.mxu0 0.0
    %2530 = vmatpush1.msra.mxu0 0.0
    %2531 = vmatprep.subr.mxu0 0.0
    %2532 = vmatpush1.msra.mxu0 0.0
    %2533 = vmatprep.subr.mxu0 0.0
    %2534 = vmatpush1.msra.mxu0 0.0
    %2535 = vmatprep.subr.mxu0 0.0
    %2536 = vmatpush1.msra.mxu0 0.0
    %2537 = vmatprep.mubr.f32.mxu0 0.0
    %v2538 = vand.u32 %v2002, 4294901760
    %2539 = vmatmul.mubr.f32.gmra.mrb[0].mxu0 %v2538
    %v2540 = vpop.f32.mrb[0].mxu0
    %v2541 = vadd.f32 %v2462, %v2540
    %v2542 = vpop.f32.mrb[0].mxu0
    %2543 = vdwg.mxu0
    %v2544 = vadd.f32 %v1992, %v2541
    %v2545 = vld [vmem:[%s1 + $0xd8] sm:$0xff]
    %v2546 = vld [vmem:[%s1 + $0xe0] sm:$0xff]
    %v2547 = vld [vmem:[%s1 + $0xe8] sm:$0xff]
    %v2548 = vld [vmem:[%s1 + $0xf0] sm:$0xff]
    %v2549 = vld [vmem:[%s1 + $0xf8] sm:$0xff]
    %v2550 = vld [vmem:[%s1 + $0x100] sm:$0xff]
    %v2551 = vld [vmem:[%s1 + $0x108] sm:$0xff]
    %v2552 = vld [vmem:[%s1 + $0x110] sm:$0x3f]
    %v2554 = vsel %vm1451, %v2552, 0
    %2556 = vmatprep.subr.mxu0 0.0
    %v2557 = vand.u32 %v2545, 4294901760
    %2558 = vmatpush1.msra.mxu0 %v2557
    %2559 = vmatprep.subr.mxu0 0.0
    %v2560 = vand.u32 %v2546, 4294901760
    %2561 = vmatpush1.msra.mxu0 %v2560
    %2562 = vmatprep.subr.mxu0 0.0
    %v2563 = vand.u32 %v2547, 4294901760
    %2564 = vmatpush1.msra.mxu0 %v2563
    %2565 = vmatprep.subr.mxu0 0.0
    %v2566 = vand.u32 %v2548, 4294901760
    %2567 = vmatpush1.msra.mxu0 %v2566
    %2568 = vmatprep.subr.mxu0 0.0
    %v2569 = vand.u32 %v2549, 4294901760
    %2570 = vmatpush1.msra.mxu0 %v2569
    %2571 = vmatprep.subr.mxu0 0.0
    %v2572 = vand.u32 %v2550, 4294901760
    %2573 = vmatpush1.msra.mxu0 %v2572
    %2574 = vmatprep.subr.mxu0 0.0
    %v2575 = vand.u32 %v2551, 4294901760
    %2576 = vmatpush1.msra.mxu0 %v2575
    %2577 = vmatprep.subr.mxu0 0.0
    %v2578 = vand.u32 %v2554, 4294901760
    %2579 = vmatpush1.msra.mxu0 %v2578
    %2580 = vmatprep.subr.mxu0 0.0
    %2581 = vmatpush1.msra.mxu0 0.0
    %2582 = vmatprep.subr.mxu0 0.0
    %2583 = vmatpush1.msra.mxu0 0.0
    %2584 = vmatprep.subr.mxu0 0.0
    %2585 = vmatpush1.msra.mxu0 0.0
    %2586 = vmatprep.subr.mxu0 0.0
    %2587 = vmatpush1.msra.mxu0 0.0
    %2588 = vmatprep.subr.mxu0 0.0
    %2589 = vmatpush1.msra.mxu0 0.0
    %2590 = vmatprep.subr.mxu0 0.0
    %2591 = vmatpush1.msra.mxu0 0.0
    %2592 = vmatprep.subr.mxu0 0.0
    %2593 = vmatpush1.msra.mxu0 0.0
    %2594 = vmatprep.subr.mxu0 0.0
    %2595 = vmatpush1.msra.mxu0 0.0
    %2596 = vmatprep.subr.mxu0 0.0
    %2597 = vmatpush1.msra.mxu0 0.0
    %2598 = vmatprep.subr.mxu0 0.0
    %2599 = vmatpush1.msra.mxu0 0.0
    %2600 = vmatprep.subr.mxu0 0.0
    %2601 = vmatpush1.msra.mxu0 0.0
    %2602 = vmatprep.subr.mxu0 0.0
    %2603 = vmatpush1.msra.mxu0 0.0
    %2604 = vmatprep.subr.mxu0 0.0
    %2605 = vmatpush1.msra.mxu0 0.0
    %2606 = vmatprep.subr.mxu0 0.0
    %2607 = vmatpush1.msra.mxu0 0.0
    %2608 = vmatprep.subr.mxu0 0.0
    %2609 = vmatpush1.msra.mxu0 0.0
    %2610 = vmatprep.subr.mxu0 0.0
    %2611 = vmatpush1.msra.mxu0 0.0
    %2612 = vmatprep.subr.mxu0 0.0
    %2613 = vmatpush1.msra.mxu0 0.0
    %2614 = vmatprep.subr.mxu0 0.0
    %2615 = vmatpush1.msra.mxu0 0.0
    %2616 = vmatprep.subr.mxu0 0.0
    %2617 = vmatpush1.msra.mxu0 0.0
    %2618 = vmatprep.subr.mxu0 0.0
    %2619 = vmatpush1.msra.mxu0 0.0
    %2620 = vmatprep.subr.mxu0 0.0
    %2621 = vmatpush1.msra.mxu0 0.0
    %2622 = vmatprep.subr.mxu0 0.0
    %2623 = vmatpush1.msra.mxu0 0.0
    %2624 = vmatprep.subr.mxu0 0.0
    %2625 = vmatpush1.msra.mxu0 0.0
    %2626 = vmatprep.subr.mxu0 0.0
    %2627 = vmatpush1.msra.mxu0 0.0
    %2628 = vmatprep.mubr.f32.mxu0 0.0
    %v2629 = vand.u32 %v2002, 4294901760
    %v2630 = vsub.f32 %v2002, %v2629
    %v2631 = vand.u32 %v2630, 4294901760
    %v2632 = vsub.f32 %v2630, %v2631
    %v2633 = vand.u32 %v2632, 4294901760
    %2634 = vmatmul.mubr.f32.gmra.mrb[0].mxu0 %v2633
    %v2635 = vpop.f32.mrb[0].mxu0
    %v2636 = vadd.f32 0.0, %v2635
    %v2637 = vpop.f32.mrb[0].mxu0
    %2638 = vdwg.mxu0
    %2639 = vmatprep.subr.mxu0 0.0
    %v2640 = vand.u32 %v2545, 4294901760
    %v2641 = vsub.f32 %v2545, %v2640
    %v2642 = vand.u32 %v2641, 4294901760
    %v2643 = vsub.f32 %v2641, %v2642
    %v2644 = vand.u32 %v2643, 4294901760
    %2645 = vmatpush1.msra.mxu0 %v2644
    %2646 = vmatprep.subr.mxu0 0.0
    %v2647 = vand.u32 %v2546, 4294901760
    %v2648 = vsub.f32 %v2546, %v2647
    %v2649 = vand.u32 %v2648, 4294901760
    %v2650 = vsub.f32 %v2648, %v2649
    %v2651 = vand.u32 %v2650, 4294901760
    %2652 = vmatpush1.msra.mxu0 %v2651
    %2653 = vmatprep.subr.mxu0 0.0
    %v2654 = vand.u32 %v2547, 4294901760
    %v2655 = vsub.f32 %v2547, %v2654
    %v2656 = vand.u32 %v2655, 4294901760
    %v2657 = vsub.f32 %v2655, %v2656
    %v2658 = vand.u32 %v2657, 4294901760
    %2659 = vmatpush1.msra.mxu0 %v2658
    %2660 = vmatprep.subr.mxu0 0.0
    %v2661 = vand.u32 %v2548, 4294901760
    %v2662 = vsub.f32 %v2548, %v2661
    %v2663 = vand.u32 %v2662, 4294901760
    %v2664 = vsub.f32 %v2662, %v2663
    %v2665 = vand.u32 %v2664, 4294901760
    %2666 = vmatpush1.msra.mxu0 %v2665
    %2667 = vmatprep.subr.mxu0 0.0
    %v2668 = vand.u32 %v2549, 4294901760
    %v2669 = vsub.f32 %v2549, %v2668
    %v2670 = vand.u32 %v2669, 4294901760
    %v2671 = vsub.f32 %v2669, %v2670
    %v2672 = vand.u32 %v2671, 4294901760
    %2673 = vmatpush1.msra.mxu0 %v2672
    %2674 = vmatprep.subr.mxu0 0.0
    %v2675 = vand.u32 %v2550, 4294901760
    %v2676 = vsub.f32 %v2550, %v2675
    %v2677 = vand.u32 %v2676, 4294901760
    %v2678 = vsub.f32 %v2676, %v2677
    %v2679 = vand.u32 %v2678, 4294901760
    %2680 = vmatpush1.msra.mxu0 %v2679
    %2681 = vmatprep.subr.mxu0 0.0
    %v2682 = vand.u32 %v2551, 4294901760
    %v2683 = vsub.f32 %v2551, %v2682
    %v2684 = vand.u32 %v2683, 4294901760
    %v2685 = vsub.f32 %v2683, %v2684
    %v2686 = vand.u32 %v2685, 4294901760
    %2687 = vmatpush1.msra.mxu0 %v2686
    %2688 = vmatprep.subr.mxu0 0.0
    %v2689 = vand.u32 %v2554, 4294901760
    %v2690 = vsub.f32 %v2554, %v2689
    %v2691 = vand.u32 %v2690, 4294901760
    %v2692 = vsub.f32 %v2690, %v2691
    %v2693 = vand.u32 %v2692, 4294901760
    %2694 = vmatpush1.msra.mxu0 %v2693
    %2695 = vmatprep.subr.mxu0 0.0
    %2696 = vmatpush1.msra.mxu0 0.0
    %2697 = vmatprep.subr.mxu0 0.0
    %2698 = vmatpush1.msra.mxu0 0.0
    %2699 = vmatprep.subr.mxu0 0.0
    %2700 = vmatpush1.msra.mxu0 0.0
    %2701 = vmatprep.subr.mxu0 0.0
    %2702 = vmatpush1.msra.mxu0 0.0
    %2703 = vmatprep.subr.mxu0 0.0
    %2704 = vmatpush1.msra.mxu0 0.0
    %2705 = vmatprep.subr.mxu0 0.0
    %2706 = vmatpush1.msra.mxu0 0.0
    %2707 = vmatprep.subr.mxu0 0.0
    %2708 = vmatpush1.msra.mxu0 0.0
    %2709 = vmatprep.subr.mxu0 0.0
    %2710 = vmatpush1.msra.mxu0 0.0
    %2711 = vmatprep.subr.mxu0 0.0
    %2712 = vmatpush1.msra.mxu0 0.0
    %2713 = vmatprep.subr.mxu0 0.0
    %2714 = vmatpush1.msra.mxu0 0.0
    %2715 = vmatprep.subr.mxu0 0.0
    %2716 = vmatpush1.msra.mxu0 0.0
    %2717 = vmatprep.subr.mxu0 0.0
    %2718 = vmatpush1.msra.mxu0 0.0
    %2719 = vmatprep.subr.mxu0 0.0
    %2720 = vmatpush1.msra.mxu0 0.0
    %2721 = vmatprep.subr.mxu0 0.0
    %2722 = vmatpush1.msra.mxu0 0.0
    %2723 = vmatprep.subr.mxu0 0.0
    %2724 = vmatpush1.msra.mxu0 0.0
    %2725 = vmatprep.subr.mxu0 0.0
    %2726 = vmatpush1.msra.mxu0 0.0
    %2727 = vmatprep.subr.mxu0 0.0
    %2728 = vmatpush1.msra.mxu0 0.0
    %2729 = vmatprep.subr.mxu0 0.0
    %2730 = vmatpush1.msra.mxu0 0.0
    %2731 = vmatprep.subr.mxu0 0.0
    %2732 = vmatpush1.msra.mxu0 0.0
    %2733 = vmatprep.subr.mxu0 0.0
    %2734 = vmatpush1.msra.mxu0 0.0
    %2735 = vmatprep.subr.mxu0 0.0
    %2736 = vmatpush1.msra.mxu0 0.0
    %2737 = vmatprep.subr.mxu0 0.0
    %2738 = vmatpush1.msra.mxu0 0.0
    %2739 = vmatprep.subr.mxu0 0.0
    %2740 = vmatpush1.msra.mxu0 0.0
    %2741 = vmatprep.subr.mxu0 0.0
    %2742 = vmatpush1.msra.mxu0 0.0
    %2743 = vmatprep.mubr.f32.mxu0 0.0
    %v2744 = vand.u32 %v2002, 4294901760
    %2745 = vmatmul.mubr.f32.gmra.mrb[0].mxu0 %v2744
    %v2746 = vpop.f32.mrb[0].mxu0
    %v2747 = vadd.f32 %v2636, %v2746
    %v2748 = vpop.f32.mrb[0].mxu0
    %2749 = vdwg.mxu0
    %2750 = vmatprep.subr.mxu0 0.0
    %v2751 = vand.u32 %v2545, 4294901760
    %v2752 = vsub.f32 %v2545, %v2751
    %2753 = vmatpush1.msra.mxu0 %v2752
    %2754 = vmatprep.subr.mxu0 0.0
    %v2755 = vand.u32 %v2546, 4294901760
    %v2756 = vsub.f32 %v2546, %v2755
    %2757 = vmatpush1.msra.mxu0 %v2756
    %2758 = vmatprep.subr.mxu0 0.0
    %v2759 = vand.u32 %v2547, 4294901760
    %v2760 = vsub.f32 %v2547, %v2759
    %2761 = vmatpush1.msra.mxu0 %v2760
    %2762 = vmatprep.subr.mxu0 0.0
    %v2763 = vand.u32 %v2548, 4294901760
    %v2764 = vsub.f32 %v2548, %v2763
    %2765 = vmatpush1.msra.mxu0 %v2764
    %2766 = vmatprep.subr.mxu0 0.0
    %v2767 = vand.u32 %v2549, 4294901760
    %v2768 = vsub.f32 %v2549, %v2767
    %2769 = vmatpush1.msra.mxu0 %v2768
    %2770 = vmatprep.subr.mxu0 0.0
    %v2771 = vand.u32 %v2550, 4294901760
    %v2772 = vsub.f32 %v2550, %v2771
    %2773 = vmatpush1.msra.mxu0 %v2772
    %2774 = vmatprep.subr.mxu0 0.0
    %v2775 = vand.u32 %v2551, 4294901760
    %v2776 = vsub.f32 %v2551, %v2775
    %2777 = vmatpush1.msra.mxu0 %v2776
    %2778 = vmatprep.subr.mxu0 0.0
    %v2779 = vand.u32 %v2554, 4294901760
    %v2780 = vsub.f32 %v2554, %v2779
    %2781 = vmatpush1.msra.mxu0 %v2780
    %2782 = vmatprep.subr.mxu0 0.0
    %2783 = vmatpush1.msra.mxu0 0.0
    %2784 = vmatprep.subr.mxu0 0.0
    %2785 = vmatpush1.msra.mxu0 0.0
    %2786 = vmatprep.subr.mxu0 0.0
    %2787 = vmatpush1.msra.mxu0 0.0
    %2788 = vmatprep.subr.mxu0 0.0
    %2789 = vmatpush1.msra.mxu0 0.0
    %2790 = vmatprep.subr.mxu0 0.0
    %2791 = vmatpush1.msra.mxu0 0.0
    %2792 = vmatprep.subr.mxu0 0.0
    %2793 = vmatpush1.msra.mxu0 0.0
    %2794 = vmatprep.subr.mxu0 0.0
    %2795 = vmatpush1.msra.mxu0 0.0
    %2796 = vmatprep.subr.mxu0 0.0
    %2797 = vmatpush1.msra.mxu0 0.0
    %2798 = vmatprep.subr.mxu0 0.0
    %2799 = vmatpush1.msra.mxu0 0.0
    %2800 = vmatprep.subr.mxu0 0.0
    %2801 = vmatpush1.msra.mxu0 0.0
    %2802 = vmatprep.subr.mxu0 0.0
    %2803 = vmatpush1.msra.mxu0 0.0
    %2804 = vmatprep.subr.mxu0 0.0
    %2805 = vmatpush1.msra.mxu0 0.0
    %2806 = vmatprep.subr.mxu0 0.0
    %2807 = vmatpush1.msra.mxu0 0.0
    %2808 = vmatprep.subr.mxu0 0.0
    %2809 = vmatpush1.msra.mxu0 0.0
    %2810 = vmatprep.subr.mxu0 0.0
    %2811 = vmatpush1.msra.mxu0 0.0
    %2812 = vmatprep.subr.mxu0 0.0
    %2813 = vmatpush1.msra.mxu0 0.0
    %2814 = vmatprep.subr.mxu0 0.0
    %2815 = vmatpush1.msra.mxu0 0.0
    %2816 = vmatprep.subr.mxu0 0.0
    %2817 = vmatpush1.msra.mxu0 0.0
    %2818 = vmatprep.subr.mxu0 0.0
    %2819 = vmatpush1.msra.mxu0 0.0
    %2820 = vmatprep.subr.mxu0 0.0
    %2821 = vmatpush1.msra.mxu0 0.0
    %2822 = vmatprep.subr.mxu0 0.0
    %2823 = vmatpush1.msra.mxu0 0.0
    %2824 = vmatprep.subr.mxu0 0.0
    %2825 = vmatpush1.msra.mxu0 0.0
    %2826 = vmatprep.subr.mxu0 0.0
    %2827 = vmatpush1.msra.mxu0 0.0
    %2828 = vmatprep.subr.mxu0 0.0
    %2829 = vmatpush1.msra.mxu0 0.0
    %2830 = vmatprep.mubr.f32.mxu0 0.0
    %v2831 = vand.u32 %v2002, 4294901760
    %v2832 = vsub.f32 %v2002, %v2831
    %2833 = vmatmul.mubr.f32.gmra.mrb[0].mxu0 %v2832
    %v2834 = vpop.f32.mrb[0].mxu0
    %v2835 = vadd.f32 %v2747, %v2834
    %v2836 = vpop.f32.mrb[0].mxu0
    %2837 = vdwg.mxu0
    %2838 = vmatprep.subr.mxu0 0.0
    %v2839 = vand.u32 %v2545, 4294901760
    %2840 = vmatpush1.msra.mxu0 %v2839
    %2841 = vmatprep.subr.mxu0 0.0
    %v2842 = vand.u32 %v2546, 4294901760
    %2843 = vmatpush1.msra.mxu0 %v2842
    %2844 = vmatprep.subr.mxu0 0.0
    %v2845 = vand.u32 %v2547, 4294901760
    %2846 = vmatpush1.msra.mxu0 %v2845
    %2847 = vmatprep.subr.mxu0 0.0
    %v2848 = vand.u32 %v2548, 4294901760
    %2849 = vmatpush1.msra.mxu0 %v2848
    %2850 = vmatprep.subr.mxu0 0.0
    %v2851 = vand.u32 %v2549, 4294901760
    %2852 = vmatpush1.msra.mxu0 %v2851
    %2853 = vmatprep.subr.mxu0 0.0
    %v2854 = vand.u32 %v2550, 4294901760
    %2855 = vmatpush1.msra.mxu0 %v2854
    %2856 = vmatprep.subr.mxu0 0.0
    %v2857 = vand.u32 %v2551, 4294901760
    %2858 = vmatpush1.msra.mxu0 %v2857
    %2859 = vmatprep.subr.mxu0 0.0
    %v2860 = vand.u32 %v2554, 4294901760
    %2861 = vmatpush1.msra.mxu0 %v2860
    %2862 = vmatprep.subr.mxu0 0.0
    %2863 = vmatpush1.msra.mxu0 0.0
    %2864 = vmatprep.subr.mxu0 0.0
    %2865 = vmatpush1.msra.mxu0 0.0
    %2866 = vmatprep.subr.mxu0 0.0
    %2867 = vmatpush1.msra.mxu0 0.0
    %2868 = vmatprep.subr.mxu0 0.0
    %2869 = vmatpush1.msra.mxu0 0.0
    %2870 = vmatprep.subr.mxu0 0.0
    %2871 = vmatpush1.msra.mxu0 0.0
    %2872 = vmatprep.subr.mxu0 0.0
    %2873 = vmatpush1.msra.mxu0 0.0
    %2874 = vmatprep.subr.mxu0 0.0
    %2875 = vmatpush1.msra.mxu0 0.0
    %2876 = vmatprep.subr.mxu0 0.0
    %2877 = vmatpush1.msra.mxu0 0.0
    %2878 = vmatprep.subr.mxu0 0.0
    %2879 = vmatpush1.msra.mxu0 0.0
    %2880 = vmatprep.subr.mxu0 0.0
    %2881 = vmatpush1.msra.mxu0 0.0
    %2882 = vmatprep.subr.mxu0 0.0
    %2883 = vmatpush1.msra.mxu0 0.0
    %2884 = vmatprep.subr.mxu0 0.0
    %2885 = vmatpush1.msra.mxu0 0.0
    %2886 = vmatprep.subr.mxu0 0.0
    %2887 = vmatpush1.msra.mxu0 0.0
    %2888 = vmatprep.subr.mxu0 0.0
    %2889 = vmatpush1.msra.mxu0 0.0
    %2890 = vmatprep.subr.mxu0 0.0
    %2891 = vmatpush1.msra.mxu0 0.0
    %2892 = vmatprep.subr.mxu0 0.0
    %2893 = vmatpush1.msra.mxu0 0.0
    %2894 = vmatprep.subr.mxu0 0.0
    %2895 = vmatpush1.msra.mxu0 0.0
    %2896 = vmatprep.subr.mxu0 0.0
    %2897 = vmatpush1.msra.mxu0 0.0
    %2898 = vmatprep.subr.mxu0 0.0
    %2899 = vmatpush1.msra.mxu0 0.0
    %2900 = vmatprep.subr.mxu0 0.0
    %2901 = vmatpush1.msra.mxu0 0.0
    %2902 = vmatprep.subr.mxu0 0.0
    %2903 = vmatpush1.msra.mxu0 0.0
    %2904 = vmatprep.subr.mxu0 0.0
    %2905 = vmatpush1.msra.mxu0 0.0
    %2906 = vmatprep.subr.mxu0 0.0
    %2907 = vmatpush1.msra.mxu0 0.0
    %2908 = vmatprep.subr.mxu0 0.0
    %2909 = vmatpush1.msra.mxu0 0.0
    %2910 = vmatprep.mubr.f32.mxu0 0.0
    %v2911 = vand.u32 %v2002, 4294901760
    %v2912 = vsub.f32 %v2002, %v2911
    %v2913 = vand.u32 %v2912, 4294901760
    %2914 = vmatmul.mubr.f32.gmra.mrb[0].mxu0 %v2913
    %v2915 = vpop.f32.mrb[0].mxu0
    %v2916 = vadd.f32 %v2835, %v2915
    %v2917 = vpop.f32.mrb[0].mxu0
    %2918 = vdwg.mxu0
    %2919 = vmatprep.subr.mxu0 0.0
    %v2920 = vand.u32 %v2545, 4294901760
    %v2921 = vsub.f32 %v2545, %v2920
    %v2922 = vand.u32 %v2921, 4294901760
    %2923 = vmatpush1.msra.mxu0 %v2922
    %2924 = vmatprep.subr.mxu0 0.0
    %v2925 = vand.u32 %v2546, 4294901760
    %v2926 = vsub.f32 %v2546, %v2925
    %v2927 = vand.u32 %v2926, 4294901760
    %2928 = vmatpush1.msra.mxu0 %v2927
    %2929 = vmatprep.subr.mxu0 0.0
    %v2930 = vand.u32 %v2547, 4294901760
    %v2931 = vsub.f32 %v2547, %v2930
    %v2932 = vand.u32 %v2931, 4294901760
    %2933 = vmatpush1.msra.mxu0 %v2932
    %2934 = vmatprep.subr.mxu0 0.0
    %v2935 = vand.u32 %v2548, 4294901760
    %v2936 = vsub.f32 %v2548, %v2935
    %v2937 = vand.u32 %v2936, 4294901760
    %2938 = vmatpush1.msra.mxu0 %v2937
    %2939 = vmatprep.subr.mxu0 0.0
    %v2940 = vand.u32 %v2549, 4294901760
    %v2941 = vsub.f32 %v2549, %v2940
    %v2942 = vand.u32 %v2941, 4294901760
    %2943 = vmatpush1.msra.mxu0 %v2942
    %2944 = vmatprep.subr.mxu0 0.0
    %v2945 = vand.u32 %v2550, 4294901760
    %v2946 = vsub.f32 %v2550, %v2945
    %v2947 = vand.u32 %v2946, 4294901760
    %2948 = vmatpush1.msra.mxu0 %v2947
    %2949 = vmatprep.subr.mxu0 0.0
    %v2950 = vand.u32 %v2551, 4294901760
    %v2951 = vsub.f32 %v2551, %v2950
    %v2952 = vand.u32 %v2951, 4294901760
    %2953 = vmatpush1.msra.mxu0 %v2952
    %2954 = vmatprep.subr.mxu0 0.0
    %v2955 = vand.u32 %v2554, 4294901760
    %v2956 = vsub.f32 %v2554, %v2955
    %v2957 = vand.u32 %v2956, 4294901760
    %2958 = vmatpush1.msra.mxu0 %v2957
    %2959 = vmatprep.subr.mxu0 0.0
    %2960 = vmatpush1.msra.mxu0 0.0
    %2961 = vmatprep.subr.mxu0 0.0
    %2962 = vmatpush1.msra.mxu0 0.0
    %2963 = vmatprep.subr.mxu0 0.0
    %2964 = vmatpush1.msra.mxu0 0.0
    %2965 = vmatprep.subr.mxu0 0.0
    %2966 = vmatpush1.msra.mxu0 0.0
    %2967 = vmatprep.subr.mxu0 0.0
    %2968 = vmatpush1.msra.mxu0 0.0
    %2969 = vmatprep.subr.mxu0 0.0
    %2970 = vmatpush1.msra.mxu0 0.0
    %2971 = vmatprep.subr.mxu0 0.0
    %2972 = vmatpush1.msra.mxu0 0.0
    %2973 = vmatprep.subr.mxu0 0.0
    %2974 = vmatpush1.msra.mxu0 0.0
    %2975 = vmatprep.subr.mxu0 0.0
    %2976 = vmatpush1.msra.mxu0 0.0
    %2977 = vmatprep.subr.mxu0 0.0
    %2978 = vmatpush1.msra.mxu0 0.0
    %2979 = vmatprep.subr.mxu0 0.0
    %2980 = vmatpush1.msra.mxu0 0.0
    %2981 = vmatprep.subr.mxu0 0.0
    %2982 = vmatpush1.msra.mxu0 0.0
    %2983 = vmatprep.subr.mxu0 0.0
    %2984 = vmatpush1.msra.mxu0 0.0
    %2985 = vmatprep.subr.mxu0 0.0
    %2986 = vmatpush1.msra.mxu0 0.0
    %2987 = vmatprep.subr.mxu0 0.0
    %2988 = vmatpush1.msra.mxu0 0.0
    %2989 = vmatprep.subr.mxu0 0.0
    %2990 = vmatpush1.msra.mxu0 0.0
    %2991 = vmatprep.subr.mxu0 0.0
    %2992 = vmatpush1.msra.mxu0 0.0
    %2993 = vmatprep.subr.mxu0 0.0
    %2994 = vmatpush1.msra.mxu0 0.0
    %2995 = vmatprep.subr.mxu0 0.0
    %2996 = vmatpush1.msra.mxu0 0.0
    %2997 = vmatprep.subr.mxu0 0.0
    %2998 = vmatpush1.msra.mxu0 0.0
    %2999 = vmatprep.subr.mxu0 0.0
    %3000 = vmatpush1.msra.mxu0 0.0
    %3001 = vmatprep.subr.mxu0 0.0
    %3002 = vmatpush1.msra.mxu0 0.0
    %3003 = vmatprep.subr.mxu0 0.0
    %3004 = vmatpush1.msra.mxu0 0.0
    %3005 = vmatprep.subr.mxu0 0.0
    %3006 = vmatpush1.msra.mxu0 0.0
    %3007 = vmatprep.mubr.f32.mxu0 0.0
    %v3008 = vand.u32 %v2002, 4294901760
    %3009 = vmatmul.mubr.f32.gmra.mrb[0].mxu0 %v3008
    %v3010 = vpop.f32.mrb[0].mxu0
    %v3011 = vadd.f32 %v2916, %v3010
    %v3012 = vpop.f32.mrb[0].mxu0
    %3013 = vdwg.mxu0
    %3014 = vmatprep.subr.mxu0 0.0
    %v3015 = vand.u32 %v2545, 4294901760
    %3016 = vmatpush1.msra.mxu0 %v3015
    %3017 = vmatprep.subr.mxu0 0.0
    %v3018 = vand.u32 %v2546, 4294901760
    %3019 = vmatpush1.msra.mxu0 %v3018
    %3020 = vmatprep.subr.mxu0 0.0
    %v3021 = vand.u32 %v2547, 4294901760
    %3022 = vmatpush1.msra.mxu0 %v3021
    %3023 = vmatprep.subr.mxu0 0.0
    %v3024 = vand.u32 %v2548, 4294901760
    %3025 = vmatpush1.msra.mxu0 %v3024
    %3026 = vmatprep.subr.mxu0 0.0
    %v3027 = vand.u32 %v2549, 4294901760
    %3028 = vmatpush1.msra.mxu0 %v3027
    %3029 = vmatprep.subr.mxu0 0.0
    %v3030 = vand.u32 %v2550, 4294901760
    %3031 = vmatpush1.msra.mxu0 %v3030
    %3032 = vmatprep.subr.mxu0 0.0
    %v3033 = vand.u32 %v2551, 4294901760
    %3034 = vmatpush1.msra.mxu0 %v3033
    %3035 = vmatprep.subr.mxu0 0.0
    %v3036 = vand.u32 %v2554, 4294901760
    %3037 = vmatpush1.msra.mxu0 %v3036
    %3038 = vmatprep.subr.mxu0 0.0
    %3039 = vmatpush1.msra.mxu0 0.0
    %3040 = vmatprep.subr.mxu0 0.0
    %3041 = vmatpush1.msra.mxu0 0.0
    %3042 = vmatprep.subr.mxu0 0.0
    %3043 = vmatpush1.msra.mxu0 0.0
    %3044 = vmatprep.subr.mxu0 0.0
    %3045 = vmatpush1.msra.mxu0 0.0
    %3046 = vmatprep.subr.mxu0 0.0
    %3047 = vmatpush1.msra.mxu0 0.0
    %3048 = vmatprep.subr.mxu0 0.0
    %3049 = vmatpush1.msra.mxu0 0.0
    %3050 = vmatprep.subr.mxu0 0.0
    %3051 = vmatpush1.msra.mxu0 0.0
    %3052 = vmatprep.subr.mxu0 0.0
    %3053 = vmatpush1.msra.mxu0 0.0
    %3054 = vmatprep.subr.mxu0 0.0
    %3055 = vmatpush1.msra.mxu0 0.0
    %3056 = vmatprep.subr.mxu0 0.0
    %3057 = vmatpush1.msra.mxu0 0.0
    %3058 = vmatprep.subr.mxu0 0.0
    %3059 = vmatpush1.msra.mxu0 0.0
    %3060 = vmatprep.subr.mxu0 0.0
    %3061 = vmatpush1.msra.mxu0 0.0
    %3062 = vmatprep.subr.mxu0 0.0
    %3063 = vmatpush1.msra.mxu0 0.0
    %3064 = vmatprep.subr.mxu0 0.0
    %3065 = vmatpush1.msra.mxu0 0.0
    %3066 = vmatprep.subr.mxu0 0.0
    %3067 = vmatpush1.msra.mxu0 0.0
    %3068 = vmatprep.subr.mxu0 0.0
    %3069 = vmatpush1.msra.mxu0 0.0
    %3070 = vmatprep.subr.mxu0 0.0
    %3071 = vmatpush1.msra.mxu0 0.0
    %3072 = vmatprep.subr.mxu0 0.0
    %3073 = vmatpush1.msra.mxu0 0.0
    %3074 = vmatprep.subr.mxu0 0.0
    %3075 = vmatpush1.msra.mxu0 0.0
    %3076 = vmatprep.subr.mxu0 0.0
    %3077 = vmatpush1.msra.mxu0 0.0
    %3078 = vmatprep.subr.mxu0 0.0
    %3079 = vmatpush1.msra.mxu0 0.0
    %3080 = vmatprep.subr.mxu0 0.0
    %3081 = vmatpush1.msra.mxu0 0.0
    %3082 = vmatprep.subr.mxu0 0.0
    %3083 = vmatpush1.msra.mxu0 0.0
    %3084 = vmatprep.subr.mxu0 0.0
    %3085 = vmatpush1.msra.mxu0 0.0
    %3086 = vmatprep.mubr.f32.mxu0 0.0
    %v3087 = vand.u32 %v2002, 4294901760
    %3088 = vmatmul.mubr.f32.gmra.mrb[0].mxu0 %v3087
    %v3089 = vpop.f32.mrb[0].mxu0
    %v3090 = vadd.f32 %v3011, %v3089
    %v3091 = vpop.f32.mrb[0].mxu0
    %3092 = vdwg.mxu0
    %v3094 = vrot.slane %v3090, 7
    %v3096 = vadd.f32 %v1992, %v3094
    %v3097 = vld [vmem:[%s1 + $0x118] sm:$0xff]
    %v3098 = vld [vmem:[%s1 + $0x120] sm:$0xff]
    %v3099 = vld [vmem:[%s1 + $0x128] sm:$0xff]
    %v3100 = vld [vmem:[%s1 + $0x130] sm:$0xff]
    %v3101 = vld [vmem:[%s1 + $0x138] sm:$0xff]
    %v3102 = vld [vmem:[%s1 + $0x140] sm:$0xff]
    %v3103 = vld [vmem:[%s1 + $0x148] sm:$0xff]
    %v3104 = vld [vmem:[%s1 + $0x150] sm:$0x3f]
    %v3106 = vsel %vm1451, %v3104, 0
    %3108 = vmatprep.subr.mxu0 0.0
    %v3109 = vand.u32 %v3097, 4294901760
    %3110 = vmatpush1.msra.mxu0 %v3109
    %3111 = vmatprep.subr.mxu0 0.0
    %v3112 = vand.u32 %v3098, 4294901760
    %3113 = vmatpush1.msra.mxu0 %v3112
    %3114 = vmatprep.subr.mxu0 0.0
    %v3115 = vand.u32 %v3099, 4294901760
    %3116 = vmatpush1.msra.mxu0 %v3115
    %3117 = vmatprep.subr.mxu0 0.0
    %v3118 = vand.u32 %v3100, 4294901760
    %3119 = vmatpush1.msra.mxu0 %v3118
    %3120 = vmatprep.subr.mxu0 0.0
    %v3121 = vand.u32 %v3101, 4294901760
    %3122 = vmatpush1.msra.mxu0 %v3121
    %3123 = vmatprep.subr.mxu0 0.0
    %v3124 = vand.u32 %v3102, 4294901760
    %3125 = vmatpush1.msra.mxu0 %v3124
    %3126 = vmatprep.subr.mxu0 0.0
    %v3127 = vand.u32 %v3103, 4294901760
    %3128 = vmatpush1.msra.mxu0 %v3127
    %3129 = vmatprep.subr.mxu0 0.0
    %v3130 = vand.u32 %v3106, 4294901760
    %3131 = vmatpush1.msra.mxu0 %v3130
    %3132 = vmatprep.subr.mxu0 0.0
    %3133 = vmatpush1.msra.mxu0 0.0
    %3134 = vmatprep.subr.mxu0 0.0
    %3135 = vmatpush1.msra.mxu0 0.0
    %3136 = vmatprep.subr.mxu0 0.0
    %3137 = vmatpush1.msra.mxu0 0.0
    %3138 = vmatprep.subr.mxu0 0.0
    %3139 = vmatpush1.msra.mxu0 0.0
    %3140 = vmatprep.subr.mxu0 0.0
    %3141 = vmatpush1.msra.mxu0 0.0
    %3142 = vmatprep.subr.mxu0 0.0
    %3143 = vmatpush1.msra.mxu0 0.0
    %3144 = vmatprep.subr.mxu0 0.0
    %3145 = vmatpush1.msra.mxu0 0.0
    %3146 = vmatprep.subr.mxu0 0.0
    %3147 = vmatpush1.msra.mxu0 0.0
    %3148 = vmatprep.subr.mxu0 0.0
    %3149 = vmatpush1.msra.mxu0 0.0
    %3150 = vmatprep.subr.mxu0 0.0
    %3151 = vmatpush1.msra.mxu0 0.0
    %3152 = vmatprep.subr.mxu0 0.0
    %3153 = vmatpush1.msra.mxu0 0.0
    %3154 = vmatprep.subr.mxu0 0.0
    %3155 = vmatpush1.msra.mxu0 0.0
    %3156 = vmatprep.subr.mxu0 0.0
    %3157 = vmatpush1.msra.mxu0 0.0
    %3158 = vmatprep.subr.mxu0 0.0
    %3159 = vmatpush1.msra.mxu0 0.0
    %3160 = vmatprep.subr.mxu0 0.0
    %3161 = vmatpush1.msra.mxu0 0.0
    %3162 = vmatprep.subr.mxu0 0.0
    %3163 = vmatpush1.msra.mxu0 0.0
    %3164 = vmatprep.subr.mxu0 0.0
    %3165 = vmatpush1.msra.mxu0 0.0
    %3166 = vmatprep.subr.mxu0 0.0
    %3167 = vmatpush1.msra.mxu0 0.0
    %3168 = vmatprep.subr.mxu0 0.0
    %3169 = vmatpush1.msra.mxu0 0.0
    %3170 = vmatprep.subr.mxu0 0.0
    %3171 = vmatpush1.msra.mxu0 0.0
    %3172 = vmatprep.subr.mxu0 0.0
    %3173 = vmatpush1.msra.mxu0 0.0
    %3174 = vmatprep.subr.mxu0 0.0
    %3175 = vmatpush1.msra.mxu0 0.0
    %3176 = vmatprep.subr.mxu0 0.0
    %3177 = vmatpush1.msra.mxu0 0.0
    %3178 = vmatprep.subr.mxu0 0.0
    %3179 = vmatpush1.msra.mxu0 0.0
    %3180 = vmatprep.mubr.f32.mxu0 0.0
    %v3181 = vand.u32 %v2002, 4294901760
    %v3182 = vsub.f32 %v2002, %v3181
    %v3183 = vand.u32 %v3182, 4294901760
    %v3184 = vsub.f32 %v3182, %v3183
    %v3185 = vand.u32 %v3184, 4294901760
    %3186 = vmatmul.mubr.f32.gmra.mrb[0].mxu0 %v3185
    %v3187 = vpop.f32.mrb[0].mxu0
    %v3188 = vadd.f32 0.0, %v3187
    %v3189 = vpop.f32.mrb[0].mxu0
    %3190 = vdwg.mxu0
    %3191 = vmatprep.subr.mxu0 0.0
    %v3192 = vand.u32 %v3097, 4294901760
    %v3193 = vsub.f32 %v3097, %v3192
    %v3194 = vand.u32 %v3193, 4294901760
    %v3195 = vsub.f32 %v3193, %v3194
    %v3196 = vand.u32 %v3195, 4294901760
    %3197 = vmatpush1.msra.mxu0 %v3196
    %3198 = vmatprep.subr.mxu0 0.0
    %v3199 = vand.u32 %v3098, 4294901760
    %v3200 = vsub.f32 %v3098, %v3199
    %v3201 = vand.u32 %v3200, 4294901760
    %v3202 = vsub.f32 %v3200, %v3201
    %v3203 = vand.u32 %v3202, 4294901760
    %3204 = vmatpush1.msra.mxu0 %v3203
    %3205 = vmatprep.subr.mxu0 0.0
    %v3206 = vand.u32 %v3099, 4294901760
    %v3207 = vsub.f32 %v3099, %v3206
    %v3208 = vand.u32 %v3207, 4294901760
    %v3209 = vsub.f32 %v3207, %v3208
    %v3210 = vand.u32 %v3209, 4294901760
    %3211 = vmatpush1.msra.mxu0 %v3210
    %3212 = vmatprep.subr.mxu0 0.0
    %v3213 = vand.u32 %v3100, 4294901760
    %v3214 = vsub.f32 %v3100, %v3213
    %v3215 = vand.u32 %v3214, 4294901760
    %v3216 = vsub.f32 %v3214, %v3215
    %v3217 = vand.u32 %v3216, 4294901760
    %3218 = vmatpush1.msra.mxu0 %v3217
    %3219 = vmatprep.subr.mxu0 0.0
    %v3220 = vand.u32 %v3101, 4294901760
    %v3221 = vsub.f32 %v3101, %v3220
    %v3222 = vand.u32 %v3221, 4294901760
    %v3223 = vsub.f32 %v3221, %v3222
    %v3224 = vand.u32 %v3223, 4294901760
    %3225 = vmatpush1.msra.mxu0 %v3224
    %3226 = vmatprep.subr.mxu0 0.0
    %v3227 = vand.u32 %v3102, 4294901760
    %v3228 = vsub.f32 %v3102, %v3227
    %v3229 = vand.u32 %v3228, 4294901760
    %v3230 = vsub.f32 %v3228, %v3229
    %v3231 = vand.u32 %v3230, 4294901760
    %3232 = vmatpush1.msra.mxu0 %v3231
    %3233 = vmatprep.subr.mxu0 0.0
    %v3234 = vand.u32 %v3103, 4294901760
    %v3235 = vsub.f32 %v3103, %v3234
    %v3236 = vand.u32 %v3235, 4294901760
    %v3237 = vsub.f32 %v3235, %v3236
    %v3238 = vand.u32 %v3237, 4294901760
    %3239 = vmatpush1.msra.mxu0 %v3238
    %3240 = vmatprep.subr.mxu0 0.0
    %v3241 = vand.u32 %v3106, 4294901760
    %v3242 = vsub.f32 %v3106, %v3241
    %v3243 = vand.u32 %v3242, 4294901760
    %v3244 = vsub.f32 %v3242, %v3243
    %v3245 = vand.u32 %v3244, 4294901760
    %3246 = vmatpush1.msra.mxu0 %v3245
    %3247 = vmatprep.subr.mxu0 0.0
    %3248 = vmatpush1.msra.mxu0 0.0
    %3249 = vmatprep.subr.mxu0 0.0
    %3250 = vmatpush1.msra.mxu0 0.0
    %3251 = vmatprep.subr.mxu0 0.0
    %3252 = vmatpush1.msra.mxu0 0.0
    %3253 = vmatprep.subr.mxu0 0.0
    %3254 = vmatpush1.msra.mxu0 0.0
    %3255 = vmatprep.subr.mxu0 0.0
    %3256 = vmatpush1.msra.mxu0 0.0
    %3257 = vmatprep.subr.mxu0 0.0
    %3258 = vmatpush1.msra.mxu0 0.0
    %3259 = vmatprep.subr.mxu0 0.0
    %3260 = vmatpush1.msra.mxu0 0.0
    %3261 = vmatprep.subr.mxu0 0.0
    %3262 = vmatpush1.msra.mxu0 0.0
    %3263 = vmatprep.subr.mxu0 0.0
    %3264 = vmatpush1.msra.mxu0 0.0
    %3265 = vmatprep.subr.mxu0 0.0
    %3266 = vmatpush1.msra.mxu0 0.0
    %3267 = vmatprep.subr.mxu0 0.0
    %3268 = vmatpush1.msra.mxu0 0.0
    %3269 = vmatprep.subr.mxu0 0.0
    %3270 = vmatpush1.msra.mxu0 0.0
    %3271 = vmatprep.subr.mxu0 0.0
    %3272 = vmatpush1.msra.mxu0 0.0
    %3273 = vmatprep.subr.mxu0 0.0
    %3274 = vmatpush1.msra.mxu0 0.0
    %3275 = vmatprep.subr.mxu0 0.0
    %3276 = vmatpush1.msra.mxu0 0.0
    %3277 = vmatprep.subr.mxu0 0.0
    %3278 = vmatpush1.msra.mxu0 0.0
    %3279 = vmatprep.subr.mxu0 0.0
    %3280 = vmatpush1.msra.mxu0 0.0
    %3281 = vmatprep.subr.mxu0 0.0
    %3282 = vmatpush1.msra.mxu0 0.0
    %3283 = vmatprep.subr.mxu0 0.0
    %3284 = vmatpush1.msra.mxu0 0.0
    %3285 = vmatprep.subr.mxu0 0.0
    %3286 = vmatpush1.msra.mxu0 0.0
    %3287 = vmatprep.subr.mxu0 0.0
    %3288 = vmatpush1.msra.mxu0 0.0
    %3289 = vmatprep.subr.mxu0 0.0
    %3290 = vmatpush1.msra.mxu0 0.0
    %3291 = vmatprep.subr.mxu0 0.0
    %3292 = vmatpush1.msra.mxu0 0.0
    %3293 = vmatprep.subr.mxu0 0.0
    %3294 = vmatpush1.msra.mxu0 0.0
    %3295 = vmatprep.mubr.f32.mxu0 0.0
    %v3296 = vand.u32 %v2002, 4294901760
    %3297 = vmatmul.mubr.f32.gmra.mrb[0].mxu0 %v3296
    %v3298 = vpop.f32.mrb[0].mxu0
    %v3299 = vadd.f32 %v3188, %v3298
    %v3300 = vpop.f32.mrb[0].mxu0
    %3301 = vdwg.mxu0
    %3302 = vmatprep.subr.mxu0 0.0
    %v3303 = vand.u32 %v3097, 4294901760
    %v3304 = vsub.f32 %v3097, %v3303
    %3305 = vmatpush1.msra.mxu0 %v3304
    %3306 = vmatprep.subr.mxu0 0.0
    %v3307 = vand.u32 %v3098, 4294901760
    %v3308 = vsub.f32 %v3098, %v3307
    %3309 = vmatpush1.msra.mxu0 %v3308
    %3310 = vmatprep.subr.mxu0 0.0
    %v3311 = vand.u32 %v3099, 4294901760
    %v3312 = vsub.f32 %v3099, %v3311
    %3313 = vmatpush1.msra.mxu0 %v3312
    %3314 = vmatprep.subr.mxu0 0.0
    %v3315 = vand.u32 %v3100, 4294901760
    %v3316 = vsub.f32 %v3100, %v3315
    %3317 = vmatpush1.msra.mxu0 %v3316
    %3318 = vmatprep.subr.mxu0 0.0
    %v3319 = vand.u32 %v3101, 4294901760
    %v3320 = vsub.f32 %v3101, %v3319
    %3321 = vmatpush1.msra.mxu0 %v3320
    %3322 = vmatprep.subr.mxu0 0.0
    %v3323 = vand.u32 %v3102, 4294901760
    %v3324 = vsub.f32 %v3102, %v3323
    %3325 = vmatpush1.msra.mxu0 %v3324
    %3326 = vmatprep.subr.mxu0 0.0
    %v3327 = vand.u32 %v3103, 4294901760
    %v3328 = vsub.f32 %v3103, %v3327
    %3329 = vmatpush1.msra.mxu0 %v3328
    %3330 = vmatprep.subr.mxu0 0.0
    %v3331 = vand.u32 %v3106, 4294901760
    %v3332 = vsub.f32 %v3106, %v3331
    %3333 = vmatpush1.msra.mxu0 %v3332
    %3334 = vmatprep.subr.mxu0 0.0
    %3335 = vmatpush1.msra.mxu0 0.0
    %3336 = vmatprep.subr.mxu0 0.0
    %3337 = vmatpush1.msra.mxu0 0.0
    %3338 = vmatprep.subr.mxu0 0.0
    %3339 = vmatpush1.msra.mxu0 0.0
    %3340 = vmatprep.subr.mxu0 0.0
    %3341 = vmatpush1.msra.mxu0 0.0
    %3342 = vmatprep.subr.mxu0 0.0
    %3343 = vmatpush1.msra.mxu0 0.0
    %3344 = vmatprep.subr.mxu0 0.0
    %3345 = vmatpush1.msra.mxu0 0.0
    %3346 = vmatprep.subr.mxu0 0.0
    %3347 = vmatpush1.msra.mxu0 0.0
    %3348 = vmatprep.subr.mxu0 0.0
    %3349 = vmatpush1.msra.mxu0 0.0
    %3350 = vmatprep.subr.mxu0 0.0
    %3351 = vmatpush1.msra.mxu0 0.0
    %3352 = vmatprep.subr.mxu0 0.0
    %3353 = vmatpush1.msra.mxu0 0.0
    %3354 = vmatprep.subr.mxu0 0.0
    %3355 = vmatpush1.msra.mxu0 0.0
    %3356 = vmatprep.subr.mxu0 0.0
    %3357 = vmatpush1.msra.mxu0 0.0
    %3358 = vmatprep.subr.mxu0 0.0
    %3359 = vmatpush1.msra.mxu0 0.0
    %3360 = vmatprep.subr.mxu0 0.0
    %3361 = vmatpush1.msra.mxu0 0.0
    %3362 = vmatprep.subr.mxu0 0.0
    %3363 = vmatpush1.msra.mxu0 0.0
    %3364 = vmatprep.subr.mxu0 0.0
    %3365 = vmatpush1.msra.mxu0 0.0
    %3366 = vmatprep.subr.mxu0 0.0
    %3367 = vmatpush1.msra.mxu0 0.0
    %3368 = vmatprep.subr.mxu0 0.0
    %3369 = vmatpush1.msra.mxu0 0.0
    %3370 = vmatprep.subr.mxu0 0.0
    %3371 = vmatpush1.msra.mxu0 0.0
    %3372 = vmatprep.subr.mxu0 0.0
    %3373 = vmatpush1.msra.mxu0 0.0
    %3374 = vmatprep.subr.mxu0 0.0
    %3375 = vmatpush1.msra.mxu0 0.0
    %3376 = vmatprep.subr.mxu0 0.0
    %3377 = vmatpush1.msra.mxu0 0.0
    %3378 = vmatprep.subr.mxu0 0.0
    %3379 = vmatpush1.msra.mxu0 0.0
    %3380 = vmatprep.subr.mxu0 0.0
    %3381 = vmatpush1.msra.mxu0 0.0
    %3382 = vmatprep.mubr.f32.mxu0 0.0
    %v3383 = vand.u32 %v2002, 4294901760
    %v3384 = vsub.f32 %v2002, %v3383
    %3385 = vmatmul.mubr.f32.gmra.mrb[0].mxu0 %v3384
    %v3386 = vpop.f32.mrb[0].mxu0
    %v3387 = vadd.f32 %v3299, %v3386
    %v3388 = vpop.f32.mrb[0].mxu0
    %3389 = vdwg.mxu0
    %3390 = vmatprep.subr.mxu0 0.0
    %v3391 = vand.u32 %v3097, 4294901760
    %3392 = vmatpush1.msra.mxu0 %v3391
    %3393 = vmatprep.subr.mxu0 0.0
    %v3394 = vand.u32 %v3098, 4294901760
    %3395 = vmatpush1.msra.mxu0 %v3394
    %3396 = vmatprep.subr.mxu0 0.0
    %v3397 = vand.u32 %v3099, 4294901760
    %3398 = vmatpush1.msra.mxu0 %v3397
    %3399 = vmatprep.subr.mxu0 0.0
    %v3400 = vand.u32 %v3100, 4294901760
    %3401 = vmatpush1.msra.mxu0 %v3400
    %3402 = vmatprep.subr.mxu0 0.0
    %v3403 = vand.u32 %v3101, 4294901760
    %3404 = vmatpush1.msra.mxu0 %v3403
    %3405 = vmatprep.subr.mxu0 0.0
    %v3406 = vand.u32 %v3102, 4294901760
    %3407 = vmatpush1.msra.mxu0 %v3406
    %3408 = vmatprep.subr.mxu0 0.0
    %v3409 = vand.u32 %v3103, 4294901760
    %3410 = vmatpush1.msra.mxu0 %v3409
    %3411 = vmatprep.subr.mxu0 0.0
    %v3412 = vand.u32 %v3106, 4294901760
    %3413 = vmatpush1.msra.mxu0 %v3412
    %3414 = vmatprep.subr.mxu0 0.0
    %3415 = vmatpush1.msra.mxu0 0.0
    %3416 = vmatprep.subr.mxu0 0.0
    %3417 = vmatpush1.msra.mxu0 0.0
    %3418 = vmatprep.subr.mxu0 0.0
    %3419 = vmatpush1.msra.mxu0 0.0
    %3420 = vmatprep.subr.mxu0 0.0
    %3421 = vmatpush1.msra.mxu0 0.0
    %3422 = vmatprep.subr.mxu0 0.0
    %3423 = vmatpush1.msra.mxu0 0.0
    %3424 = vmatprep.subr.mxu0 0.0
    %3425 = vmatpush1.msra.mxu0 0.0
    %3426 = vmatprep.subr.mxu0 0.0
    %3427 = vmatpush1.msra.mxu0 0.0
    %3428 = vmatprep.subr.mxu0 0.0
    %3429 = vmatpush1.msra.mxu0 0.0
    %3430 = vmatprep.subr.mxu0 0.0
    %3431 = vmatpush1.msra.mxu0 0.0
    %3432 = vmatprep.subr.mxu0 0.0
    %3433 = vmatpush1.msra.mxu0 0.0
    %3434 = vmatprep.subr.mxu0 0.0
    %3435 = vmatpush1.msra.mxu0 0.0
    %3436 = vmatprep.subr.mxu0 0.0
    %3437 = vmatpush1.msra.mxu0 0.0
    %3438 = vmatprep.subr.mxu0 0.0
    %3439 = vmatpush1.msra.mxu0 0.0
    %3440 = vmatprep.subr.mxu0 0.0
    %3441 = vmatpush1.msra.mxu0 0.0
    %3442 = vmatprep.subr.mxu0 0.0
    %3443 = vmatpush1.msra.mxu0 0.0
    %3444 = vmatprep.subr.mxu0 0.0
    %3445 = vmatpush1.msra.mxu0 0.0
    %3446 = vmatprep.subr.mxu0 0.0
    %3447 = vmatpush1.msra.mxu0 0.0
    %3448 = vmatprep.subr.mxu0 0.0
    %3449 = vmatpush1.msra.mxu0 0.0
    %3450 = vmatprep.subr.mxu0 0.0
    %3451 = vmatpush1.msra.mxu0 0.0
    %3452 = vmatprep.subr.mxu0 0.0
    %3453 = vmatpush1.msra.mxu0 0.0
    %3454 = vmatprep.subr.mxu0 0.0
    %3455 = vmatpush1.msra.mxu0 0.0
    %3456 = vmatprep.subr.mxu0 0.0
    %3457 = vmatpush1.msra.mxu0 0.0
    %3458 = vmatprep.subr.mxu0 0.0
    %3459 = vmatpush1.msra.mxu0 0.0
    %3460 = vmatprep.subr.mxu0 0.0
    %3461 = vmatpush1.msra.mxu0 0.0
    %3462 = vmatprep.mubr.f32.mxu0 0.0
    %v3463 = vand.u32 %v2002, 4294901760
    %v3464 = vsub.f32 %v2002, %v3463
    %v3465 = vand.u32 %v3464, 4294901760
    %3466 = vmatmul.mubr.f32.gmra.mrb[0].mxu0 %v3465
    %v3467 = vpop.f32.mrb[0].mxu0
    %v3468 = vadd.f32 %v3387, %v3467
    %v3469 = vpop.f32.mrb[0].mxu0
    %3470 = vdwg.mxu0
    %3471 = vmatprep.subr.mxu0 0.0
    %v3472 = vand.u32 %v3097, 4294901760
    %v3473 = vsub.f32 %v3097, %v3472
    %v3474 = vand.u32 %v3473, 4294901760
    %3475 = vmatpush1.msra.mxu0 %v3474
    %3476 = vmatprep.subr.mxu0 0.0
    %v3477 = vand.u32 %v3098, 4294901760
    %v3478 = vsub.f32 %v3098, %v3477
    %v3479 = vand.u32 %v3478, 4294901760
    %3480 = vmatpush1.msra.mxu0 %v3479
    %3481 = vmatprep.subr.mxu0 0.0
    %v3482 = vand.u32 %v3099, 4294901760
    %v3483 = vsub.f32 %v3099, %v3482
    %v3484 = vand.u32 %v3483, 4294901760
    %3485 = vmatpush1.msra.mxu0 %v3484
    %3486 = vmatprep.subr.mxu0 0.0
    %v3487 = vand.u32 %v3100, 4294901760
    %v3488 = vsub.f32 %v3100, %v3487
    %v3489 = vand.u32 %v3488, 4294901760
    %3490 = vmatpush1.msra.mxu0 %v3489
    %3491 = vmatprep.subr.mxu0 0.0
    %v3492 = vand.u32 %v3101, 4294901760
    %v3493 = vsub.f32 %v3101, %v3492
    %v3494 = vand.u32 %v3493, 4294901760
    %3495 = vmatpush1.msra.mxu0 %v3494
    %3496 = vmatprep.subr.mxu0 0.0
    %v3497 = vand.u32 %v3102, 4294901760
    %v3498 = vsub.f32 %v3102, %v3497
    %v3499 = vand.u32 %v3498, 4294901760
    %3500 = vmatpush1.msra.mxu0 %v3499
    %3501 = vmatprep.subr.mxu0 0.0
    %v3502 = vand.u32 %v3103, 4294901760
    %v3503 = vsub.f32 %v3103, %v3502
    %v3504 = vand.u32 %v3503, 4294901760
    %3505 = vmatpush1.msra.mxu0 %v3504
    %3506 = vmatprep.subr.mxu0 0.0
    %v3507 = vand.u32 %v3106, 4294901760
    %v3508 = vsub.f32 %v3106, %v3507
    %v3509 = vand.u32 %v3508, 4294901760
    %3510 = vmatpush1.msra.mxu0 %v3509
    %3511 = vmatprep.subr.mxu0 0.0
    %3512 = vmatpush1.msra.mxu0 0.0
    %3513 = vmatprep.subr.mxu0 0.0
    %3514 = vmatpush1.msra.mxu0 0.0
    %3515 = vmatprep.subr.mxu0 0.0
    %3516 = vmatpush1.msra.mxu0 0.0
    %3517 = vmatprep.subr.mxu0 0.0
    %3518 = vmatpush1.msra.mxu0 0.0
    %3519 = vmatprep.subr.mxu0 0.0
    %3520 = vmatpush1.msra.mxu0 0.0
    %3521 = vmatprep.subr.mxu0 0.0
    %3522 = vmatpush1.msra.mxu0 0.0
    %3523 = vmatprep.subr.mxu0 0.0
    %3524 = vmatpush1.msra.mxu0 0.0
    %3525 = vmatprep.subr.mxu0 0.0
    %3526 = vmatpush1.msra.mxu0 0.0
    %3527 = vmatprep.subr.mxu0 0.0
    %3528 = vmatpush1.msra.mxu0 0.0
    %3529 = vmatprep.subr.mxu0 0.0
    %3530 = vmatpush1.msra.mxu0 0.0
    %3531 = vmatprep.subr.mxu0 0.0
    %3532 = vmatpush1.msra.mxu0 0.0
    %3533 = vmatprep.subr.mxu0 0.0
    %3534 = vmatpush1.msra.mxu0 0.0
    %3535 = vmatprep.subr.mxu0 0.0
    %3536 = vmatpush1.msra.mxu0 0.0
    %3537 = vmatprep.subr.mxu0 0.0
    %3538 = vmatpush1.msra.mxu0 0.0
    %3539 = vmatprep.subr.mxu0 0.0
    %3540 = vmatpush1.msra.mxu0 0.0
    %3541 = vmatprep.subr.mxu0 0.0
    %3542 = vmatpush1.msra.mxu0 0.0
    %3543 = vmatprep.subr.mxu0 0.0
    %3544 = vmatpush1.msra.mxu0 0.0
    %3545 = vmatprep.subr.mxu0 0.0
    %3546 = vmatpush1.msra.mxu0 0.0
    %3547 = vmatprep.subr.mxu0 0.0
    %3548 = vmatpush1.msra.mxu0 0.0
    %3549 = vmatprep.subr.mxu0 0.0
    %3550 = vmatpush1.msra.mxu0 0.0
    %3551 = vmatprep.subr.mxu0 0.0
    %3552 = vmatpush1.msra.mxu0 0.0
    %3553 = vmatprep.subr.mxu0 0.0
    %3554 = vmatpush1.msra.mxu0 0.0
    %3555 = vmatprep.subr.mxu0 0.0
    %3556 = vmatpush1.msra.mxu0 0.0
    %3557 = vmatprep.subr.mxu0 0.0
    %3558 = vmatpush1.msra.mxu0 0.0
    %3559 = vmatprep.mubr.f32.mxu0 0.0
    %v3560 = vand.u32 %v2002, 4294901760
    %3561 = vmatmul.mubr.f32.gmra.mrb[0].mxu0 %v3560
    %v3562 = vpop.f32.mrb[0].mxu0
    %v3563 = vadd.f32 %v3468, %v3562
    %v3564 = vpop.f32.mrb[0].mxu0
    %3565 = vdwg.mxu0
    %3566 = vmatprep.subr.mxu0 0.0
    %v3567 = vand.u32 %v3097, 4294901760
    %3568 = vmatpush1.msra.mxu0 %v3567
    %3569 = vmatprep.subr.mxu0 0.0
    %v3570 = vand.u32 %v3098, 4294901760
    %3571 = vmatpush1.msra.mxu0 %v3570
    %3572 = vmatprep.subr.mxu0 0.0
    %v3573 = vand.u32 %v3099, 4294901760
    %3574 = vmatpush1.msra.mxu0 %v3573
    %3575 = vmatprep.subr.mxu0 0.0
    %v3576 = vand.u32 %v3100, 4294901760
    %3577 = vmatpush1.msra.mxu0 %v3576
    %3578 = vmatprep.subr.mxu0 0.0
    %v3579 = vand.u32 %v3101, 4294901760
    %3580 = vmatpush1.msra.mxu0 %v3579
    %3581 = vmatprep.subr.mxu0 0.0
    %v3582 = vand.u32 %v3102, 4294901760
    %3583 = vmatpush1.msra.mxu0 %v3582
    %3584 = vmatprep.subr.mxu0 0.0
    %v3585 = vand.u32 %v3103, 4294901760
    %3586 = vmatpush1.msra.mxu0 %v3585
    %3587 = vmatprep.subr.mxu0 0.0
    %v3588 = vand.u32 %v3106, 4294901760
    %3589 = vmatpush1.msra.mxu0 %v3588
    %3590 = vmatprep.subr.mxu0 0.0
    %3591 = vmatpush1.msra.mxu0 0.0
    %3592 = vmatprep.subr.mxu0 0.0
    %3593 = vmatpush1.msra.mxu0 0.0
    %3594 = vmatprep.subr.mxu0 0.0
    %3595 = vmatpush1.msra.mxu0 0.0
    %3596 = vmatprep.subr.mxu0 0.0
    %3597 = vmatpush1.msra.mxu0 0.0
    %3598 = vmatprep.subr.mxu0 0.0
    %3599 = vmatpush1.msra.mxu0 0.0
    %3600 = vmatprep.subr.mxu0 0.0
    %3601 = vmatpush1.msra.mxu0 0.0
    %3602 = vmatprep.subr.mxu0 0.0
    %3603 = vmatpush1.msra.mxu0 0.0
    %3604 = vmatprep.subr.mxu0 0.0
    %3605 = vmatpush1.msra.mxu0 0.0
    %3606 = vmatprep.subr.mxu0 0.0
    %3607 = vmatpush1.msra.mxu0 0.0
    %3608 = vmatprep.subr.mxu0 0.0
    %3609 = vmatpush1.msra.mxu0 0.0
    %3610 = vmatprep.subr.mxu0 0.0
    %3611 = vmatpush1.msra.mxu0 0.0
    %3612 = vmatprep.subr.mxu0 0.0
    %3613 = vmatpush1.msra.mxu0 0.0
    %3614 = vmatprep.subr.mxu0 0.0
    %3615 = vmatpush1.msra.mxu0 0.0
    %3616 = vmatprep.subr.mxu0 0.0
    %3617 = vmatpush1.msra.mxu0 0.0
    %3618 = vmatprep.subr.mxu0 0.0
    %3619 = vmatpush1.msra.mxu0 0.0
    %3620 = vmatprep.subr.mxu0 0.0
    %3621 = vmatpush1.msra.mxu0 0.0
    %3622 = vmatprep.subr.mxu0 0.0
    %3623 = vmatpush1.msra.mxu0 0.0
    %3624 = vmatprep.subr.mxu0 0.0
    %3625 = vmatpush1.msra.mxu0 0.0
    %3626 = vmatprep.subr.mxu0 0.0
    %3627 = vmatpush1.msra.mxu0 0.0
    %3628 = vmatprep.subr.mxu0 0.0
    %3629 = vmatpush1.msra.mxu0 0.0
    %3630 = vmatprep.subr.mxu0 0.0
    %3631 = vmatpush1.msra.mxu0 0.0
    %3632 = vmatprep.subr.mxu0 0.0
    %3633 = vmatpush1.msra.mxu0 0.0
    %3634 = vmatprep.subr.mxu0 0.0
    %3635 = vmatpush1.msra.mxu0 0.0
    %3636 = vmatprep.subr.mxu0 0.0
    %3637 = vmatpush1.msra.mxu0 0.0
    %3638 = vmatprep.mubr.f32.mxu0 0.0
    %v3639 = vand.u32 %v2002, 4294901760
    %3640 = vmatmul.mubr.f32.gmra.mrb[0].mxu0 %v3639
    %v3641 = vpop.f32.mrb[0].mxu0
    %v3642 = vadd.f32 %v3563, %v3641
    %v3643 = vpop.f32.mrb[0].mxu0
    %3644 = vdwg.mxu0
    %v3646 = vrot.slane %v3642, 6
    %v3648 = vadd.f32 %v1992, %v3646
    %vm3649 = vcmask 1040384
    %v3650 = vsel %vm3649, %v2544, %v3096
    %vm3651 = vcmask 1041408
    %v3652 = vsel %vm3651, %v3650, %v3648
    %vm3653 = vcmask 1042432
    %v3654 = vsel %vm3653, %v3652, 1.0
    %vm3655 = vcmask 31744
    %v3657 = vsel %vm3655, %v1989, 0
    %vm3659 = vcmask 1043456
    %v3661 = vsel %vm3659, %v3654, 0
    %3663 = vmatprep.subr.mxu0 0.0
    %v3664 = vand.u32 %v3661, 4294901760
    %3665 = vmatpush1.msra.mxu0 %v3664
    %3666 = vmatprep.subr.mxu0 0.0
    %3667 = vmatpush1.msra.mxu0 0.0
    %3668 = vmatprep.subr.mxu0 0.0
    %3669 = vmatpush1.msra.mxu0 0.0
    %3670 = vmatprep.subr.mxu0 0.0
    %3671 = vmatpush1.msra.mxu0 0.0
    %3672 = vmatprep.subr.mxu0 0.0
    %3673 = vmatpush1.msra.mxu0 0.0
    %3674 = vmatprep.subr.mxu0 0.0
    %3675 = vmatpush1.msra.mxu0 0.0
    %3676 = vmatprep.subr.mxu0 0.0
    %3677 = vmatpush1.msra.mxu0 0.0
    %3678 = vmatprep.subr.mxu0 0.0
    %3679 = vmatpush1.msra.mxu0 0.0
    %3680 = vmatprep.subr.mxu0 0.0
    %3681 = vmatpush1.msra.mxu0 0.0
    %3682 = vmatprep.subr.mxu0 0.0
    %3683 = vmatpush1.msra.mxu0 0.0
    %3684 = vmatprep.subr.mxu0 0.0
    %3685 = vmatpush1.msra.mxu0 0.0
    %3686 = vmatprep.subr.mxu0 0.0
    %3687 = vmatpush1.msra.mxu0 0.0
    %3688 = vmatprep.subr.mxu0 0.0
    %3689 = vmatpush1.msra.mxu0 0.0
    %3690 = vmatprep.subr.mxu0 0.0
    %3691 = vmatpush1.msra.mxu0 0.0
    %3692 = vmatprep.subr.mxu0 0.0
    %3693 = vmatpush1.msra.mxu0 0.0
    %3694 = vmatprep.subr.mxu0 0.0
    %3695 = vmatpush1.msra.mxu0 0.0
    %3696 = vmatprep.subr.mxu0 0.0
    %3697 = vmatpush1.msra.mxu0 0.0
    %3698 = vmatprep.subr.mxu0 0.0
    %3699 = vmatpush1.msra.mxu0 0.0
    %3700 = vmatprep.subr.mxu0 0.0
    %3701 = vmatpush1.msra.mxu0 0.0
    %3702 = vmatprep.subr.mxu0 0.0
    %3703 = vmatpush1.msra.mxu0 0.0
    %3704 = vmatprep.subr.mxu0 0.0
    %3705 = vmatpush1.msra.mxu0 0.0
    %3706 = vmatprep.subr.mxu0 0.0
    %3707 = vmatpush1.msra.mxu0 0.0
    %3708 = vmatprep.subr.mxu0 0.0
    %3709 = vmatpush1.msra.mxu0 0.0
    %3710 = vmatprep.subr.mxu0 0.0
    %3711 = vmatpush1.msra.mxu0 0.0
    %3712 = vmatprep.subr.mxu0 0.0
    %3713 = vmatpush1.msra.mxu0 0.0
    %3714 = vmatprep.subr.mxu0 0.0
    %3715 = vmatpush1.msra.mxu0 0.0
    %3716 = vmatprep.subr.mxu0 0.0
    %3717 = vmatpush1.msra.mxu0 0.0
    %3718 = vmatprep.subr.mxu0 0.0
    %3719 = vmatpush1.msra.mxu0 0.0
    %3720 = vmatprep.subr.mxu0 0.0
    %3721 = vmatpush1.msra.mxu0 0.0
    %3722 = vmatprep.subr.mxu0 0.0
    %3723 = vmatpush1.msra.mxu0 0.0
    %3724 = vmatprep.subr.mxu0 0.0
    %3725 = vmatpush1.msra.mxu0 0.0
    %3726 = vmatprep.subr.mxu0 0.0
    %3727 = vmatpush1.msra.mxu0 0.0
    %3728 = vmatprep.mubr.f32.mxu0 0.0
    %v3729 = vand.u32 %v3657, 4294901760
    %v3730 = vsub.f32 %v3657, %v3729
    %v3731 = vand.u32 %v3730, 4294901760
    %v3732 = vsub.f32 %v3730, %v3731
    %v3733 = vand.u32 %v3732, 4294901760
    %3734 = vmatmul.mubr.f32.gmra.mrb[0].mxu0 %v3733
    %v3735 = vpop.f32.mrb[0].mxu0
    %v3736 = vadd.f32 0.0, %v3735
    %v3737 = vpop.f32.mrb[0].mxu0
    %3738 = vdwg.mxu0
    %3739 = vmatprep.subr.mxu0 0.0
    %v3740 = vand.u32 %v3661, 4294901760
    %v3741 = vsub.f32 %v3661, %v3740
    %v3742 = vand.u32 %v3741, 4294901760
    %v3743 = vsub.f32 %v3741, %v3742
    %v3744 = vand.u32 %v3743, 4294901760
    %3745 = vmatpush1.msra.mxu0 %v3744
    %3746 = vmatprep.subr.mxu0 0.0
    %3747 = vmatpush1.msra.mxu0 0.0
    %3748 = vmatprep.subr.mxu0 0.0
    %3749 = vmatpush1.msra.mxu0 0.0
    %3750 = vmatprep.subr.mxu0 0.0
    %3751 = vmatpush1.msra.mxu0 0.0
    %3752 = vmatprep.subr.mxu0 0.0
    %3753 = vmatpush1.msra.mxu0 0.0
    %3754 = vmatprep.subr.mxu0 0.0
    %3755 = vmatpush1.msra.mxu0 0.0
    %3756 = vmatprep.subr.mxu0 0.0
    %3757 = vmatpush1.msra.mxu0 0.0
    %3758 = vmatprep.subr.mxu0 0.0
    %3759 = vmatpush1.msra.mxu0 0.0
    %3760 = vmatprep.subr.mxu0 0.0
    %3761 = vmatpush1.msra.mxu0 0.0
    %3762 = vmatprep.subr.mxu0 0.0
    %3763 = vmatpush1.msra.mxu0 0.0
    %3764 = vmatprep.subr.mxu0 0.0
    %3765 = vmatpush1.msra.mxu0 0.0
    %3766 = vmatprep.subr.mxu0 0.0
    %3767 = vmatpush1.msra.mxu0 0.0
    %3768 = vmatprep.subr.mxu0 0.0
    %3769 = vmatpush1.msra.mxu0 0.0
    %3770 = vmatprep.subr.mxu0 0.0
    %3771 = vmatpush1.msra.mxu0 0.0
    %3772 = vmatprep.subr.mxu0 0.0
    %3773 = vmatpush1.msra.mxu0 0.0
    %3774 = vmatprep.subr.mxu0 0.0
    %3775 = vmatpush1.msra.mxu0 0.0
    %3776 = vmatprep.subr.mxu0 0.0
    %3777 = vmatpush1.msra.mxu0 0.0
    %3778 = vmatprep.subr.mxu0 0.0
    %3779 = vmatpush1.msra.mxu0 0.0
    %3780 = vmatprep.subr.mxu0 0.0
    %3781 = vmatpush1.msra.mxu0 0.0
    %3782 = vmatprep.subr.mxu0 0.0
    %3783 = vmatpush1.msra.mxu0 0.0
    %3784 = vmatprep.subr.mxu0 0.0
    %3785 = vmatpush1.msra.mxu0 0.0
    %3786 = vmatprep.subr.mxu0 0.0
    %3787 = vmatpush1.msra.mxu0 0.0
    %3788 = vmatprep.subr.mxu0 0.0
    %3789 = vmatpush1.msra.mxu0 0.0
    %3790 = vmatprep.subr.mxu0 0.0
    %3791 = vmatpush1.msra.mxu0 0.0
    %3792 = vmatprep.subr.mxu0 0.0
    %3793 = vmatpush1.msra.mxu0 0.0
    %3794 = vmatprep.subr.mxu0 0.0
    %3795 = vmatpush1.msra.mxu0 0.0
    %3796 = vmatprep.subr.mxu0 0.0
    %3797 = vmatpush1.msra.mxu0 0.0
    %3798 = vmatprep.subr.mxu0 0.0
    %3799 = vmatpush1.msra.mxu0 0.0
    %3800 = vmatprep.subr.mxu0 0.0
    %3801 = vmatpush1.msra.mxu0 0.0
    %3802 = vmatprep.subr.mxu0 0.0
    %3803 = vmatpush1.msra.mxu0 0.0
    %3804 = vmatprep.subr.mxu0 0.0
    %3805 = vmatpush1.msra.mxu0 0.0
    %3806 = vmatprep.subr.mxu0 0.0
    %3807 = vmatpush1.msra.mxu0 0.0
    %3808 = vmatprep.mubr.f32.mxu0 0.0
    %v3809 = vand.u32 %v3657, 4294901760
    %3810 = vmatmul.mubr.f32.gmra.mrb[0].mxu0 %v3809
    %v3811 = vpop.f32.mrb[0].mxu0
    %v3812 = vadd.f32 %v3736, %v3811
    %v3813 = vpop.f32.mrb[0].mxu0
    %3814 = vdwg.mxu0
    %3815 = vmatprep.subr.mxu0 0.0
    %v3816 = vand.u32 %v3661, 4294901760
    %v3817 = vsub.f32 %v3661, %v3816
    %3818 = vmatpush1.msra.mxu0 %v3817
    %3819 = vmatprep.subr.mxu0 0.0
    %3820 = vmatpush1.msra.mxu0 0.0
    %3821 = vmatprep.subr.mxu0 0.0
    %3822 = vmatpush1.msra.mxu0 0.0
    %3823 = vmatprep.subr.mxu0 0.0
    %3824 = vmatpush1.msra.mxu0 0.0
    %3825 = vmatprep.subr.mxu0 0.0
    %3826 = vmatpush1.msra.mxu0 0.0
    %3827 = vmatprep.subr.mxu0 0.0
    %3828 = vmatpush1.msra.mxu0 0.0
    %3829 = vmatprep.subr.mxu0 0.0
    %3830 = vmatpush1.msra.mxu0 0.0
    %3831 = vmatprep.subr.mxu0 0.0
    %3832 = vmatpush1.msra.mxu0 0.0
    %3833 = vmatprep.subr.mxu0 0.0
    %3834 = vmatpush1.msra.mxu0 0.0
    %3835 = vmatprep.subr.mxu0 0.0
    %3836 = vmatpush1.msra.mxu0 0.0
    %3837 = vmatprep.subr.mxu0 0.0
    %3838 = vmatpush1.msra.mxu0 0.0
    %3839 = vmatprep.subr.mxu0 0.0
    %3840 = vmatpush1.msra.mxu0 0.0
    %3841 = vmatprep.subr.mxu0 0.0
    %3842 = vmatpush1.msra.mxu0 0.0
    %3843 = vmatprep.subr.mxu0 0.0
    %3844 = vmatpush1.msra.mxu0 0.0
    %3845 = vmatprep.subr.mxu0 0.0
    %3846 = vmatpush1.msra.mxu0 0.0
    %3847 = vmatprep.subr.mxu0 0.0
    %3848 = vmatpush1.msra.mxu0 0.0
    %3849 = vmatprep.subr.mxu0 0.0
    %3850 = vmatpush1.msra.mxu0 0.0
    %3851 = vmatprep.subr.mxu0 0.0
    %3852 = vmatpush1.msra.mxu0 0.0
    %3853 = vmatprep.subr.mxu0 0.0
    %3854 = vmatpush1.msra.mxu0 0.0
    %3855 = vmatprep.subr.mxu0 0.0
    %3856 = vmatpush1.msra.mxu0 0.0
    %3857 = vmatprep.subr.mxu0 0.0
    %3858 = vmatpush1.msra.mxu0 0.0
    %3859 = vmatprep.subr.mxu0 0.0
    %3860 = vmatpush1.msra.mxu0 0.0
    %3861 = vmatprep.subr.mxu0 0.0
    %3862 = vmatpush1.msra.mxu0 0.0
    %3863 = vmatprep.subr.mxu0 0.0
    %3864 = vmatpush1.msra.mxu0 0.0
    %3865 = vmatprep.subr.mxu0 0.0
    %3866 = vmatpush1.msra.mxu0 0.0
    %3867 = vmatprep.subr.mxu0 0.0
    %3868 = vmatpush1.msra.mxu0 0.0
    %3869 = vmatprep.subr.mxu0 0.0
    %3870 = vmatpush1.msra.mxu0 0.0
    %3871 = vmatprep.subr.mxu0 0.0
    %3872 = vmatpush1.msra.mxu0 0.0
    %3873 = vmatprep.subr.mxu0 0.0
    %3874 = vmatpush1.msra.mxu0 0.0
    %3875 = vmatprep.subr.mxu0 0.0
    %3876 = vmatpush1.msra.mxu0 0.0
    %3877 = vmatprep.subr.mxu0 0.0
    %3878 = vmatpush1.msra.mxu0 0.0
    %3879 = vmatprep.subr.mxu0 0.0
    %3880 = vmatpush1.msra.mxu0 0.0
    %3881 = vmatprep.mubr.f32.mxu0 0.0
    %v3882 = vand.u32 %v3657, 4294901760
    %v3883 = vsub.f32 %v3657, %v3882
    %3884 = vmatmul.mubr.f32.gmra.mrb[0].mxu0 %v3883
    %v3885 = vpop.f32.mrb[0].mxu0
    %v3886 = vadd.f32 %v3812, %v3885
    %v3887 = vpop.f32.mrb[0].mxu0
    %3888 = vdwg.mxu0
    %3889 = vmatprep.subr.mxu0 0.0
    %v3890 = vand.u32 %v3661, 4294901760
    %3891 = vmatpush1.msra.mxu0 %v3890
    %3892 = vmatprep.subr.mxu0 0.0
    %3893 = vmatpush1.msra.mxu0 0.0
    %3894 = vmatprep.subr.mxu0 0.0
    %3895 = vmatpush1.msra.mxu0 0.0
    %3896 = vmatprep.subr.mxu0 0.0
    %3897 = vmatpush1.msra.mxu0 0.0
    %3898 = vmatprep.subr.mxu0 0.0
    %3899 = vmatpush1.msra.mxu0 0.0
    %3900 = vmatprep.subr.mxu0 0.0
    %3901 = vmatpush1.msra.mxu0 0.0
    %3902 = vmatprep.subr.mxu0 0.0
    %3903 = vmatpush1.msra.mxu0 0.0
    %3904 = vmatprep.subr.mxu0 0.0
    %3905 = vmatpush1.msra.mxu0 0.0
    %3906 = vmatprep.subr.mxu0 0.0
    %3907 = vmatpush1.msra.mxu0 0.0
    %3908 = vmatprep.subr.mxu0 0.0
    %3909 = vmatpush1.msra.mxu0 0.0
    %3910 = vmatprep.subr.mxu0 0.0
    %3911 = vmatpush1.msra.mxu0 0.0
    %3912 = vmatprep.subr.mxu0 0.0
    %3913 = vmatpush1.msra.mxu0 0.0
    %3914 = vmatprep.subr.mxu0 0.0
    %3915 = vmatpush1.msra.mxu0 0.0
    %3916 = vmatprep.subr.mxu0 0.0
    %3917 = vmatpush1.msra.mxu0 0.0
    %3918 = vmatprep.subr.mxu0 0.0
    %3919 = vmatpush1.msra.mxu0 0.0
    %3920 = vmatprep.subr.mxu0 0.0
    %3921 = vmatpush1.msra.mxu0 0.0
    %3922 = vmatprep.subr.mxu0 0.0
    %3923 = vmatpush1.msra.mxu0 0.0
    %3924 = vmatprep.subr.mxu0 0.0
    %3925 = vmatpush1.msra.mxu0 0.0
    %3926 = vmatprep.subr.mxu0 0.0
    %3927 = vmatpush1.msra.mxu0 0.0
    %3928 = vmatprep.subr.mxu0 0.0
    %3929 = vmatpush1.msra.mxu0 0.0
    %3930 = vmatprep.subr.mxu0 0.0
    %3931 = vmatpush1.msra.mxu0 0.0
    %3932 = vmatprep.subr.mxu0 0.0
    %3933 = vmatpush1.msra.mxu0 0.0
    %3934 = vmatprep.subr.mxu0 0.0
    %3935 = vmatpush1.msra.mxu0 0.0
    %3936 = vmatprep.subr.mxu0 0.0
    %3937 = vmatpush1.msra.mxu0 0.0
    %3938 = vmatprep.subr.mxu0 0.0
    %3939 = vmatpush1.msra.mxu0 0.0
    %3940 = vmatprep.subr.mxu0 0.0
    %3941 = vmatpush1.msra.mxu0 0.0
    %3942 = vmatprep.subr.mxu0 0.0
    %3943 = vmatpush1.msra.mxu0 0.0
    %3944 = vmatprep.subr.mxu0 0.0
    %3945 = vmatpush1.msra.mxu0 0.0
    %3946 = vmatprep.subr.mxu0 0.0
    %3947 = vmatpush1.msra.mxu0 0.0
    %3948 = vmatprep.subr.mxu0 0.0
    %3949 = vmatpush1.msra.mxu0 0.0
    %3950 = vmatprep.subr.mxu0 0.0
    %3951 = vmatpush1.msra.mxu0 0.0
    %3952 = vmatprep.subr.mxu0 0.0
    %3953 = vmatpush1.msra.mxu0 0.0
    %3954 = vmatprep.mubr.f32.mxu0 0.0
    %v3955 = vand.u32 %v3657, 4294901760
    %v3956 = vsub.f32 %v3657, %v3955
    %v3957 = vand.u32 %v3956, 4294901760
    %3958 = vmatmul.mubr.f32.gmra.mrb[0].mxu0 %v3957
    %v3959 = vpop.f32.mrb[0].mxu0
    %v3960 = vadd.f32 %v3886, %v3959
    %v3961 = vpop.f32.mrb[0].mxu0
    %3962 = vdwg.mxu0
    %3963 = vmatprep.subr.mxu0 0.0
    %v3964 = vand.u32 %v3661, 4294901760
    %v3965 = vsub.f32 %v3661, %v3964
    %v3966 = vand.u32 %v3965, 4294901760
    %3967 = vmatpush1.msra.mxu0 %v3966
    %3968 = vmatprep.subr.mxu0 0.0
    %3969 = vmatpush1.msra.mxu0 0.0
    %3970 = vmatprep.subr.mxu0 0.0
    %3971 = vmatpush1.msra.mxu0 0.0
    %3972 = vmatprep.subr.mxu0 0.0
    %3973 = vmatpush1.msra.mxu0 0.0
    %3974 = vmatprep.subr.mxu0 0.0
    %3975 = vmatpush1.msra.mxu0 0.0
    %3976 = vmatprep.subr.mxu0 0.0
    %3977 = vmatpush1.msra.mxu0 0.0
    %3978 = vmatprep.subr.mxu0 0.0
    %3979 = vmatpush1.msra.mxu0 0.0
    %3980 = vmatprep.subr.mxu0 0.0
    %3981 = vmatpush1.msra.mxu0 0.0
    %3982 = vmatprep.subr.mxu0 0.0
    %3983 = vmatpush1.msra.mxu0 0.0
    %3984 = vmatprep.subr.mxu0 0.0
    %3985 = vmatpush1.msra.mxu0 0.0
    %3986 = vmatprep.subr.mxu0 0.0
    %3987 = vmatpush1.msra.mxu0 0.0
    %3988 = vmatprep.subr.mxu0 0.0
    %3989 = vmatpush1.msra.mxu0 0.0
    %3990 = vmatprep.subr.mxu0 0.0
    %3991 = vmatpush1.msra.mxu0 0.0
    %3992 = vmatprep.subr.mxu0 0.0
    %3993 = vmatpush1.msra.mxu0 0.0
    %3994 = vmatprep.subr.mxu0 0.0
    %3995 = vmatpush1.msra.mxu0 0.0
    %3996 = vmatprep.subr.mxu0 0.0
    %3997 = vmatpush1.msra.mxu0 0.0
    %3998 = vmatprep.subr.mxu0 0.0
    %3999 = vmatpush1.msra.mxu0 0.0
    %4000 = vmatprep.subr.mxu0 0.0
    %4001 = vmatpush1.msra.mxu0 0.0
    %4002 = vmatprep.subr.mxu0 0.0
    %4003 = vmatpush1.msra.mxu0 0.0
    %4004 = vmatprep.subr.mxu0 0.0
    %4005 = vmatpush1.msra.mxu0 0.0
    %4006 = vmatprep.subr.mxu0 0.0
    %4007 = vmatpush1.msra.mxu0 0.0
    %4008 = vmatprep.subr.mxu0 0.0
    %4009 = vmatpush1.msra.mxu0 0.0
    %4010 = vmatprep.subr.mxu0 0.0
    %4011 = vmatpush1.msra.mxu0 0.0
    %4012 = vmatprep.subr.mxu0 0.0
    %4013 = vmatpush1.msra.mxu0 0.0
    %4014 = vmatprep.subr.mxu0 0.0
    %4015 = vmatpush1.msra.mxu0 0.0
    %4016 = vmatprep.subr.mxu0 0.0
    %4017 = vmatpush1.msra.mxu0 0.0
    %4018 = vmatprep.subr.mxu0 0.0
    %4019 = vmatpush1.msra.mxu0 0.0
    %4020 = vmatprep.subr.mxu0 0.0
    %4021 = vmatpush1.msra.mxu0 0.0
    %4022 = vmatprep.subr.mxu0 0.0
    %4023 = vmatpush1.msra.mxu0 0.0
    %4024 = vmatprep.subr.mxu0 0.0
    %4025 = vmatpush1.msra.mxu0 0.0
    %4026 = vmatprep.subr.mxu0 0.0
    %4027 = vmatpush1.msra.mxu0 0.0
    %4028 = vmatprep.subr.mxu0 0.0
    %4029 = vmatpush1.msra.mxu0 0.0
    %4030 = vmatprep.mubr.f32.mxu0 0.0
    %v4031 = vand.u32 %v3657, 4294901760
    %4032 = vmatmul.mubr.f32.gmra.mrb[0].mxu0 %v4031
    %v4033 = vpop.f32.mrb[0].mxu0
    %v4034 = vadd.f32 %v3960, %v4033
    %v4035 = vpop.f32.mrb[0].mxu0
    %4036 = vdwg.mxu0
    %4037 = vmatprep.subr.mxu0 0.0
    %v4038 = vand.u32 %v3661, 4294901760
    %4039 = vmatpush1.msra.mxu0 %v4038
    %4040 = vmatprep.subr.mxu0 0.0
    %4041 = vmatpush1.msra.mxu0 0.0
    %4042 = vmatprep.subr.mxu0 0.0
    %4043 = vmatpush1.msra.mxu0 0.0
    %4044 = vmatprep.subr.mxu0 0.0
    %4045 = vmatpush1.msra.mxu0 0.0
    %4046 = vmatprep.subr.mxu0 0.0
    %4047 = vmatpush1.msra.mxu0 0.0
    %4048 = vmatprep.subr.mxu0 0.0
    %4049 = vmatpush1.msra.mxu0 0.0
    %4050 = vmatprep.subr.mxu0 0.0
    %4051 = vmatpush1.msra.mxu0 0.0
    %4052 = vmatprep.subr.mxu0 0.0
    %4053 = vmatpush1.msra.mxu0 0.0
    %4054 = vmatprep.subr.mxu0 0.0
    %4055 = vmatpush1.msra.mxu0 0.0
    %4056 = vmatprep.subr.mxu0 0.0
    %4057 = vmatpush1.msra.mxu0 0.0
    %4058 = vmatprep.subr.mxu0 0.0
    %4059 = vmatpush1.msra.mxu0 0.0
    %4060 = vmatprep.subr.mxu0 0.0
    %4061 = vmatpush1.msra.mxu0 0.0
    %4062 = vmatprep.subr.mxu0 0.0
    %4063 = vmatpush1.msra.mxu0 0.0
    %4064 = vmatprep.subr.mxu0 0.0
    %4065 = vmatpush1.msra.mxu0 0.0
    %4066 = vmatprep.subr.mxu0 0.0
    %4067 = vmatpush1.msra.mxu0 0.0
    %4068 = vmatprep.subr.mxu0 0.0
    %4069 = vmatpush1.msra.mxu0 0.0
    %4070 = vmatprep.subr.mxu0 0.0
    %4071 = vmatpush1.msra.mxu0 0.0
    %4072 = vmatprep.subr.mxu0 0.0
    %4073 = vmatpush1.msra.mxu0 0.0
    %4074 = vmatprep.subr.mxu0 0.0
    %4075 = vmatpush1.msra.mxu0 0.0
    %4076 = vmatprep.subr.mxu0 0.0
    %4077 = vmatpush1.msra.mxu0 0.0
    %4078 = vmatprep.subr.mxu0 0.0
    %4079 = vmatpush1.msra.mxu0 0.0
    %4080 = vmatprep.subr.mxu0 0.0
    %4081 = vmatpush1.msra.mxu0 0.0
    %4082 = vmatprep.subr.mxu0 0.0
    %4083 = vmatpush1.msra.mxu0 0.0
    %4084 = vmatprep.subr.mxu0 0.0
    %4085 = vmatpush1.msra.mxu0 0.0
    %4086 = vmatprep.subr.mxu0 0.0
    %4087 = vmatpush1.msra.mxu0 0.0
    %4088 = vmatprep.subr.mxu0 0.0
    %4089 = vmatpush1.msra.mxu0 0.0
    %4090 = vmatprep.subr.mxu0 0.0
    %4091 = vmatpush1.msra.mxu0 0.0
    %4092 = vmatprep.subr.mxu0 0.0
    %4093 = vmatpush1.msra.mxu0 0.0
    %4094 = vmatprep.subr.mxu0 0.0
    %4095 = vmatpush1.msra.mxu0 0.0
    %4096 = vmatprep.subr.mxu0 0.0
    %4097 = vmatpush1.msra.mxu0 0.0
    %4098 = vmatprep.subr.mxu0 0.0
    %4099 = vmatpush1.msra.mxu0 0.0
    %4100 = vmatprep.subr.mxu0 0.0
    %4101 = vmatpush1.msra.mxu0 0.0
    %4102 = vmatprep.mubr.f32.mxu0 0.0
    %v4103 = vand.u32 %v3657, 4294901760
    %4104 = vmatmul.mubr.f32.gmra.mrb[0].mxu0 %v4103
    %v4105 = vpop.f32.mrb[0].mxu0
    %v4106 = vadd.f32 %v4034, %v4105
    %v4107 = vpop.f32.mrb[0].mxu0
    %4108 = vdwg.mxu0
    %vm4109 = vcmask 550912
    %4110 = vst.msk [vmem:[#allocation2] sm:$0x7] %vm4109, %v4106
    // Predicated region
    $region10: #{compose_forward.1} parent=1 // pred_check
      _
    $region11: #{compose_forward.1} parent=1 // pred_check_branch
      %4112 = sbr.rel (0) target = $region13
    $region12: #{compose_forward.1} parent=1 // pred_region
      %s4114 = ssub.s32 64, 64
      %4115 = vsyncadd [#allocation3], %s4114
      %s4117 = sshll.u32 [#allocation2], 4
      %s4118 = int_to_ptr.vmem [resolvable:$true] %s4117
      %4120 = dma.vmem_to_hbm [thread:$0]  %s4118, 64, %s2, [#allocation3]
    $region13: #{compose_forward.1} parent=1 // pred_fallthru
      _
    // Predicated region
    $region14: #{compose_forward.1} parent=1 // pred_check
      _
    $region15: #{compose_forward.1} parent=1 // pred_check_branch
      %4122 = sbr.rel (0) target = $region17
    $region16: #{compose_forward.1} parent=1 // pred_region
      %4123 = dma.done [#allocation3], 64
    $region17: #{compose_forward.1} parent=1 // pred_fallthru
      _
    %4124 = vsyncpa [#allocation3], 1

</llo_original>
